<compile_context>
chip_gen: v6e
topology: v6e:2x2x1
jax: 0.10.0
libtpu: 0.0.40
codegen_flags: <defaults>
</compile_context>

<pallas_src>
import functools

import jax
import jax.numpy as jnp
from jax.experimental import pallas as pl
from jax.experimental.pallas import tpu as pltpu

LN_EPS = 1e-5       # torch.nn.LayerNorm default
L2_EPS = 1e-12      # torch.nn.functional.normalize default


def _icm_kernel(
    obs_ref, next_obs_ref, action_ref,
    # feature_net params
    w1_ref, b1_ref, lnw_ref, lnb_ref, w2_ref, b2_ref, w3_ref, b3_ref,
    # inverse_dynamic_net params (iw1 pre-split into top/bottom halves)
    iw1a_ref, iw1b_ref, ib1_ref, iw2_ref, ib2_ref, iw3_ref, ib3_ref,
    out_ref,
    *, batch_size, tile_batch, needs_mask,
):
    def mm(x, w_ref):
        return jnp.dot(x, w_ref[...], preferred_element_type=jnp.float32)

    def feature_net(x):
        # Linear -> LayerNorm -> Tanh   ('ntanh'), single-pass LN stats.
        h = mm(x, w1_ref) + b1_ref[...]
        inv_h = 1.0 / h.shape[-1]
        s1 = jnp.sum(h, axis=-1, keepdims=True)
        s2 = jnp.sum(h * h, axis=-1, keepdims=True)
        mu = s1 * inv_h
        var = s2 * inv_h - mu * mu                    # biased variance (torch)
        h = (h - mu) * jax.lax.rsqrt(var + LN_EPS) * lnw_ref[...] + lnb_ref[...]
        h = jnp.tanh(h)
        # Linear -> ReLU
        h = jnp.maximum(mm(h, w2_ref) + b2_ref[...], 0.0)
        # Linear -> L2 normalize:  z / max(||z||, eps)  ==  z * rsqrt(max(||z||^2, eps^2))
        z = mm(h, w3_ref) + b3_ref[...]
        ss = jnp.sum(z * z, axis=-1, keepdims=True)
        inv_norm = jax.lax.rsqrt(jnp.maximum(ss, L2_EPS * L2_EPS))   # EUP slot
        return z * inv_norm

    # Fused feature_net pass: stack obs / next_obs along the batch (sublane)
    # axis so every feature_net layer runs as ONE dot with M = 2*TB.
    x2 = jnp.concatenate([obs_ref[...], next_obs_ref[...]], axis=0)
    phi2 = feature_net(x2)
    phi = phi2[:tile_batch]
    next_phi = phi2[tile_batch:]

    # concat-free first inverse-dynamics layer:
    #   dot(concat([phi, next_phi], -1), iw1) == dot(phi, iw1_top) + dot(next_phi, iw1_bot)
    h = mm(phi, iw1a_ref) + mm(next_phi, iw1b_ref) + ib1_ref[...]
    h = jnp.maximum(h, 0.0)
    h = jnp.maximum(mm(h, iw2_ref) + ib2_ref[...], 0.0)
    pred_action = jnp.tanh(mm(h, iw3_ref) + ib3_ref[...])

    err = action_ref[...] - pred_action
    if needs_mask:
        # Only emitted when batch % tile_batch != 0 (ragged last block rows).
        row = (jax.lax.broadcasted_iota(jnp.int32, err.shape, 0)
               + pl.program_id(0) * tile_batch)
        err = jnp.where(row < batch_size, err, 0.0)
    partial_sse = jnp.sum(err * err)

    # lane-dense per-tile partial sum (full-vreg, unmasked store)
    out_ref[...] = jnp.full(out_ref.shape, partial_sse, dtype=out_ref.dtype)


def icm_loss_pallas(obs, next_obs, action, params, *, tile_batch=1024):
    (w1, b1, lnw, lnb, w2, b2, w3, b3, iw1, ib1, iw2, ib2, iw3, ib3) = params
    batch, obs_dim = obs.shape
    action_dim = action.shape[-1]
    z_dim = w3.shape[-1]

    def round_up(x, m):
        return (x + m - 1) // m * m

    # Tile choice: multiple of 8, no host-side padding, and >= 2 grid tiles
    # whenever possible so v7x's two TensorCores both get work.
    if batch <= 2 * tile_batch:
        tb = round_up(pl.cdiv(batch, 2), 8)
    else:
        tb = round_up(tile_batch, 8)
    tb = min(tb, round_up(batch, 8))
    grid = pl.cdiv(batch, tb)
    needs_mask = (grid * tb != batch)

    # Split iw1 rows so the kernel never concatenates along the lane axis.
    iw1a, iw1b = iw1[:z_dim], iw1[z_dim:]
    param_args = (w1, b1, lnw, lnb, w2, b2, w3, b3,
                  iw1a, iw1b, ib1, iw2, ib2, iw3, ib3)

    data_specs = [
        pl.BlockSpec((tb, obs_dim), lambda i: (i, 0)),
        pl.BlockSpec((tb, obs_dim), lambda i: (i, 0)),
        pl.BlockSpec((tb, action_dim), lambda i: (i, 0)),
    ]
    # Constant index_map -> weights stay resident in VMEM across all grid steps.
    param_specs = [pl.BlockSpec(p.shape, lambda i: (0, 0)) for p in param_args]

    kernel = functools.partial(
        _icm_kernel, batch_size=batch, tile_batch=tb, needs_mask=needs_mask)

    out = pl.pallas_call(
        kernel,
        out_shape=jax.ShapeDtypeStruct((grid, 8, 128), jnp.float32),
        grid=(grid,),
        in_specs=data_specs + param_specs,
        out_specs=pl.BlockSpec((1, 8, 128), lambda i: (i, 0, 0)),
        compiler_params=pltpu.CompilerParams(
            dimension_semantics=("parallel",),
        ),
    )(obs, next_obs, action, *param_args)

    partials = out[:, 0, 0]                       # one scalar per batch tile
    return jnp.sum(partials) / (batch * action_dim)


def icm_loss_ref(obs, next_obs, action, params):
    (w1, b1, lnw, lnb, w2, b2, w3, b3, iw1, ib1, iw2, ib2, iw3, ib3) = params

    def feature_net(x):
        h = x @ w1 + b1
        mu = jnp.mean(h, axis=-1, keepdims=True)
        var = jnp.mean((h - mu) ** 2, axis=-1, keepdims=True)
        h = jnp.tanh((h - mu) / jnp.sqrt(var + LN_EPS) * lnw + lnb)
        h = jnp.maximum(h @ w2 + b2, 0.0)
        z = h @ w3 + b3
        return z / jnp.maximum(jnp.linalg.norm(z, axis=-1, keepdims=True), L2_EPS)

    phi = feature_net(obs)
    next_phi = feature_net(next_obs)
    x = jnp.concatenate([phi, next_phi], axis=-1)
    h = jnp.maximum(x @ iw1 + ib1, 0.0)
    h = jnp.maximum(h @ iw2 + ib2, 0.0)
    pred = jnp.tanh(h @ iw3 + ib3)
    return jnp.mean((action - pred) ** 2)


def init_params(key, obs_dim, action_dim, z_dim, hidden_dim):
    ks = jax.random.split(key, 6)

    def lin(k, fan_in, fan_out):
        scale = 1.0 / jnp.sqrt(jnp.float32(fan_in))
        w = jax.random.normal(k, (fan_in, fan_out), jnp.float32) * scale
        b = jnp.zeros((1, fan_out), jnp.float32)
        return w, b

    # feature_net
    w1, b1 = lin(ks[0], obs_dim, hidden_dim)
    lnw = jnp.ones((1, hidden_dim), jnp.float32)
    lnb = jnp.zeros((1, hidden_dim), jnp.float32)
    w2, b2 = lin(ks[1], hidden_dim, hidden_dim)
    w3, b3 = lin(ks[2], hidden_dim, z_dim)
    # inverse_dynamic_net
    iw1, ib1 = lin(ks[3], 2 * z_dim, hidden_dim)
    iw2, ib2 = lin(ks[4], hidden_dim, hidden_dim)
    iw3, ib3 = lin(ks[5], hidden_dim, action_dim)
    return (w1, b1, lnw, lnb, w2, b2, w3, b3, iw1, ib1, iw2, ib2, iw3, ib3)


if __name__ == "__main__":
    # batch=200 -> tb=104, grid=2: exercises the multi-tile parallel grid and
    # the ragged-last-block masking path (no host-side padding).
    batch, obs_dim, action_dim, z_dim, hidden_dim = 200, 32, 8, 16, 64

    key = jax.random.PRNGKey(0)
    k_obs, k_nobs, k_act, k_par = jax.random.split(key, 4)

    obs = jax.random.normal(k_obs, (batch, obs_dim), jnp.float32)
    next_obs = jax.random.normal(k_nobs, (batch, obs_dim), jnp.float32)
    action = jnp.tanh(jax.random.normal(k_act, (batch, action_dim), jnp.float32))
    params = init_params(k_par, obs_dim, action_dim, z_dim, hidden_dim)

    fn = jax.jit(icm_loss_pallas)

    # Ragged path (200 rows, tb=104, mask emitted on both tiles).
    ref = icm_loss_ref(obs, next_obs, action, params)
    loss = fn(obs, next_obs, action, params)
    jax.block_until_ready(loss)
    assert jnp.allclose(loss, ref, rtol=1e-4, atol=1e-4), (loss, ref)

    # Divisible path (192 rows -> tb=96, grid=2, mask compiled out).
    obs_d, nobs_d, act_d = obs[:192], next_obs[:192], action[:192]
    ref_d = icm_loss_ref(obs_d, nobs_d, act_d, params)
    loss_d = fn(obs_d, nobs_d, act_d, params)
    jax.block_until_ready(loss_d)
    assert jnp.allclose(loss_d, ref_d, rtol=1e-4, atol=1e-4), (loss_d, ref_d)

    print("KERNEL_OK")
</pallas_src>

<mosaic_0001>
module attributes {stable_mosaic.version = 11 : i64} {
  func.func @_icm_kernel(%arg0: i32, %arg1: memref<104x32xf32, #tpu.memory_space<vmem>>, %arg2: memref<104x32xf32, #tpu.memory_space<vmem>>, %arg3: memref<104x8xf32, #tpu.memory_space<vmem>>, %arg4: memref<32x64xf32, #tpu.memory_space<vmem>>, %arg5: memref<1x64xf32, #tpu.memory_space<vmem>>, %arg6: memref<1x64xf32, #tpu.memory_space<vmem>>, %arg7: memref<1x64xf32, #tpu.memory_space<vmem>>, %arg8: memref<64x64xf32, #tpu.memory_space<vmem>>, %arg9: memref<1x64xf32, #tpu.memory_space<vmem>>, %arg10: memref<64x16xf32, #tpu.memory_space<vmem>>, %arg11: memref<1x16xf32, #tpu.memory_space<vmem>>, %arg12: memref<16x64xf32, #tpu.memory_space<vmem>>, %arg13: memref<16x64xf32, #tpu.memory_space<vmem>>, %arg14: memref<1x64xf32, #tpu.memory_space<vmem>>, %arg15: memref<64x64xf32, #tpu.memory_space<vmem>>, %arg16: memref<1x64xf32, #tpu.memory_space<vmem>>, %arg17: memref<64x8xf32, #tpu.memory_space<vmem>>, %arg18: memref<1x8xf32, #tpu.memory_space<vmem>>, %arg19: memref<1x8x128xf32, #tpu.memory_space<vmem>>) attributes {dimension_semantics = [#tpu.dimension_semantics<parallel>], iteration_bounds = array<i64: 2>, scalar_prefetch = 0 : i64, scratch_operands = 0 : i64, tpu.core_type = #tpu.core_type<tc>, window_params = [{transform_indices = @transform_0, window_bounds = array<i64: 104, 32>}, {transform_indices = @transform_1, window_bounds = array<i64: 104, 32>}, {transform_indices = @transform_2, window_bounds = array<i64: 104, 8>}, {pipeline_mode = #tpu.pipeline_mode<synchronous>, transform_indices = @transform_3, window_bounds = array<i64: 32, 64>}, {pipeline_mode = #tpu.pipeline_mode<synchronous>, transform_indices = @transform_4, window_bounds = array<i64: 1, 64>}, {pipeline_mode = #tpu.pipeline_mode<synchronous>, transform_indices = @transform_5, window_bounds = array<i64: 1, 64>}, {pipeline_mode = #tpu.pipeline_mode<synchronous>, transform_indices = @transform_6, window_bounds = array<i64: 1, 64>}, {pipeline_mode = #tpu.pipeline_mode<synchronous>, transform_indices = @transform_7, window_bounds = array<i64: 64, 64>}, {pipeline_mode = #tpu.pipeline_mode<synchronous>, transform_indices = @transform_8, window_bounds = array<i64: 1, 64>}, {pipeline_mode = #tpu.pipeline_mode<synchronous>, transform_indices = @transform_9, window_bounds = array<i64: 64, 16>}, {pipeline_mode = #tpu.pipeline_mode<synchronous>, transform_indices = @transform_10, window_bounds = array<i64: 1, 16>}, {pipeline_mode = #tpu.pipeline_mode<synchronous>, transform_indices = @transform_11, window_bounds = array<i64: 16, 64>}, {pipeline_mode = #tpu.pipeline_mode<synchronous>, transform_indices = @transform_12, window_bounds = array<i64: 16, 64>}, {pipeline_mode = #tpu.pipeline_mode<synchronous>, transform_indices = @transform_13, window_bounds = array<i64: 1, 64>}, {pipeline_mode = #tpu.pipeline_mode<synchronous>, transform_indices = @transform_14, window_bounds = array<i64: 64, 64>}, {pipeline_mode = #tpu.pipeline_mode<synchronous>, transform_indices = @transform_15, window_bounds = array<i64: 1, 64>}, {pipeline_mode = #tpu.pipeline_mode<synchronous>, transform_indices = @transform_16, window_bounds = array<i64: 64, 8>}, {pipeline_mode = #tpu.pipeline_mode<synchronous>, transform_indices = @transform_17, window_bounds = array<i64: 1, 8>}, {transform_indices = @transform_18, window_bounds = array<i64: 1, 8, 128>}]} {
    %c0 = arith.constant 0 : index
    %c0_0 = arith.constant 0 : index
    %0 = vector.load %arg1[%c0, %c0_0] : memref<104x32xf32, #tpu.memory_space<vmem>>, vector<104x32xf32>
    %c0_1 = arith.constant 0 : index
    %c0_2 = arith.constant 0 : index
    %1 = vector.load %arg2[%c0_1, %c0_2] : memref<104x32xf32, #tpu.memory_space<vmem>>, vector<104x32xf32>
    %2 = tpu.concatenate %0, %1 in 0 : vector<104x32xf32>, vector<104x32xf32> -> vector<208x32xf32>
    %c0_3 = arith.constant 0 : index
    %c0_4 = arith.constant 0 : index
    %3 = vector.load %arg4[%c0_3, %c0_4] : memref<32x64xf32, #tpu.memory_space<vmem>>, vector<32x64xf32>
    %cst = arith.constant dense<0.000000e+00> : vector<208x64xf32>
    %4 = tpu.matmul %2, %3, %cst {dimension_numbers = #tpu.dot_dimension_numbers<[1], [0], [0], [1], [0, 0, 1, 1], [], []>} : vector<208x32xf32>, vector<32x64xf32>, vector<208x64xf32> -> vector<208x64xf32>
    %c0_5 = arith.constant 0 : index
    %c0_6 = arith.constant 0 : index
    %5 = vector.load %arg5[%c0_5, %c0_6] : memref<1x64xf32, #tpu.memory_space<vmem>>, vector<1x64xf32>
    %6 = vector.broadcast %5 : vector<1x64xf32> to vector<208x64xf32>
    %7 = arith.addf %4, %6 : vector<208x64xf32>
    %cst_7 = arith.constant dense<0.000000e+00> : vector<208xf32>
    %8 = vector.multi_reduction <add>, %7, %cst_7 [1] : vector<208x64xf32> to vector<208xf32>
    %9 = vector.shape_cast %8 : vector<208xf32> to vector<208x1xf32>
    %10 = arith.mulf %7, %7 : vector<208x64xf32>
    %cst_8 = arith.constant dense<0.000000e+00> : vector<208xf32>
    %11 = vector.multi_reduction <add>, %10, %cst_8 [1] : vector<208x64xf32> to vector<208xf32>
    %12 = vector.shape_cast %11 : vector<208xf32> to vector<208x1xf32>
    %cst_9 = arith.constant 1.562500e-02 : f32
    %13 = vector.broadcast %cst_9 : f32 to vector<208x1xf32>
    %14 = arith.mulf %9, %13 : vector<208x1xf32>
    %cst_10 = arith.constant 1.562500e-02 : f32
    %15 = vector.broadcast %cst_10 : f32 to vector<208x1xf32>
    %16 = arith.mulf %12, %15 : vector<208x1xf32>
    %17 = arith.mulf %14, %14 : vector<208x1xf32>
    %18 = arith.subf %16, %17 : vector<208x1xf32>
    %19 = vector.broadcast %14 : vector<208x1xf32> to vector<208x64xf32>
    %20 = arith.subf %7, %19 : vector<208x64xf32>
    %cst_11 = arith.constant 9.99999974E-6 : f32
    %21 = vector.broadcast %cst_11 : f32 to vector<208x1xf32>
    %22 = arith.addf %18, %21 : vector<208x1xf32>
    %23 = math.rsqrt %22 : vector<208x1xf32>
    %24 = vector.broadcast %23 : vector<208x1xf32> to vector<208x64xf32>
    %25 = arith.mulf %20, %24 : vector<208x64xf32>
    %c0_12 = arith.constant 0 : index
    %c0_13 = arith.constant 0 : index
    %26 = vector.load %arg6[%c0_12, %c0_13] : memref<1x64xf32, #tpu.memory_space<vmem>>, vector<1x64xf32>
    %27 = vector.broadcast %26 : vector<1x64xf32> to vector<208x64xf32>
    %28 = arith.mulf %25, %27 : vector<208x64xf32>
    %c0_14 = arith.constant 0 : index
    %c0_15 = arith.constant 0 : index
    %29 = vector.load %arg7[%c0_14, %c0_15] : memref<1x64xf32, #tpu.memory_space<vmem>>, vector<1x64xf32>
    %30 = vector.broadcast %29 : vector<1x64xf32> to vector<208x64xf32>
    %31 = arith.addf %28, %30 : vector<208x64xf32>
    %32 = math.tanh %31 : vector<208x64xf32>
    %c0_16 = arith.constant 0 : index
    %c0_17 = arith.constant 0 : index
    %33 = vector.load %arg8[%c0_16, %c0_17] : memref<64x64xf32, #tpu.memory_space<vmem>>, vector<64x64xf32>
    %cst_18 = arith.constant dense<0.000000e+00> : vector<208x64xf32>
    %34 = tpu.matmul %32, %33, %cst_18 {dimension_numbers = #tpu.dot_dimension_numbers<[1], [0], [0], [1], [0, 0, 1, 1], [], []>} : vector<208x64xf32>, vector<64x64xf32>, vector<208x64xf32> -> vector<208x64xf32>
    %c0_19 = arith.constant 0 : index
    %c0_20 = arith.constant 0 : index
    %35 = vector.load %arg9[%c0_19, %c0_20] : memref<1x64xf32, #tpu.memory_space<vmem>>, vector<1x64xf32>
    %36 = vector.broadcast %35 : vector<1x64xf32> to vector<208x64xf32>
    %37 = arith.addf %34, %36 : vector<208x64xf32>
    %cst_21 = arith.constant 0.000000e+00 : f32
    %38 = vector.broadcast %cst_21 : f32 to vector<208x64xf32>
    %39 = arith.maximumf %37, %38 : vector<208x64xf32>
    %c0_22 = arith.constant 0 : index
    %c0_23 = arith.constant 0 : index
    %40 = vector.load %arg10[%c0_22, %c0_23] : memref<64x16xf32, #tpu.memory_space<vmem>>, vector<64x16xf32>
    %cst_24 = arith.constant dense<0.000000e+00> : vector<208x16xf32>
    %41 = tpu.matmul %39, %40, %cst_24 {dimension_numbers = #tpu.dot_dimension_numbers<[1], [0], [0], [1], [0, 0, 1, 1], [], []>} : vector<208x64xf32>, vector<64x16xf32>, vector<208x16xf32> -> vector<208x16xf32>
    %c0_25 = arith.constant 0 : index
    %c0_26 = arith.constant 0 : index
    %42 = vector.load %arg11[%c0_25, %c0_26] : memref<1x16xf32, #tpu.memory_space<vmem>>, vector<1x16xf32>
    %43 = vector.broadcast %42 : vector<1x16xf32> to vector<208x16xf32>
    %44 = arith.addf %41, %43 : vector<208x16xf32>
    %45 = arith.mulf %44, %44 : vector<208x16xf32>
    %cst_27 = arith.constant dense<0.000000e+00> : vector<208xf32>
    %46 = vector.multi_reduction <add>, %45, %cst_27 [1] : vector<208x16xf32> to vector<208xf32>
    %47 = vector.shape_cast %46 : vector<208xf32> to vector<208x1xf32>
    %cst_28 = arith.constant 1.000000e-24 : f32
    %48 = vector.broadcast %cst_28 : f32 to vector<208x1xf32>
    %49 = arith.maximumf %47, %48 : vector<208x1xf32>
    %50 = math.rsqrt %49 : vector<208x1xf32>
    %51 = vector.broadcast %50 : vector<208x1xf32> to vector<208x16xf32>
    %52 = arith.mulf %44, %51 : vector<208x16xf32>
    %53 = vector.extract_strided_slice %52 {offsets = [0, 0], sizes = [104, 16], strides = [1, 1]} : vector<208x16xf32> to vector<104x16xf32>
    %54 = vector.extract_strided_slice %52 {offsets = [104, 0], sizes = [104, 16], strides = [1, 1]} : vector<208x16xf32> to vector<104x16xf32>
    %c0_29 = arith.constant 0 : index
    %c0_30 = arith.constant 0 : index
    %55 = vector.load %arg12[%c0_29, %c0_30] : memref<16x64xf32, #tpu.memory_space<vmem>>, vector<16x64xf32>
    %cst_31 = arith.constant dense<0.000000e+00> : vector<104x64xf32>
    %56 = tpu.matmul %53, %55, %cst_31 {dimension_numbers = #tpu.dot_dimension_numbers<[1], [0], [0], [1], [0, 0, 1, 1], [], []>} : vector<104x16xf32>, vector<16x64xf32>, vector<104x64xf32> -> vector<104x64xf32>
    %c0_32 = arith.constant 0 : index
    %c0_33 = arith.constant 0 : index
    %57 = vector.load %arg13[%c0_32, %c0_33] : memref<16x64xf32, #tpu.memory_space<vmem>>, vector<16x64xf32>
    %cst_34 = arith.constant dense<0.000000e+00> : vector<104x64xf32>
    %58 = tpu.matmul %54, %57, %cst_34 {dimension_numbers = #tpu.dot_dimension_numbers<[1], [0], [0], [1], [0, 0, 1, 1], [], []>} : vector<104x16xf32>, vector<16x64xf32>, vector<104x64xf32> -> vector<104x64xf32>
    %59 = arith.addf %56, %58 : vector<104x64xf32>
    %c0_35 = arith.constant 0 : index
    %c0_36 = arith.constant 0 : index
    %60 = vector.load %arg14[%c0_35, %c0_36] : memref<1x64xf32, #tpu.memory_space<vmem>>, vector<1x64xf32>
    %61 = vector.broadcast %60 : vector<1x64xf32> to vector<104x64xf32>
    %62 = arith.addf %59, %61 : vector<104x64xf32>
    %cst_37 = arith.constant 0.000000e+00 : f32
    %63 = vector.broadcast %cst_37 : f32 to vector<104x64xf32>
    %64 = arith.maximumf %62, %63 : vector<104x64xf32>
    %c0_38 = arith.constant 0 : index
    %c0_39 = arith.constant 0 : index
    %65 = vector.load %arg15[%c0_38, %c0_39] : memref<64x64xf32, #tpu.memory_space<vmem>>, vector<64x64xf32>
    %cst_40 = arith.constant dense<0.000000e+00> : vector<104x64xf32>
    %66 = tpu.matmul %64, %65, %cst_40 {dimension_numbers = #tpu.dot_dimension_numbers<[1], [0], [0], [1], [0, 0, 1, 1], [], []>} : vector<104x64xf32>, vector<64x64xf32>, vector<104x64xf32> -> vector<104x64xf32>
    %c0_41 = arith.constant 0 : index
    %c0_42 = arith.constant 0 : index
    %67 = vector.load %arg16[%c0_41, %c0_42] : memref<1x64xf32, #tpu.memory_space<vmem>>, vector<1x64xf32>
    %68 = vector.broadcast %67 : vector<1x64xf32> to vector<104x64xf32>
    %69 = arith.addf %66, %68 : vector<104x64xf32>
    %cst_43 = arith.constant 0.000000e+00 : f32
    %70 = vector.broadcast %cst_43 : f32 to vector<104x64xf32>
    %71 = arith.maximumf %69, %70 : vector<104x64xf32>
    %c0_44 = arith.constant 0 : index
    %c0_45 = arith.constant 0 : index
    %72 = vector.load %arg17[%c0_44, %c0_45] : memref<64x8xf32, #tpu.memory_space<vmem>>, vector<64x8xf32>
    %cst_46 = arith.constant dense<0.000000e+00> : vector<104x8xf32>
    %73 = tpu.matmul %71, %72, %cst_46 {dimension_numbers = #tpu.dot_dimension_numbers<[1], [0], [0], [1], [0, 0, 1, 1], [], []>} : vector<104x64xf32>, vector<64x8xf32>, vector<104x8xf32> -> vector<104x8xf32>
    %c0_47 = arith.constant 0 : index
    %c0_48 = arith.constant 0 : index
    %74 = vector.load %arg18[%c0_47, %c0_48] : memref<1x8xf32, #tpu.memory_space<vmem>>, vector<1x8xf32>
    %75 = vector.broadcast %74 : vector<1x8xf32> to vector<104x8xf32>
    %76 = arith.addf %73, %75 : vector<104x8xf32>
    %77 = math.tanh %76 : vector<104x8xf32>
    %c0_49 = arith.constant 0 : index
    %c0_50 = arith.constant 0 : index
    %78 = vector.load %arg3[%c0_49, %c0_50] : memref<104x8xf32, #tpu.memory_space<vmem>>, vector<104x8xf32>
    %79 = arith.subf %78, %77 : vector<104x8xf32>
    %80 = tpu.iota {dimensions = array<i32: 0>} : vector<104x8xi32>
    %c104_i32 = arith.constant 104 : i32
    %81 = arith.muli %arg0, %c104_i32 : i32
    %82 = vector.broadcast %81 : i32 to vector<104x8xi32>
    %83 = arith.addi %80, %82 : vector<104x8xi32>
    %c200_i32 = arith.constant 200 : i32
    %84 = vector.broadcast %c200_i32 : i32 to vector<104x8xi32>
    %85 = arith.cmpi slt, %83, %84 : vector<104x8xi32>
    %cst_51 = arith.constant 0.000000e+00 : f32
    %86 = vector.broadcast %cst_51 : f32 to vector<104x8xf32>
    %87 = arith.select %85, %79, %86 : vector<104x8xi1>, vector<104x8xf32>
    %88 = arith.mulf %87, %87 : vector<104x8xf32>
    %89 = vector.shape_cast %88 : vector<104x8xf32> to vector<1x104x8xf32>
    %cst_52 = arith.constant dense<0.000000e+00> : vector<1xf32>
    %90 = vector.multi_reduction <add>, %89, %cst_52 [1, 2] : vector<1x104x8xf32> to vector<1xf32>
    %91 = vector.shape_cast %90 : vector<1xf32> to vector<1x1x1xf32>
    %92 = vector.extract %91[0, 0, 0] : f32 from vector<1x1x1xf32>
    %93 = vector.broadcast %92 : f32 to vector<1x8x128xf32>
    %c0_53 = arith.constant 0 : index
    %c0_54 = arith.constant 0 : index
    %c0_55 = arith.constant 0 : index
    %94 = vector.load %arg19[%c0_53, %c0_54, %c0_55] : memref<1x8x128xf32, #tpu.memory_space<vmem>>, vector<1x8x128xf32>
    tpu.vector_store %arg19[%c0_53, %c0_54, %c0_55], %93 {strides = array<i32>} : memref<1x8x128xf32, #tpu.memory_space<vmem>>, vector<1x8x128xf32>,
    return
  }
  func.func @transform_0(%arg0: i32) -> (i32, i32) {
    %c0_i32 = arith.constant 0 : i32
    %c0_i32_0 = arith.constant 0 : i32
    return %arg0, %c0_i32 : i32, i32
  }
  func.func @transform_1(%arg0: i32) -> (i32, i32) {
    %c0_i32 = arith.constant 0 : i32
    %c0_i32_0 = arith.constant 0 : i32
    return %arg0, %c0_i32 : i32, i32
  }
  func.func @transform_2(%arg0: i32) -> (i32, i32) {
    %c0_i32 = arith.constant 0 : i32
    %c0_i32_0 = arith.constant 0 : i32
    return %arg0, %c0_i32 : i32, i32
  }
  func.func @transform_3(%arg0: i32) -> (i32, i32) {
    %c0_i32 = arith.constant 0 : i32
    %c0_i32_0 = arith.constant 0 : i32
    %c0_i32_1 = arith.constant 0 : i32
    return %c0_i32, %c0_i32_0 : i32, i32
  }
  func.func @transform_4(%arg0: i32) -> (i32, i32) {
    %c0_i32 = arith.constant 0 : i32
    %c0_i32_0 = arith.constant 0 : i32
    %c0_i32_1 = arith.constant 0 : i32
    return %c0_i32, %c0_i32_0 : i32, i32
  }
  func.func @transform_5(%arg0: i32) -> (i32, i32) {
    %c0_i32 = arith.constant 0 : i32
    %c0_i32_0 = arith.constant 0 : i32
    %c0_i32_1 = arith.constant 0 : i32
    return %c0_i32, %c0_i32_0 : i32, i32
  }
  func.func @transform_6(%arg0: i32) -> (i32, i32) {
    %c0_i32 = arith.constant 0 : i32
    %c0_i32_0 = arith.constant 0 : i32
    %c0_i32_1 = arith.constant 0 : i32
    return %c0_i32, %c0_i32_0 : i32, i32
  }
  func.func @transform_7(%arg0: i32) -> (i32, i32) {
    %c0_i32 = arith.constant 0 : i32
    %c0_i32_0 = arith.constant 0 : i32
    %c0_i32_1 = arith.constant 0 : i32
    return %c0_i32, %c0_i32_0 : i32, i32
  }
  func.func @transform_8(%arg0: i32) -> (i32, i32) {
    %c0_i32 = arith.constant 0 : i32
    %c0_i32_0 = arith.constant 0 : i32
    %c0_i32_1 = arith.constant 0 : i32
    return %c0_i32, %c0_i32_0 : i32, i32
  }
  func.func @transform_9(%arg0: i32) -> (i32, i32) {
    %c0_i32 = arith.constant 0 : i32
    %c0_i32_0 = arith.constant 0 : i32
    %c0_i32_1 = arith.constant 0 : i32
    return %c0_i32, %c0_i32_0 : i32, i32
  }
  func.func @transform_10(%arg0: i32) -> (i32, i32) {
    %c0_i32 = arith.constant 0 : i32
    %c0_i32_0 = arith.constant 0 : i32
    %c0_i32_1 = arith.constant 0 : i32
    return %c0_i32, %c0_i32_0 : i32, i32
  }
  func.func @transform_11(%arg0: i32) -> (i32, i32) {
    %c0_i32 = arith.constant 0 : i32
    %c0_i32_0 = arith.constant 0 : i32
    %c0_i32_1 = arith.constant 0 : i32
    return %c0_i32, %c0_i32_0 : i32, i32
  }
  func.func @transform_12(%arg0: i32) -> (i32, i32) {
    %c0_i32 = arith.constant 0 : i32
    %c0_i32_0 = arith.constant 0 : i32
    %c0_i32_1 = arith.constant 0 : i32
    return %c0_i32, %c0_i32_0 : i32, i32
  }
  func.func @transform_13(%arg0: i32) -> (i32, i32) {
    %c0_i32 = arith.constant 0 : i32
    %c0_i32_0 = arith.constant 0 : i32
    %c0_i32_1 = arith.constant 0 : i32
    return %c0_i32, %c0_i32_0 : i32, i32
  }
  func.func @transform_14(%arg0: i32) -> (i32, i32) {
    %c0_i32 = arith.constant 0 : i32
    %c0_i32_0 = arith.constant 0 : i32
    %c0_i32_1 = arith.constant 0 : i32
    return %c0_i32, %c0_i32_0 : i32, i32
  }
  func.func @transform_15(%arg0: i32) -> (i32, i32) {
    %c0_i32 = arith.constant 0 : i32
    %c0_i32_0 = arith.constant 0 : i32
    %c0_i32_1 = arith.constant 0 : i32
    return %c0_i32, %c0_i32_0 : i32, i32
  }
  func.func @transform_16(%arg0: i32) -> (i32, i32) {
    %c0_i32 = arith.constant 0 : i32
    %c0_i32_0 = arith.constant 0 : i32
    %c0_i32_1 = arith.constant 0 : i32
    return %c0_i32, %c0_i32_0 : i32, i32
  }
  func.func @transform_17(%arg0: i32) -> (i32, i32) {
    %c0_i32 = arith.constant 0 : i32
    %c0_i32_0 = arith.constant 0 : i32
    %c0_i32_1 = arith.constant 0 : i32
    return %c0_i32, %c0_i32_0 : i32, i32
  }
  func.func @transform_18(%arg0: i32) -> (i32, i32, i32) {
    %c0_i32 = arith.constant 0 : i32
    %c0_i32_0 = arith.constant 0 : i32
    %c0_i32_1 = arith.constant 0 : i32
    return %arg0, %c0_i32, %c0_i32_0 : i32, i32, i32
  }
}

</mosaic_0001>

<llo_original>
// kernel: icm_loss_pallas.1
$region0: #{icm_loss_pallas.1}
  #allocation0 [shape = 'u32[]', space=smem, size = 0x4, offset = 0x4, fixed_abs, tag = 'smem constant byte address 0x4 - core index']
  #allocation1 [shape = 'u32[144,128]{1,0:T(1,128)}', space=vmem, size = 0x12000, scoped, tag = 'internal scratch']
  %s0 = inlined_call_operand.vmem [shape: f32[200,32], index: 0, kind: input, shape index: {}]
  %s1 = inlined_call_operand.vmem [shape: f32[200,32], index: 1, kind: input, shape index: {}]
  %s2 = inlined_call_operand.vmem [shape: f32[200,8], index: 2, kind: input, shape index: {}]
  %s3 = inlined_call_operand.vmem [shape: f32[32,64], index: 3, kind: input, shape index: {}]
  %s4 = inlined_call_operand.vmem [shape: f32[1,64], index: 4, kind: input, shape index: {}]
  %s5 = inlined_call_operand.vmem [shape: f32[1,64], index: 5, kind: input, shape index: {}]
  %s6 = inlined_call_operand.vmem [shape: f32[1,64], index: 6, kind: input, shape index: {}]
  %s7 = inlined_call_operand.vmem [shape: f32[64,64], index: 7, kind: input, shape index: {}]
  %s8 = inlined_call_operand.vmem [shape: f32[1,64], index: 8, kind: input, shape index: {}]
  %s9 = inlined_call_operand.vmem [shape: f32[64,16], index: 9, kind: input, shape index: {}]
  %s10 = inlined_call_operand.vmem [shape: f32[1,16], index: 10, kind: input, shape index: {}]
  %s11 = inlined_call_operand.vmem [shape: f32[16,64], index: 11, kind: input, shape index: {}]
  %s12 = inlined_call_operand.vmem [shape: f32[16,64], index: 12, kind: input, shape index: {}]
  %s13 = inlined_call_operand.vmem [shape: f32[1,64], index: 13, kind: input, shape index: {}]
  %s14 = inlined_call_operand.vmem [shape: f32[64,64], index: 14, kind: input, shape index: {}]
  %s15 = inlined_call_operand.vmem [shape: f32[1,64], index: 15, kind: input, shape index: {}]
  %s16 = inlined_call_operand.vmem [shape: f32[64,8], index: 16, kind: input, shape index: {}]
  %s17 = inlined_call_operand.vmem [shape: f32[1,8], index: 17, kind: input, shape index: {}]
  %s18 = inlined_call_operand.vmem [shape: f32[2,8,128], index: 18, kind: output, shape index: {}]
  %s19 = sld [smem:[#allocation0]]
  $region105: #{icm_loss_pallas.1} parent=0
    _
  %s21 = ssub.s32 1, %s19
  %s22 = scalar_select 0, %s21, %s19
  loop: start=0, step=1, limit=4
  $region2: #{icm_loss_pallas.1} parent=0 // loop_pre_header
    _
  $region3: #{icm_loss_pallas.1} parent=0 // loop_header
    %s24 = sphi 0, %s28
    %p25 = scmp.ge.s32.totalorder %s24, 4
    %s34 = sphi 0, %s36
    %s37 = sphi 0, %s34
    %s38 = sphi 0, %s37
    %s54 = sphi 0, %s38
    %s60 = sphi 0, %s62
    %s63 = sphi 0, %s60
    %s64 = sphi 0, %s63
    %s80 = sphi 0, %s64
    %s86 = sphi 0, %s88
    %s89 = sphi 0, %s86
    %s90 = sphi 0, %s89
    %s106 = sphi 0, %s90
    %s110 = sphi 0, %s110
    %s112 = sphi 0, %s110
    %s113 = sphi 0, %s112
    %s127 = sphi 0, %s113
    %s131 = sphi 0, %s131
    %s133 = sphi 0, %s131
    %s134 = sphi 0, %s133
    %s148 = sphi 0, %s134
    %s152 = sphi 0, %s152
    %s154 = sphi 0, %s152
    %s155 = sphi 0, %s154
    %s169 = sphi 0, %s155
    %s173 = sphi 0, %s173
    %s175 = sphi 0, %s173
    %s176 = sphi 0, %s175
    %s190 = sphi 0, %s176
    %s194 = sphi 0, %s194
    %s196 = sphi 0, %s194
    %s197 = sphi 0, %s196
    %s211 = sphi 0, %s197
    %s215 = sphi 0, %s215
    %s217 = sphi 0, %s215
    %s218 = sphi 0, %s217
    %s232 = sphi 0, %s218
    %s236 = sphi 0, %s236
    %s238 = sphi 0, %s236
    %s239 = sphi 0, %s238
    %s253 = sphi 0, %s239
    %s257 = sphi 0, %s257
    %s259 = sphi 0, %s257
    %s260 = sphi 0, %s259
    %s274 = sphi 0, %s260
    %s278 = sphi 0, %s278
    %s280 = sphi 0, %s278
    %s281 = sphi 0, %s280
    %s295 = sphi 0, %s281
    %s299 = sphi 0, %s299
    %s301 = sphi 0, %s299
    %s302 = sphi 0, %s301
    %s316 = sphi 0, %s302
    %s320 = sphi 0, %s320
    %s322 = sphi 0, %s320
    %s323 = sphi 0, %s322
    %s337 = sphi 0, %s323
    %s341 = sphi 0, %s341
    %s343 = sphi 0, %s341
    %s344 = sphi 0, %s343
    %s358 = sphi 0, %s344
    %s362 = sphi 0, %s362
    %s364 = sphi 0, %s362
    %s365 = sphi 0, %s364
    %s379 = sphi 0, %s365
    %s383 = sphi 0, %s383
    %s385 = sphi 0, %s383
    %s386 = sphi 0, %s385
    %s400 = sphi 0, %s386
    %s404 = sphi 0, %s404
    %s406 = sphi 0, %s404
    %s407 = sphi 0, %s406
    %s421 = sphi 0, %s407
    %s427 = sphi 0, %s429
    %s430 = sphi 0, %s427
    %s431 = sphi 0, %s430
    %s447 = sphi 0, %s431
  $region4: #{icm_loss_pallas.1} parent=0 // loop_header_branch
    %27 = sbr.rel (%p25) target = $region8
  $region5: #{icm_loss_pallas.1} parent=0 // loop_body
    %s29 = ssub.s32 %s24, 1
    %s30 = ssub.s32 %s24, 2
    %s31 = sadd.s32 %s24, 1
    %s32 = ssub.s32 %s24, %s31
    %p33 = scmp.eq.s32.totalorder %s32, 0
    %s35 = sadd.s32 %s34, 1
    %s36 = scalar_select %p33, %s34, %s35
    %p39 = pneg %p33
    %p40 = scmp.eq.s32.totalorder %s24, 1
    %p41 = por %p39, %p40
    %p42 = scmp.ne.s32.totalorder %s34, %s37
    %p43 = scmp.eq.s32.totalorder %s24, 0
    %p44 = por %p42, %p43
    %p45 = scmp.ne.s32.totalorder %s34, %s37
    %p46 = scmp.eq.s32.totalorder %s29, 1
    %p47 = por %p45, %p46
    %p48 = scmp.ne.s32.totalorder %s37, %s38
    %p49 = scmp.eq.s32.totalorder %s29, 0
    %p50 = por %p48, %p49
    %p51 = scmp.ne.s32.totalorder %s37, %s38
    %p52 = scmp.eq.s32.totalorder %s30, 1
    %p53 = por %p51, %p52
    %p55 = scmp.ne.s32.totalorder %s38, %s54
    %p56 = scmp.eq.s32.totalorder %s30, 0
    %p57 = por %p55, %p56
    %s58 = ssub.s32 %s24, %s31
    %p59 = scmp.eq.s32.totalorder %s58, 0
    %s61 = sadd.s32 %s60, 1
    %s62 = scalar_select %p59, %s60, %s61
    %p65 = pneg %p59
    %p66 = scmp.eq.s32.totalorder %s24, 1
    %p67 = por %p65, %p66
    %p68 = scmp.ne.s32.totalorder %s60, %s63
    %p69 = scmp.eq.s32.totalorder %s24, 0
    %p70 = por %p68, %p69
    %p71 = scmp.ne.s32.totalorder %s60, %s63
    %p72 = scmp.eq.s32.totalorder %s29, 1
    %p73 = por %p71, %p72
    %p74 = scmp.ne.s32.totalorder %s63, %s64
    %p75 = scmp.eq.s32.totalorder %s29, 0
    %p76 = por %p74, %p75
    %p77 = scmp.ne.s32.totalorder %s63, %s64
    %p78 = scmp.eq.s32.totalorder %s30, 1
    %p79 = por %p77, %p78
    %p81 = scmp.ne.s32.totalorder %s64, %s80
    %p82 = scmp.eq.s32.totalorder %s30, 0
    %p83 = por %p81, %p82
    %s84 = ssub.s32 %s24, %s31
    %p85 = scmp.eq.s32.totalorder %s84, 0
    %s87 = sadd.s32 %s86, 1
    %s88 = scalar_select %p85, %s86, %s87
    %p91 = pneg %p85
    %p92 = scmp.eq.s32.totalorder %s24, 1
    %p93 = por %p91, %p92
    %p94 = scmp.ne.s32.totalorder %s86, %s89
    %p95 = scmp.eq.s32.totalorder %s24, 0
    %p96 = por %p94, %p95
    %p97 = scmp.ne.s32.totalorder %s86, %s89
    %p98 = scmp.eq.s32.totalorder %s29, 1
    %p99 = por %p97, %p98
    %p100 = scmp.ne.s32.totalorder %s89, %s90
    %p101 = scmp.eq.s32.totalorder %s29, 0
    %p102 = por %p100, %p101
    %p103 = scmp.ne.s32.totalorder %s89, %s90
    %p104 = scmp.eq.s32.totalorder %s30, 1
    %p105 = por %p103, %p104
    %p107 = scmp.ne.s32.totalorder %s90, %s106
    %p108 = scmp.eq.s32.totalorder %s30, 0
    %p109 = por %p107, %p108
    %s111 = sadd.s32 %s110, 1
    %p114 = scmp.eq.s32.totalorder %s24, 1
    %p115 = scmp.ne.s32.totalorder %s110, %s112
    %p116 = scmp.eq.s32.totalorder %s24, 0
    %p117 = por %p115, %p116
    %p118 = scmp.ne.s32.totalorder %s110, %s112
    %p119 = scmp.eq.s32.totalorder %s29, 1
    %p120 = por %p118, %p119
    %p121 = scmp.ne.s32.totalorder %s112, %s113
    %p122 = scmp.eq.s32.totalorder %s29, 0
    %p123 = por %p121, %p122
    %p124 = scmp.ne.s32.totalorder %s112, %s113
    %p125 = scmp.eq.s32.totalorder %s30, 1
    %p126 = por %p124, %p125
    %p128 = scmp.ne.s32.totalorder %s113, %s127
    %p129 = scmp.eq.s32.totalorder %s30, 0
    %p130 = por %p128, %p129
    %s132 = sadd.s32 %s131, 1
    %p135 = scmp.eq.s32.totalorder %s24, 1
    %p136 = scmp.ne.s32.totalorder %s131, %s133
    %p137 = scmp.eq.s32.totalorder %s24, 0
    %p138 = por %p136, %p137
    %p139 = scmp.ne.s32.totalorder %s131, %s133
    %p140 = scmp.eq.s32.totalorder %s29, 1
    %p141 = por %p139, %p140
    %p142 = scmp.ne.s32.totalorder %s133, %s134
    %p143 = scmp.eq.s32.totalorder %s29, 0
    %p144 = por %p142, %p143
    %p145 = scmp.ne.s32.totalorder %s133, %s134
    %p146 = scmp.eq.s32.totalorder %s30, 1
    %p147 = por %p145, %p146
    %p149 = scmp.ne.s32.totalorder %s134, %s148
    %p150 = scmp.eq.s32.totalorder %s30, 0
    %p151 = por %p149, %p150
    %s153 = sadd.s32 %s152, 1
    %p156 = scmp.eq.s32.totalorder %s24, 1
    %p157 = scmp.ne.s32.totalorder %s152, %s154
    %p158 = scmp.eq.s32.totalorder %s24, 0
    %p159 = por %p157, %p158
    %p160 = scmp.ne.s32.totalorder %s152, %s154
    %p161 = scmp.eq.s32.totalorder %s29, 1
    %p162 = por %p160, %p161
    %p163 = scmp.ne.s32.totalorder %s154, %s155
    %p164 = scmp.eq.s32.totalorder %s29, 0
    %p165 = por %p163, %p164
    %p166 = scmp.ne.s32.totalorder %s154, %s155
    %p167 = scmp.eq.s32.totalorder %s30, 1
    %p168 = por %p166, %p167
    %p170 = scmp.ne.s32.totalorder %s155, %s169
    %p171 = scmp.eq.s32.totalorder %s30, 0
    %p172 = por %p170, %p171
    %s174 = sadd.s32 %s173, 1
    %p177 = scmp.eq.s32.totalorder %s24, 1
    %p178 = scmp.ne.s32.totalorder %s173, %s175
    %p179 = scmp.eq.s32.totalorder %s24, 0
    %p180 = por %p178, %p179
    %p181 = scmp.ne.s32.totalorder %s173, %s175
    %p182 = scmp.eq.s32.totalorder %s29, 1
    %p183 = por %p181, %p182
    %p184 = scmp.ne.s32.totalorder %s175, %s176
    %p185 = scmp.eq.s32.totalorder %s29, 0
    %p186 = por %p184, %p185
    %p187 = scmp.ne.s32.totalorder %s175, %s176
    %p188 = scmp.eq.s32.totalorder %s30, 1
    %p189 = por %p187, %p188
    %p191 = scmp.ne.s32.totalorder %s176, %s190
    %p192 = scmp.eq.s32.totalorder %s30, 0
    %p193 = por %p191, %p192
    %s195 = sadd.s32 %s194, 1
    %p198 = scmp.eq.s32.totalorder %s24, 1
    %p199 = scmp.ne.s32.totalorder %s194, %s196
    %p200 = scmp.eq.s32.totalorder %s24, 0
    %p201 = por %p199, %p200
    %p202 = scmp.ne.s32.totalorder %s194, %s196
    %p203 = scmp.eq.s32.totalorder %s29, 1
    %p204 = por %p202, %p203
    %p205 = scmp.ne.s32.totalorder %s196, %s197
    %p206 = scmp.eq.s32.totalorder %s29, 0
    %p207 = por %p205, %p206
    %p208 = scmp.ne.s32.totalorder %s196, %s197
    %p209 = scmp.eq.s32.totalorder %s30, 1
    %p210 = por %p208, %p209
    %p212 = scmp.ne.s32.totalorder %s197, %s211
    %p213 = scmp.eq.s32.totalorder %s30, 0
    %p214 = por %p212, %p213
    %s216 = sadd.s32 %s215, 1
    %p219 = scmp.eq.s32.totalorder %s24, 1
    %p220 = scmp.ne.s32.totalorder %s215, %s217
    %p221 = scmp.eq.s32.totalorder %s24, 0
    %p222 = por %p220, %p221
    %p223 = scmp.ne.s32.totalorder %s215, %s217
    %p224 = scmp.eq.s32.totalorder %s29, 1
    %p225 = por %p223, %p224
    %p226 = scmp.ne.s32.totalorder %s217, %s218
    %p227 = scmp.eq.s32.totalorder %s29, 0
    %p228 = por %p226, %p227
    %p229 = scmp.ne.s32.totalorder %s217, %s218
    %p230 = scmp.eq.s32.totalorder %s30, 1
    %p231 = por %p229, %p230
    %p233 = scmp.ne.s32.totalorder %s218, %s232
    %p234 = scmp.eq.s32.totalorder %s30, 0
    %p235 = por %p233, %p234
    %s237 = sadd.s32 %s236, 1
    %p240 = scmp.eq.s32.totalorder %s24, 1
    %p241 = scmp.ne.s32.totalorder %s236, %s238
    %p242 = scmp.eq.s32.totalorder %s24, 0
    %p243 = por %p241, %p242
    %p244 = scmp.ne.s32.totalorder %s236, %s238
    %p245 = scmp.eq.s32.totalorder %s29, 1
    %p246 = por %p244, %p245
    %p247 = scmp.ne.s32.totalorder %s238, %s239
    %p248 = scmp.eq.s32.totalorder %s29, 0
    %p249 = por %p247, %p248
    %p250 = scmp.ne.s32.totalorder %s238, %s239
    %p251 = scmp.eq.s32.totalorder %s30, 1
    %p252 = por %p250, %p251
    %p254 = scmp.ne.s32.totalorder %s239, %s253
    %p255 = scmp.eq.s32.totalorder %s30, 0
    %p256 = por %p254, %p255
    %s258 = sadd.s32 %s257, 1
    %p261 = scmp.eq.s32.totalorder %s24, 1
    %p262 = scmp.ne.s32.totalorder %s257, %s259
    %p263 = scmp.eq.s32.totalorder %s24, 0
    %p264 = por %p262, %p263
    %p265 = scmp.ne.s32.totalorder %s257, %s259
    %p266 = scmp.eq.s32.totalorder %s29, 1
    %p267 = por %p265, %p266
    %p268 = scmp.ne.s32.totalorder %s259, %s260
    %p269 = scmp.eq.s32.totalorder %s29, 0
    %p270 = por %p268, %p269
    %p271 = scmp.ne.s32.totalorder %s259, %s260
    %p272 = scmp.eq.s32.totalorder %s30, 1
    %p273 = por %p271, %p272
    %p275 = scmp.ne.s32.totalorder %s260, %s274
    %p276 = scmp.eq.s32.totalorder %s30, 0
    %p277 = por %p275, %p276
    %s279 = sadd.s32 %s278, 1
    %p282 = scmp.eq.s32.totalorder %s24, 1
    %p283 = scmp.ne.s32.totalorder %s278, %s280
    %p284 = scmp.eq.s32.totalorder %s24, 0
    %p285 = por %p283, %p284
    %p286 = scmp.ne.s32.totalorder %s278, %s280
    %p287 = scmp.eq.s32.totalorder %s29, 1
    %p288 = por %p286, %p287
    %p289 = scmp.ne.s32.totalorder %s280, %s281
    %p290 = scmp.eq.s32.totalorder %s29, 0
    %p291 = por %p289, %p290
    %p292 = scmp.ne.s32.totalorder %s280, %s281
    %p293 = scmp.eq.s32.totalorder %s30, 1
    %p294 = por %p292, %p293
    %p296 = scmp.ne.s32.totalorder %s281, %s295
    %p297 = scmp.eq.s32.totalorder %s30, 0
    %p298 = por %p296, %p297
    %s300 = sadd.s32 %s299, 1
    %p303 = scmp.eq.s32.totalorder %s24, 1
    %p304 = scmp.ne.s32.totalorder %s299, %s301
    %p305 = scmp.eq.s32.totalorder %s24, 0
    %p306 = por %p304, %p305
    %p307 = scmp.ne.s32.totalorder %s299, %s301
    %p308 = scmp.eq.s32.totalorder %s29, 1
    %p309 = por %p307, %p308
    %p310 = scmp.ne.s32.totalorder %s301, %s302
    %p311 = scmp.eq.s32.totalorder %s29, 0
    %p312 = por %p310, %p311
    %p313 = scmp.ne.s32.totalorder %s301, %s302
    %p314 = scmp.eq.s32.totalorder %s30, 1
    %p315 = por %p313, %p314
    %p317 = scmp.ne.s32.totalorder %s302, %s316
    %p318 = scmp.eq.s32.totalorder %s30, 0
    %p319 = por %p317, %p318
    %s321 = sadd.s32 %s320, 1
    %p324 = scmp.eq.s32.totalorder %s24, 1
    %p325 = scmp.ne.s32.totalorder %s320, %s322
    %p326 = scmp.eq.s32.totalorder %s24, 0
    %p327 = por %p325, %p326
    %p328 = scmp.ne.s32.totalorder %s320, %s322
    %p329 = scmp.eq.s32.totalorder %s29, 1
    %p330 = por %p328, %p329
    %p331 = scmp.ne.s32.totalorder %s322, %s323
    %p332 = scmp.eq.s32.totalorder %s29, 0
    %p333 = por %p331, %p332
    %p334 = scmp.ne.s32.totalorder %s322, %s323
    %p335 = scmp.eq.s32.totalorder %s30, 1
    %p336 = por %p334, %p335
    %p338 = scmp.ne.s32.totalorder %s323, %s337
    %p339 = scmp.eq.s32.totalorder %s30, 0
    %p340 = por %p338, %p339
    %s342 = sadd.s32 %s341, 1
    %p345 = scmp.eq.s32.totalorder %s24, 1
    %p346 = scmp.ne.s32.totalorder %s341, %s343
    %p347 = scmp.eq.s32.totalorder %s24, 0
    %p348 = por %p346, %p347
    %p349 = scmp.ne.s32.totalorder %s341, %s343
    %p350 = scmp.eq.s32.totalorder %s29, 1
    %p351 = por %p349, %p350
    %p352 = scmp.ne.s32.totalorder %s343, %s344
    %p353 = scmp.eq.s32.totalorder %s29, 0
    %p354 = por %p352, %p353
    %p355 = scmp.ne.s32.totalorder %s343, %s344
    %p356 = scmp.eq.s32.totalorder %s30, 1
    %p357 = por %p355, %p356
    %p359 = scmp.ne.s32.totalorder %s344, %s358
    %p360 = scmp.eq.s32.totalorder %s30, 0
    %p361 = por %p359, %p360
    %s363 = sadd.s32 %s362, 1
    %p366 = scmp.eq.s32.totalorder %s24, 1
    %p367 = scmp.ne.s32.totalorder %s362, %s364
    %p368 = scmp.eq.s32.totalorder %s24, 0
    %p369 = por %p367, %p368
    %p370 = scmp.ne.s32.totalorder %s362, %s364
    %p371 = scmp.eq.s32.totalorder %s29, 1
    %p372 = por %p370, %p371
    %p373 = scmp.ne.s32.totalorder %s364, %s365
    %p374 = scmp.eq.s32.totalorder %s29, 0
    %p375 = por %p373, %p374
    %p376 = scmp.ne.s32.totalorder %s364, %s365
    %p377 = scmp.eq.s32.totalorder %s30, 1
    %p378 = por %p376, %p377
    %p380 = scmp.ne.s32.totalorder %s365, %s379
    %p381 = scmp.eq.s32.totalorder %s30, 0
    %p382 = por %p380, %p381
    %s384 = sadd.s32 %s383, 1
    %p387 = scmp.eq.s32.totalorder %s24, 1
    %p388 = scmp.ne.s32.totalorder %s383, %s385
    %p389 = scmp.eq.s32.totalorder %s24, 0
    %p390 = por %p388, %p389
    %p391 = scmp.ne.s32.totalorder %s383, %s385
    %p392 = scmp.eq.s32.totalorder %s29, 1
    %p393 = por %p391, %p392
    %p394 = scmp.ne.s32.totalorder %s385, %s386
    %p395 = scmp.eq.s32.totalorder %s29, 0
    %p396 = por %p394, %p395
    %p397 = scmp.ne.s32.totalorder %s385, %s386
    %p398 = scmp.eq.s32.totalorder %s30, 1
    %p399 = por %p397, %p398
    %p401 = scmp.ne.s32.totalorder %s386, %s400
    %p402 = scmp.eq.s32.totalorder %s30, 0
    %p403 = por %p401, %p402
    %s405 = sadd.s32 %s404, 1
    %p408 = scmp.eq.s32.totalorder %s24, 1
    %p409 = scmp.ne.s32.totalorder %s404, %s406
    %p410 = scmp.eq.s32.totalorder %s24, 0
    %p411 = por %p409, %p410
    %p412 = scmp.ne.s32.totalorder %s404, %s406
    %p413 = scmp.eq.s32.totalorder %s29, 1
    %p414 = por %p412, %p413
    %p415 = scmp.ne.s32.totalorder %s406, %s407
    %p416 = scmp.eq.s32.totalorder %s29, 0
    %p417 = por %p415, %p416
    %p418 = scmp.ne.s32.totalorder %s406, %s407
    %p419 = scmp.eq.s32.totalorder %s30, 1
    %p420 = por %p418, %p419
    %p422 = scmp.ne.s32.totalorder %s407, %s421
    %p423 = scmp.eq.s32.totalorder %s30, 0
    %p424 = por %p422, %p423
    %s425 = ssub.s32 %s24, %s31
    %p426 = scmp.eq.s32.totalorder %s425, 0
    %s428 = sadd.s32 %s427, 1
    %s429 = scalar_select %p426, %s427, %s428
    %p432 = pneg %p426
    %p433 = scmp.eq.s32.totalorder %s24, 1
    %p434 = por %p432, %p433
    %p435 = scmp.ne.s32.totalorder %s427, %s430
    %p436 = scmp.eq.s32.totalorder %s24, 0
    %p437 = por %p435, %p436
    %p438 = scmp.ne.s32.totalorder %s427, %s430
    %p439 = scmp.eq.s32.totalorder %s29, 1
    %p440 = por %p438, %p439
    %p441 = scmp.ne.s32.totalorder %s430, %s431
    %p442 = scmp.eq.s32.totalorder %s29, 0
    %p443 = por %p441, %p442
    %p444 = scmp.ne.s32.totalorder %s430, %s431
    %p445 = scmp.eq.s32.totalorder %s30, 1
    %p446 = por %p444, %p445
    %p448 = scmp.ne.s32.totalorder %s431, %s447
    %p449 = scmp.eq.s32.totalorder %s30, 0
    %p450 = por %p448, %p449
    %p451 = scmp.le.s32.totalorder 1, %s24
    %p452 = scmp.lt.s32.totalorder %s24, 3
    %p453 = pnand %p451, %p452
    %p454 = pneg %p453
    // Predicated region
    $region9: #{icm_loss_pallas.1} parent=5 // pred_check
      _
    $region10: #{icm_loss_pallas.1} parent=5 // pred_check_branch
      %456 = sbr.rel (%p453) target = $region12
    $region11: #{icm_loss_pallas.1} parent=5 // pred_region
      %s457 = ssub.s32 %s24, 1
      // Predicated region
      $region13: #{icm_loss_pallas.1} parent=11 // pred_check
        %p458 = pneg %p123
      $region14: #{icm_loss_pallas.1} parent=11 // pred_check_branch
        %460 = sbr.rel (%p458) target = $region16
      $region15: #{icm_loss_pallas.1} parent=11 // pred_region
        _
      $region16: #{icm_loss_pallas.1} parent=11 // pred_fallthru
        _
      // Predicated region
      $region17: #{icm_loss_pallas.1} parent=11 // pred_check
        %p461 = pneg %p144
      $region18: #{icm_loss_pallas.1} parent=11 // pred_check_branch
        %463 = sbr.rel (%p461) target = $region20
      $region19: #{icm_loss_pallas.1} parent=11 // pred_region
        _
      $region20: #{icm_loss_pallas.1} parent=11 // pred_fallthru
        _
      // Predicated region
      $region21: #{icm_loss_pallas.1} parent=11 // pred_check
        %p464 = pneg %p165
      $region22: #{icm_loss_pallas.1} parent=11 // pred_check_branch
        %466 = sbr.rel (%p464) target = $region24
      $region23: #{icm_loss_pallas.1} parent=11 // pred_region
        _
      $region24: #{icm_loss_pallas.1} parent=11 // pred_fallthru
        _
      // Predicated region
      $region25: #{icm_loss_pallas.1} parent=11 // pred_check
        %p467 = pneg %p186
      $region26: #{icm_loss_pallas.1} parent=11 // pred_check_branch
        %469 = sbr.rel (%p467) target = $region28
      $region27: #{icm_loss_pallas.1} parent=11 // pred_region
        _
      $region28: #{icm_loss_pallas.1} parent=11 // pred_fallthru
        _
      // Predicated region
      $region29: #{icm_loss_pallas.1} parent=11 // pred_check
        %p470 = pneg %p207
      $region30: #{icm_loss_pallas.1} parent=11 // pred_check_branch
        %472 = sbr.rel (%p470) target = $region32
      $region31: #{icm_loss_pallas.1} parent=11 // pred_region
        _
      $region32: #{icm_loss_pallas.1} parent=11 // pred_fallthru
        _
      // Predicated region
      $region33: #{icm_loss_pallas.1} parent=11 // pred_check
        %p473 = pneg %p228
      $region34: #{icm_loss_pallas.1} parent=11 // pred_check_branch
        %475 = sbr.rel (%p473) target = $region36
      $region35: #{icm_loss_pallas.1} parent=11 // pred_region
        _
      $region36: #{icm_loss_pallas.1} parent=11 // pred_fallthru
        _
      // Predicated region
      $region37: #{icm_loss_pallas.1} parent=11 // pred_check
        %p476 = pneg %p249
      $region38: #{icm_loss_pallas.1} parent=11 // pred_check_branch
        %478 = sbr.rel (%p476) target = $region40
      $region39: #{icm_loss_pallas.1} parent=11 // pred_region
        _
      $region40: #{icm_loss_pallas.1} parent=11 // pred_fallthru
        _
      // Predicated region
      $region41: #{icm_loss_pallas.1} parent=11 // pred_check
        %p479 = pneg %p270
      $region42: #{icm_loss_pallas.1} parent=11 // pred_check_branch
        %481 = sbr.rel (%p479) target = $region44
      $region43: #{icm_loss_pallas.1} parent=11 // pred_region
        _
      $region44: #{icm_loss_pallas.1} parent=11 // pred_fallthru
        _
      // Predicated region
      $region45: #{icm_loss_pallas.1} parent=11 // pred_check
        %p482 = pneg %p291
      $region46: #{icm_loss_pallas.1} parent=11 // pred_check_branch
        %484 = sbr.rel (%p482) target = $region48
      $region47: #{icm_loss_pallas.1} parent=11 // pred_region
        _
      $region48: #{icm_loss_pallas.1} parent=11 // pred_fallthru
        _
      // Predicated region
      $region49: #{icm_loss_pallas.1} parent=11 // pred_check
        %p485 = pneg %p312
      $region50: #{icm_loss_pallas.1} parent=11 // pred_check_branch
        %487 = sbr.rel (%p485) target = $region52
      $region51: #{icm_loss_pallas.1} parent=11 // pred_region
        _
      $region52: #{icm_loss_pallas.1} parent=11 // pred_fallthru
        _
      // Predicated region
      $region53: #{icm_loss_pallas.1} parent=11 // pred_check
        %p488 = pneg %p333
      $region54: #{icm_loss_pallas.1} parent=11 // pred_check_branch
        %490 = sbr.rel (%p488) target = $region56
      $region55: #{icm_loss_pallas.1} parent=11 // pred_region
        _
      $region56: #{icm_loss_pallas.1} parent=11 // pred_fallthru
        _
      // Predicated region
      $region57: #{icm_loss_pallas.1} parent=11 // pred_check
        %p491 = pneg %p354
      $region58: #{icm_loss_pallas.1} parent=11 // pred_check_branch
        %493 = sbr.rel (%p491) target = $region60
      $region59: #{icm_loss_pallas.1} parent=11 // pred_region
        _
      $region60: #{icm_loss_pallas.1} parent=11 // pred_fallthru
        _
      // Predicated region
      $region61: #{icm_loss_pallas.1} parent=11 // pred_check
        %p494 = pneg %p375
      $region62: #{icm_loss_pallas.1} parent=11 // pred_check_branch
        %496 = sbr.rel (%p494) target = $region64
      $region63: #{icm_loss_pallas.1} parent=11 // pred_region
        _
      $region64: #{icm_loss_pallas.1} parent=11 // pred_fallthru
        _
      // Predicated region
      $region65: #{icm_loss_pallas.1} parent=11 // pred_check
        %p497 = pneg %p396
      $region66: #{icm_loss_pallas.1} parent=11 // pred_check_branch
        %499 = sbr.rel (%p497) target = $region68
      $region67: #{icm_loss_pallas.1} parent=11 // pred_region
        _
      $region68: #{icm_loss_pallas.1} parent=11 // pred_fallthru
        _
      // Predicated region
      $region69: #{icm_loss_pallas.1} parent=11 // pred_check
        %p500 = pneg %p417
      $region70: #{icm_loss_pallas.1} parent=11 // pred_check_branch
        %502 = sbr.rel (%p500) target = $region72
      $region71: #{icm_loss_pallas.1} parent=11 // pred_region
        _
      $region72: #{icm_loss_pallas.1} parent=11 // pred_fallthru
        _
    $region12: #{icm_loss_pallas.1} parent=5 // pred_fallthru
      _
    %p503 = scmp.lt.s32.totalorder %s24, 2
    // Predicated region
    $region73: #{icm_loss_pallas.1} parent=5 // pred_check
      %p504 = pneg %p503
    $region74: #{icm_loss_pallas.1} parent=5 // pred_check_branch
      %506 = sbr.rel (%p504) target = $region76
    $region75: #{icm_loss_pallas.1} parent=5 // pred_region
      // Predicated region
      $region77: #{icm_loss_pallas.1} parent=75 // pred_check
        %p507 = pneg %p44
      $region78: #{icm_loss_pallas.1} parent=75 // pred_check_branch
        %509 = sbr.rel (%p507) target = $region80
      $region79: #{icm_loss_pallas.1} parent=75 // pred_region
        %s510 = smul.u32 13, %s24
        %s511 = ssub.s32 25, %s510
        %p512 = scmp.lt.s32.totalorder %s511, 13
        %s513 = scalar_select %p512, %s511, 13
        %s514 = smul.u32 128, %s513
        %p515 = scmp.lt.s32.totalorder %s510, 24
        %s516 = scalar_select %p515, %s510, 24
        %s517 = smul.addr %s516, 8
        %s518 = scalar_lea.vmem %s0, %s517
        %s519 = smul.u32 13, %s24
        %s520 = ssub.s32 25, %s519
        %p521 = scmp.lt.s32.totalorder %s520, 13
        %s522 = scalar_select %p521, %s520, 13
        %s523 = smul.u32 128, %s522
      $region80: #{icm_loss_pallas.1} parent=75 // pred_fallthru
        _
      // Predicated region
      $region81: #{icm_loss_pallas.1} parent=75 // pred_check
        %p524 = pneg %p70
      $region82: #{icm_loss_pallas.1} parent=75 // pred_check_branch
        %526 = sbr.rel (%p524) target = $region84
      $region83: #{icm_loss_pallas.1} parent=75 // pred_region
        %s527 = smul.u32 13, %s24
        %s528 = ssub.s32 25, %s527
        %p529 = scmp.lt.s32.totalorder %s528, 13
        %s530 = scalar_select %p529, %s528, 13
        %s531 = smul.u32 128, %s530
        %p532 = scmp.lt.s32.totalorder %s527, 24
        %s533 = scalar_select %p532, %s527, 24
        %s534 = smul.addr %s533, 8
        %s535 = scalar_lea.vmem %s1, %s534
        %s536 = smul.u32 13, %s24
        %s537 = ssub.s32 25, %s536
        %p538 = scmp.lt.s32.totalorder %s537, 13
        %s539 = scalar_select %p538, %s537, 13
        %s540 = smul.u32 128, %s539
      $region84: #{icm_loss_pallas.1} parent=75 // pred_fallthru
        _
      // Predicated region
      $region85: #{icm_loss_pallas.1} parent=75 // pred_check
        %p541 = pneg %p96
      $region86: #{icm_loss_pallas.1} parent=75 // pred_check_branch
        %543 = sbr.rel (%p541) target = $region88
      $region87: #{icm_loss_pallas.1} parent=75 // pred_region
        %s544 = smul.u32 13, %s24
        %s545 = ssub.s32 25, %s544
        %p546 = scmp.lt.s32.totalorder %s545, 13
        %s547 = scalar_select %p546, %s545, 13
        %s548 = smul.u32 128, %s547
        %p549 = scmp.lt.s32.totalorder %s544, 24
        %s550 = scalar_select %p549, %s544, 24
        %s551 = smul.addr %s550, 8
        %s552 = scalar_lea.vmem %s2, %s551
        %s553 = smul.u32 13, %s24
        %s554 = ssub.s32 25, %s553
        %p555 = scmp.lt.s32.totalorder %s554, 13
        %s556 = scalar_select %p555, %s554, 13
        %s557 = smul.u32 128, %s556
      $region88: #{icm_loss_pallas.1} parent=75 // pred_fallthru
        _
    $region76: #{icm_loss_pallas.1} parent=5 // pred_fallthru
      _
    %p558 = scmp.le.s32.totalorder 1, %s24
    %p559 = scmp.lt.s32.totalorder %s24, 3
    %p560 = pnand %p558, %p559
    %p561 = pneg %p560
    // Predicated region
    $region89: #{icm_loss_pallas.1} parent=5 // pred_check
      _
    $region90: #{icm_loss_pallas.1} parent=5 // pred_check_branch
      %563 = sbr.rel (%p560) target = $region92
    $region91: #{icm_loss_pallas.1} parent=5 // pred_region
      %s564 = ssub.s32 %s24, 1
      %s565 = smul.u32 13, %s29
      %s566 = ssub.s32 25, %s565
      %p567 = scmp.lt.s32.totalorder %s566, 13
      %s568 = scalar_select %p567, %s566, 13
      %s569 = smul.u32 128, %s568
      %p570 = scmp.lt.s32.totalorder %s565, 24
      %s571 = scalar_select %p570, %s565, 24
      %s572 = smul.addr %s571, 8
      %s573 = scalar_lea.vmem %s0, %s572
      %p574 = pneg %p50
      %p575 = pneg %p47
      %s576 = smul.u32 13, %s29
      %s577 = ssub.s32 25, %s576
      %p578 = scmp.lt.s32.totalorder %s577, 13
      %s579 = scalar_select %p578, %s577, 13
      %s580 = smul.u32 128, %s579
      %p581 = scmp.lt.s32.totalorder %s576, 24
      %s582 = scalar_select %p581, %s576, 24
      %s583 = smul.addr %s582, 8
      %s584 = scalar_lea.vmem %s1, %s583
      %p585 = pneg %p76
      %p586 = pneg %p73
      %s587 = smul.u32 13, %s29
      %s588 = ssub.s32 25, %s587
      %p589 = scmp.lt.s32.totalorder %s588, 13
      %s590 = scalar_select %p589, %s588, 13
      %s591 = smul.u32 128, %s590
      %p592 = scmp.lt.s32.totalorder %s587, 24
      %s593 = scalar_select %p592, %s587, 24
      %s594 = smul.addr %s593, 8
      %s595 = scalar_lea.vmem %s2, %s594
      %p596 = pneg %p102
      %p597 = pneg %p99
      %p598 = pneg %p123
      %p599 = pneg %p120
      %p600 = pneg %p144
      %p601 = pneg %p141
      %p602 = pneg %p165
      %p603 = pneg %p162
      %p604 = pneg %p186
      %p605 = pneg %p183
      %p606 = pneg %p207
      %p607 = pneg %p204
      %p608 = pneg %p228
      %p609 = pneg %p225
      %p610 = pneg %p249
      %p611 = pneg %p246
      %p612 = pneg %p270
      %p613 = pneg %p267
      %p614 = pneg %p291
      %p615 = pneg %p288
      %p616 = pneg %p312
      %p617 = pneg %p309
      %p618 = pneg %p333
      %p619 = pneg %p330
      %p620 = pneg %p354
      %p621 = pneg %p351
      %p622 = pneg %p375
      %p623 = pneg %p372
      %p624 = pneg %p396
      %p625 = pneg %p393
      %p626 = pneg %p417
      %p627 = pneg %p414
      %p628 = pneg %p443
      %p629 = pneg %p440
      %p630 = scmp.lt.s32.totalorder %s29, 1
      %s631 = scalar_select %p630, %s29, 1
      %s632 = smul.addr %s631, 8
      %s633 = scalar_lea.vmem %s18, %s632
      %s634 = smul.u32 13, %s29
      %s635 = ssub.s32 25, %s634
      %p636 = scmp.lt.s32.totalorder %s635, 13
      %s637 = scalar_select %p636, %s635, 13
      %s638 = smul.u32 128, %s637
      %p639 = scmp.lt.s32.totalorder %s634, 24
      %s640 = scalar_select %p639, %s634, 24
      %s641 = smul.addr %s640, 8
      %s642 = scalar_lea.vmem %s0, %s641
      %s643 = smul.u32 13, %s29
      %s644 = ssub.s32 25, %s643
      %p645 = scmp.lt.s32.totalorder %s644, 13
      %s646 = scalar_select %p645, %s644, 13
      %s647 = smul.u32 128, %s646
      %s648 = smul.u32 13, %s29
      %s649 = ssub.s32 25, %s648
      %p650 = scmp.lt.s32.totalorder %s649, 13
      %s651 = scalar_select %p650, %s649, 13
      %s652 = smul.u32 128, %s651
      %p653 = scmp.lt.s32.totalorder %s648, 24
      %s654 = scalar_select %p653, %s648, 24
      %s655 = smul.addr %s654, 8
      %s656 = scalar_lea.vmem %s1, %s655
      %s657 = smul.u32 13, %s29
      %s658 = ssub.s32 25, %s657
      %p659 = scmp.lt.s32.totalorder %s658, 13
      %s660 = scalar_select %p659, %s658, 13
      %s661 = smul.u32 128, %s660
      %s662 = smul.u32 13, %s29
      %s663 = ssub.s32 25, %s662
      %p664 = scmp.lt.s32.totalorder %s663, 13
      %s665 = scalar_select %p664, %s663, 13
      %s666 = smul.u32 128, %s665
      %p667 = scmp.lt.s32.totalorder %s662, 24
      %s668 = scalar_select %p667, %s662, 24
      %s669 = smul.addr %s668, 8
      %s670 = scalar_lea.vmem %s2, %s669
      %s671 = smul.u32 13, %s29
      %s672 = ssub.s32 25, %s671
      %p673 = scmp.lt.s32.totalorder %s672, 13
      %s674 = scalar_select %p673, %s672, 13
      %s675 = smul.u32 128, %s674
      %p676 = scmp.lt.s32.totalorder %s29, 1
      %s677 = scalar_select %p676, %s29, 1
      %s678 = smul.addr %s677, 8
      %s679 = scalar_lea.vmem %s18, %s678
      %v680 = vld [vmem:[%s642] sm:$0xff]
      %v681 = vld [vmem:[%s642 + $0x8] sm:$0xff]
      %v682 = vld [vmem:[%s642 + $0x10] sm:$0xff]
      %v683 = vld [vmem:[%s642 + $0x18] sm:$0xff]
      %v684 = vld [vmem:[%s642 + $0x20] sm:$0xff]
      %v685 = vld [vmem:[%s642 + $0x28] sm:$0xff]
      %v686 = vld [vmem:[%s642 + $0x30] sm:$0xff]
      %v687 = vld [vmem:[%s642 + $0x38] sm:$0xff]
      %v688 = vld [vmem:[%s642 + $0x40] sm:$0xff]
      %v689 = vld [vmem:[%s642 + $0x48] sm:$0xff]
      %v690 = vld [vmem:[%s642 + $0x50] sm:$0xff]
      %v691 = vld [vmem:[%s642 + $0x58] sm:$0xff]
      %v692 = vld [vmem:[%s642 + $0x60] sm:$0xff]
      %v693 = vld [vmem:[%s656] sm:$0xff]
      %v694 = vld [vmem:[%s656 + $0x8] sm:$0xff]
      %v695 = vld [vmem:[%s656 + $0x10] sm:$0xff]
      %v696 = vld [vmem:[%s656 + $0x18] sm:$0xff]
      %v697 = vld [vmem:[%s656 + $0x20] sm:$0xff]
      %v698 = vld [vmem:[%s656 + $0x28] sm:$0xff]
      %v699 = vld [vmem:[%s656 + $0x30] sm:$0xff]
      %v700 = vld [vmem:[%s656 + $0x38] sm:$0xff]
      %v701 = vld [vmem:[%s656 + $0x40] sm:$0xff]
      %v702 = vld [vmem:[%s656 + $0x48] sm:$0xff]
      %v703 = vld [vmem:[%s656 + $0x50] sm:$0xff]
      %v704 = vld [vmem:[%s656 + $0x58] sm:$0xff]
      %v705 = vld [vmem:[%s656 + $0x60] sm:$0xff]
      %v706 = vld [vmem:[%s3] sm:$0xff]
      %v707 = vld [vmem:[%s3 + $0x8] sm:$0xff]
      %v708 = vld [vmem:[%s3 + $0x10] sm:$0xff]
      %v709 = vld [vmem:[%s3 + $0x18] sm:$0xff]
      %v710 = vld [vmem:[%s4] sm:$0x1]
      %v712 = vlaneseq
      %v713 = vshrl.u32 %v712, 7
      %v714 = vsub.s32 0, %v713
      %v715 = vrot.slane %v710, %v714
      %vm717 = vcmask 261120
      %v719 = vsel %vm717, %v680, 0
      %v722 = vsel %vm717, %v681, 0
      %v725 = vsel %vm717, %v682, 0
      %v728 = vsel %vm717, %v683, 0
      %v731 = vsel %vm717, %v684, 0
      %v734 = vsel %vm717, %v685, 0
      %v737 = vsel %vm717, %v686, 0
      %v740 = vsel %vm717, %v687, 0
      %v743 = vsel %vm717, %v688, 0
      %v746 = vsel %vm717, %v689, 0
      %v749 = vsel %vm717, %v690, 0
      %v752 = vsel %vm717, %v691, 0
      %v755 = vsel %vm717, %v692, 0
      %v758 = vsel %vm717, %v693, 0
      %v761 = vsel %vm717, %v694, 0
      %v764 = vsel %vm717, %v695, 0
      %v767 = vsel %vm717, %v696, 0
      %v770 = vsel %vm717, %v697, 0
      %v773 = vsel %vm717, %v698, 0
      %v776 = vsel %vm717, %v699, 0
      %v779 = vsel %vm717, %v700, 0
      %v782 = vsel %vm717, %v701, 0
      %v785 = vsel %vm717, %v702, 0
      %v788 = vsel %vm717, %v703, 0
      %v791 = vsel %vm717, %v704, 0
      %v794 = vsel %vm717, %v705, 0
      %796 = vmatprep.subr.mxu0 0.0
      %797 = vmatpush1.msra.mxu0 0.0
      %798 = vmatprep.subr.mxu0 0.0
      %799 = vmatpush1.msra.mxu0 0.0
      %800 = vmatprep.subr.mxu0 0.0
      %801 = vmatpush1.msra.mxu0 0.0
      %802 = vmatprep.subr.mxu0 0.0
      %803 = vmatpush1.msra.mxu0 0.0
      %804 = vmatprep.subr.mxu0 0.0
      %805 = vmatpush1.msra.mxu0 0.0
      %806 = vmatprep.subr.mxu0 0.0
      %807 = vmatpush1.msra.mxu0 0.0
      %808 = vmatprep.subr.mxu0 0.0
      %809 = vmatpush1.msra.mxu0 0.0
      %810 = vmatprep.subr.mxu0 0.0
      %811 = vmatpush1.msra.mxu0 0.0
      %812 = vmatprep.subr.mxu0 0.0
      %813 = vmatpush1.msra.mxu0 0.0
      %814 = vmatprep.subr.mxu0 0.0
      %815 = vmatpush1.msra.mxu0 0.0
      %816 = vmatprep.subr.mxu0 0.0
      %817 = vmatpush1.msra.mxu0 0.0
      %818 = vmatprep.subr.mxu0 0.0
      %819 = vmatpush1.msra.mxu0 0.0
      %820 = vmatprep.subr.mxu0 0.0
      %821 = vmatpush1.msra.mxu0 %v709
      %822 = vmatprep.subr.mxu0 0.0
      %823 = vmatpush1.msra.mxu0 %v708
      %824 = vmatprep.subr.mxu0 0.0
      %825 = vmatpush1.msra.mxu0 %v707
      %826 = vmatprep.subr.mxu0 0.0
      %827 = vmatpush1.msra.mxu0 %v706
      %828 = vmatprep.subr.mxu0 0.0
      %829 = vmatpush2.msra.mxu0 0.0
      %830 = vmatprep.subr.mxu0 0.0
      %831 = vmatpush2.msra.mxu0 0.0
      %832 = vmatprep.subr.mxu0 0.0
      %833 = vmatpush2.msra.mxu0 0.0
      %834 = vmatprep.subr.mxu0 0.0
      %835 = vmatpush2.msra.mxu0 0.0
      %836 = vmatprep.subr.mxu0 0.0
      %837 = vmatpush2.msra.mxu0 0.0
      %838 = vmatprep.subr.mxu0 0.0
      %839 = vmatpush2.msra.mxu0 0.0
      %840 = vmatprep.subr.mxu0 0.0
      %841 = vmatpush2.msra.mxu0 0.0
      %842 = vmatprep.subr.mxu0 0.0
      %843 = vmatpush2.msra.mxu0 0.0
      %844 = vmatprep.subr.mxu0 0.0
      %845 = vmatpush2.msra.mxu0 0.0
      %846 = vmatprep.subr.mxu0 0.0
      %847 = vmatpush2.msra.mxu0 0.0
      %848 = vmatprep.subr.mxu0 0.0
      %849 = vmatpush2.msra.mxu0 0.0
      %850 = vmatprep.subr.mxu0 0.0
      %851 = vmatpush2.msra.mxu0 0.0
      %852 = vmatprep.subr.mxu0 0.0
      %853 = vmatpush2.msra.mxu0 0.0
      %854 = vmatprep.subr.mxu0 0.0
      %855 = vmatpush2.msra.mxu0 0.0
      %856 = vmatprep.subr.mxu0 0.0
      %857 = vmatpush2.msra.mxu0 0.0
      %858 = vmatprep.subr.mxu0 0.0
      %859 = vmatpush2.msra.mxu0 0.0
      %860 = vmatprep.mubr.f32.mxu0 0.0
      %861 = vmatmul.mubr.f32.gmra.mxu0 %v719
      %v862 = vpop.f32.mrf.mxu0
      %v863 = vadd.f32 %v715, %v862
      %v864 = vpop.f32.mrf.mxu0
      %865 = vmatprep.mubr.f32.mxu0 0.0
      %866 = vmatmul.mubr.f32.gmra.mxu0 %v722
      %v867 = vpop.f32.mrf.mxu0
      %v868 = vadd.f32 %v715, %v867
      %v869 = vpop.f32.mrf.mxu0
      %870 = vmatprep.mubr.f32.mxu0 0.0
      %871 = vmatmul.mubr.f32.gmra.mxu0 %v725
      %v872 = vpop.f32.mrf.mxu0
      %v873 = vadd.f32 %v715, %v872
      %v874 = vpop.f32.mrf.mxu0
      %875 = vmatprep.mubr.f32.mxu0 0.0
      %876 = vmatmul.mubr.f32.gmra.mxu0 %v728
      %v877 = vpop.f32.mrf.mxu0
      %v878 = vadd.f32 %v715, %v877
      %v879 = vpop.f32.mrf.mxu0
      %880 = vmatprep.mubr.f32.mxu0 0.0
      %881 = vmatmul.mubr.f32.gmra.mxu0 %v731
      %v882 = vpop.f32.mrf.mxu0
      %v883 = vadd.f32 %v715, %v882
      %v884 = vpop.f32.mrf.mxu0
      %885 = vmatprep.mubr.f32.mxu0 0.0
      %886 = vmatmul.mubr.f32.gmra.mxu0 %v734
      %v887 = vpop.f32.mrf.mxu0
      %v888 = vadd.f32 %v715, %v887
      %v889 = vpop.f32.mrf.mxu0
      %890 = vmatprep.mubr.f32.mxu0 0.0
      %891 = vmatmul.mubr.f32.gmra.mxu0 %v737
      %v892 = vpop.f32.mrf.mxu0
      %v893 = vadd.f32 %v715, %v892
      %v894 = vpop.f32.mrf.mxu0
      %895 = vmatprep.mubr.f32.mxu0 0.0
      %896 = vmatmul.mubr.f32.gmra.mxu0 %v740
      %v897 = vpop.f32.mrf.mxu0
      %v898 = vadd.f32 %v715, %v897
      %v899 = vpop.f32.mrf.mxu0
      %900 = vmatprep.mubr.f32.mxu0 0.0
      %901 = vmatmul.mubr.f32.gmra.mxu0 %v743
      %v902 = vpop.f32.mrf.mxu0
      %v903 = vadd.f32 %v715, %v902
      %v904 = vpop.f32.mrf.mxu0
      %905 = vmatprep.mubr.f32.mxu0 0.0
      %906 = vmatmul.mubr.f32.gmra.mxu0 %v746
      %v907 = vpop.f32.mrf.mxu0
      %v908 = vadd.f32 %v715, %v907
      %v909 = vpop.f32.mrf.mxu0
      %910 = vmatprep.mubr.f32.mxu0 0.0
      %911 = vmatmul.mubr.f32.gmra.mxu0 %v749
      %v912 = vpop.f32.mrf.mxu0
      %v913 = vadd.f32 %v715, %v912
      %v914 = vpop.f32.mrf.mxu0
      %915 = vmatprep.mubr.f32.mxu0 0.0
      %916 = vmatmul.mubr.f32.gmra.mxu0 %v752
      %v917 = vpop.f32.mrf.mxu0
      %v918 = vadd.f32 %v715, %v917
      %v919 = vpop.f32.mrf.mxu0
      %920 = vmatprep.mubr.f32.mxu0 0.0
      %921 = vmatmul.mubr.f32.gmra.mxu0 %v755
      %v922 = vpop.f32.mrf.mxu0
      %v923 = vadd.f32 %v715, %v922
      %v924 = vpop.f32.mrf.mxu0
      %925 = vmatprep.mubr.f32.mxu0 0.0
      %926 = vmatmul.mubr.f32.gmra.mxu0 %v758
      %v927 = vpop.f32.mrf.mxu0
      %v928 = vadd.f32 %v715, %v927
      %v929 = vpop.f32.mrf.mxu0
      %930 = vmatprep.mubr.f32.mxu0 0.0
      %931 = vmatmul.mubr.f32.gmra.mxu0 %v761
      %v932 = vpop.f32.mrf.mxu0
      %v933 = vadd.f32 %v715, %v932
      %v934 = vpop.f32.mrf.mxu0
      %935 = vmatprep.mubr.f32.mxu0 0.0
      %936 = vmatmul.mubr.f32.gmra.mxu0 %v764
      %v937 = vpop.f32.mrf.mxu0
      %v938 = vadd.f32 %v715, %v937
      %v939 = vpop.f32.mrf.mxu0
      %940 = vmatprep.mubr.f32.mxu0 0.0
      %941 = vmatmul.mubr.f32.gmra.mxu0 %v767
      %v942 = vpop.f32.mrf.mxu0
      %v943 = vadd.f32 %v715, %v942
      %v944 = vpop.f32.mrf.mxu0
      %945 = vmatprep.mubr.f32.mxu0 0.0
      %946 = vmatmul.mubr.f32.gmra.mxu0 %v770
      %v947 = vpop.f32.mrf.mxu0
      %v948 = vadd.f32 %v715, %v947
      %v949 = vpop.f32.mrf.mxu0
      %950 = vmatprep.mubr.f32.mxu0 0.0
      %951 = vmatmul.mubr.f32.gmra.mxu0 %v773
      %v952 = vpop.f32.mrf.mxu0
      %v953 = vadd.f32 %v715, %v952
      %v954 = vpop.f32.mrf.mxu0
      %955 = vmatprep.mubr.f32.mxu0 0.0
      %956 = vmatmul.mubr.f32.gmra.mxu0 %v776
      %v957 = vpop.f32.mrf.mxu0
      %v958 = vadd.f32 %v715, %v957
      %v959 = vpop.f32.mrf.mxu0
      %960 = vmatprep.mubr.f32.mxu0 0.0
      %961 = vmatmul.mubr.f32.gmra.mxu0 %v779
      %v962 = vpop.f32.mrf.mxu0
      %v963 = vadd.f32 %v715, %v962
      %v964 = vpop.f32.mrf.mxu0
      %965 = vmatprep.mubr.f32.mxu0 0.0
      %966 = vmatmul.mubr.f32.gmra.mxu0 %v782
      %v967 = vpop.f32.mrf.mxu0
      %v968 = vadd.f32 %v715, %v967
      %v969 = vpop.f32.mrf.mxu0
      %970 = vmatprep.mubr.f32.mxu0 0.0
      %971 = vmatmul.mubr.f32.gmra.mxu0 %v785
      %v972 = vpop.f32.mrf.mxu0
      %v973 = vadd.f32 %v715, %v972
      %v974 = vpop.f32.mrf.mxu0
      %975 = vmatprep.mubr.f32.mxu0 0.0
      %976 = vmatmul.mubr.f32.gmra.mxu0 %v788
      %v977 = vpop.f32.mrf.mxu0
      %v978 = vadd.f32 %v715, %v977
      %v979 = vpop.f32.mrf.mxu0
      %980 = vmatprep.mubr.f32.mxu0 0.0
      %981 = vmatmul.mubr.f32.gmra.mxu0 %v791
      %v982 = vpop.f32.mrf.mxu0
      %v983 = vadd.f32 %v715, %v982
      %v984 = vpop.f32.mrf.mxu0
      %985 = vmatprep.mubr.f32.mxu0 0.0
      %986 = vmatmul.mubr.f32.gmra.mxu0 %v794
      %v987 = vpop.f32.mrf.mxu0
      %v988 = vadd.f32 %v715, %v987
      %v989 = vpop.f32.mrf.mxu0
      %990 = vdwg.mxu0
      %vm991 = vcmask 523264
      %v992 = vsel %vm991, %v863, 0.0
      %993 = vadd.xlane.f32.xlu0 %v992
      %v994 = vpop.xlane.xlu0 %993
      %v995 = vsel %vm991, %v868, 0.0
      %996 = vadd.xlane.f32.xlu0 %v995
      %v997 = vpop.xlane.xlu0 %996
      %v998 = vsel %vm991, %v873, 0.0
      %999 = vadd.xlane.f32.xlu0 %v998
      %v1000 = vpop.xlane.xlu0 %999
      %v1001 = vsel %vm991, %v878, 0.0
      %1002 = vadd.xlane.f32.xlu0 %v1001
      %v1003 = vpop.xlane.xlu0 %1002
      %v1004 = vsel %vm991, %v883, 0.0
      %1005 = vadd.xlane.f32.xlu0 %v1004
      %v1006 = vpop.xlane.xlu0 %1005
      %v1007 = vsel %vm991, %v888, 0.0
      %1008 = vadd.xlane.f32.xlu0 %v1007
      %v1009 = vpop.xlane.xlu0 %1008
      %v1010 = vsel %vm991, %v893, 0.0
      %1011 = vadd.xlane.f32.xlu0 %v1010
      %v1012 = vpop.xlane.xlu0 %1011
      %v1013 = vsel %vm991, %v898, 0.0
      %1014 = vadd.xlane.f32.xlu0 %v1013
      %v1015 = vpop.xlane.xlu0 %1014
      %v1016 = vsel %vm991, %v903, 0.0
      %1017 = vadd.xlane.f32.xlu0 %v1016
      %v1018 = vpop.xlane.xlu0 %1017
      %v1019 = vsel %vm991, %v908, 0.0
      %1020 = vadd.xlane.f32.xlu0 %v1019
      %v1021 = vpop.xlane.xlu0 %1020
      %v1022 = vsel %vm991, %v913, 0.0
      %1023 = vadd.xlane.f32.xlu0 %v1022
      %v1024 = vpop.xlane.xlu0 %1023
      %v1025 = vsel %vm991, %v918, 0.0
      %1026 = vadd.xlane.f32.xlu0 %v1025
      %v1027 = vpop.xlane.xlu0 %1026
      %v1028 = vsel %vm991, %v923, 0.0
      %1029 = vadd.xlane.f32.xlu0 %v1028
      %v1030 = vpop.xlane.xlu0 %1029
      %v1031 = vsel %vm991, %v928, 0.0
      %1032 = vadd.xlane.f32.xlu0 %v1031
      %v1033 = vpop.xlane.xlu0 %1032
      %v1034 = vsel %vm991, %v933, 0.0
      %1035 = vadd.xlane.f32.xlu0 %v1034
      %v1036 = vpop.xlane.xlu0 %1035
      %v1037 = vsel %vm991, %v938, 0.0
      %1038 = vadd.xlane.f32.xlu0 %v1037
      %v1039 = vpop.xlane.xlu0 %1038
      %v1040 = vsel %vm991, %v943, 0.0
      %1041 = vadd.xlane.f32.xlu0 %v1040
      %v1042 = vpop.xlane.xlu0 %1041
      %v1043 = vsel %vm991, %v948, 0.0
      %1044 = vadd.xlane.f32.xlu0 %v1043
      %v1045 = vpop.xlane.xlu0 %1044
      %v1046 = vsel %vm991, %v953, 0.0
      %1047 = vadd.xlane.f32.xlu0 %v1046
      %v1048 = vpop.xlane.xlu0 %1047
      %v1049 = vsel %vm991, %v958, 0.0
      %1050 = vadd.xlane.f32.xlu0 %v1049
      %v1051 = vpop.xlane.xlu0 %1050
      %v1052 = vsel %vm991, %v963, 0.0
      %1053 = vadd.xlane.f32.xlu0 %v1052
      %v1054 = vpop.xlane.xlu0 %1053
      %v1055 = vsel %vm991, %v968, 0.0
      %1056 = vadd.xlane.f32.xlu0 %v1055
      %v1057 = vpop.xlane.xlu0 %1056
      %v1058 = vsel %vm991, %v973, 0.0
      %1059 = vadd.xlane.f32.xlu0 %v1058
      %v1060 = vpop.xlane.xlu0 %1059
      %v1061 = vsel %vm991, %v978, 0.0
      %1062 = vadd.xlane.f32.xlu0 %v1061
      %v1063 = vpop.xlane.xlu0 %1062
      %v1064 = vsel %vm991, %v983, 0.0
      %1065 = vadd.xlane.f32.xlu0 %v1064
      %v1066 = vpop.xlane.xlu0 %1065
      %v1067 = vsel %vm991, %v988, 0.0
      %1068 = vadd.xlane.f32.xlu0 %v1067
      %v1069 = vpop.xlane.xlu0 %1068
      %v1070 = vmul.f32 %v863, %v863
      %v1071 = vmul.f32 %v868, %v868
      %v1072 = vmul.f32 %v873, %v873
      %v1073 = vmul.f32 %v878, %v878
      %v1074 = vmul.f32 %v883, %v883
      %v1075 = vmul.f32 %v888, %v888
      %v1076 = vmul.f32 %v893, %v893
      %v1077 = vmul.f32 %v898, %v898
      %v1078 = vmul.f32 %v903, %v903
      %v1079 = vmul.f32 %v908, %v908
      %v1080 = vmul.f32 %v913, %v913
      %v1081 = vmul.f32 %v918, %v918
      %v1082 = vmul.f32 %v923, %v923
      %v1083 = vmul.f32 %v928, %v928
      %v1084 = vmul.f32 %v933, %v933
      %v1085 = vmul.f32 %v938, %v938
      %v1086 = vmul.f32 %v943, %v943
      %v1087 = vmul.f32 %v948, %v948
      %v1088 = vmul.f32 %v953, %v953
      %v1089 = vmul.f32 %v958, %v958
      %v1090 = vmul.f32 %v963, %v963
      %v1091 = vmul.f32 %v968, %v968
      %v1092 = vmul.f32 %v973, %v973
      %v1093 = vmul.f32 %v978, %v978
      %v1094 = vmul.f32 %v983, %v983
      %v1095 = vmul.f32 %v988, %v988
      %v1096 = vsel %vm991, %v1070, 0.0
      %1097 = vadd.xlane.f32.xlu0 %v1096
      %v1098 = vpop.xlane.xlu0 %1097
      %v1099 = vsel %vm991, %v1071, 0.0
      %1100 = vadd.xlane.f32.xlu0 %v1099
      %v1101 = vpop.xlane.xlu0 %1100
      %v1102 = vsel %vm991, %v1072, 0.0
      %1103 = vadd.xlane.f32.xlu0 %v1102
      %v1104 = vpop.xlane.xlu0 %1103
      %v1105 = vsel %vm991, %v1073, 0.0
      %1106 = vadd.xlane.f32.xlu0 %v1105
      %v1107 = vpop.xlane.xlu0 %1106
      %v1108 = vsel %vm991, %v1074, 0.0
      %1109 = vadd.xlane.f32.xlu0 %v1108
      %v1110 = vpop.xlane.xlu0 %1109
      %v1111 = vsel %vm991, %v1075, 0.0
      %1112 = vadd.xlane.f32.xlu0 %v1111
      %v1113 = vpop.xlane.xlu0 %1112
      %v1114 = vsel %vm991, %v1076, 0.0
      %1115 = vadd.xlane.f32.xlu0 %v1114
      %v1116 = vpop.xlane.xlu0 %1115
      %v1117 = vsel %vm991, %v1077, 0.0
      %1118 = vadd.xlane.f32.xlu0 %v1117
      %v1119 = vpop.xlane.xlu0 %1118
      %v1120 = vsel %vm991, %v1078, 0.0
      %1121 = vadd.xlane.f32.xlu0 %v1120
      %v1122 = vpop.xlane.xlu0 %1121
      %v1123 = vsel %vm991, %v1079, 0.0
      %1124 = vadd.xlane.f32.xlu0 %v1123
      %v1125 = vpop.xlane.xlu0 %1124
      %v1126 = vsel %vm991, %v1080, 0.0
      %1127 = vadd.xlane.f32.xlu0 %v1126
      %v1128 = vpop.xlane.xlu0 %1127
      %v1129 = vsel %vm991, %v1081, 0.0
      %1130 = vadd.xlane.f32.xlu0 %v1129
      %v1131 = vpop.xlane.xlu0 %1130
      %v1132 = vsel %vm991, %v1082, 0.0
      %1133 = vadd.xlane.f32.xlu0 %v1132
      %v1134 = vpop.xlane.xlu0 %1133
      %v1135 = vsel %vm991, %v1083, 0.0
      %1136 = vadd.xlane.f32.xlu0 %v1135
      %v1137 = vpop.xlane.xlu0 %1136
      %v1138 = vsel %vm991, %v1084, 0.0
      %1139 = vadd.xlane.f32.xlu0 %v1138
      %v1140 = vpop.xlane.xlu0 %1139
      %v1141 = vsel %vm991, %v1085, 0.0
      %1142 = vadd.xlane.f32.xlu0 %v1141
      %v1143 = vpop.xlane.xlu0 %1142
      %v1144 = vsel %vm991, %v1086, 0.0
      %1145 = vadd.xlane.f32.xlu0 %v1144
      %v1146 = vpop.xlane.xlu0 %1145
      %v1147 = vsel %vm991, %v1087, 0.0
      %1148 = vadd.xlane.f32.xlu0 %v1147
      %v1149 = vpop.xlane.xlu0 %1148
      %v1150 = vsel %vm991, %v1088, 0.0
      %1151 = vadd.xlane.f32.xlu0 %v1150
      %v1152 = vpop.xlane.xlu0 %1151
      %v1153 = vsel %vm991, %v1089, 0.0
      %1154 = vadd.xlane.f32.xlu0 %v1153
      %v1155 = vpop.xlane.xlu0 %1154
      %v1156 = vsel %vm991, %v1090, 0.0
      %1157 = vadd.xlane.f32.xlu0 %v1156
      %v1158 = vpop.xlane.xlu0 %1157
      %v1159 = vsel %vm991, %v1091, 0.0
      %1160 = vadd.xlane.f32.xlu0 %v1159
      %v1161 = vpop.xlane.xlu0 %1160
      %v1162 = vsel %vm991, %v1092, 0.0
      %1163 = vadd.xlane.f32.xlu0 %v1162
      %v1164 = vpop.xlane.xlu0 %1163
      %v1165 = vsel %vm991, %v1093, 0.0
      %1166 = vadd.xlane.f32.xlu0 %v1165
      %v1167 = vpop.xlane.xlu0 %1166
      %v1168 = vsel %vm991, %v1094, 0.0
      %1169 = vadd.xlane.f32.xlu0 %v1168
      %v1170 = vpop.xlane.xlu0 %1169
      %v1171 = vsel %vm991, %v1095, 0.0
      %1172 = vadd.xlane.f32.xlu0 %v1171
      %v1173 = vpop.xlane.xlu0 %1172
      %v1174 = vmul.f32 %v994, 0.015625
      %v1175 = vmul.f32 %v997, 0.015625
      %v1176 = vmul.f32 %v1000, 0.015625
      %v1177 = vmul.f32 %v1003, 0.015625
      %v1178 = vmul.f32 %v1006, 0.015625
      %v1179 = vmul.f32 %v1009, 0.015625
      %v1180 = vmul.f32 %v1012, 0.015625
      %v1181 = vmul.f32 %v1015, 0.015625
      %v1182 = vmul.f32 %v1018, 0.015625
      %v1183 = vmul.f32 %v1021, 0.015625
      %v1184 = vmul.f32 %v1024, 0.015625
      %v1185 = vmul.f32 %v1027, 0.015625
      %v1186 = vmul.f32 %v1030, 0.015625
      %v1187 = vmul.f32 %v1033, 0.015625
      %v1188 = vmul.f32 %v1036, 0.015625
      %v1189 = vmul.f32 %v1039, 0.015625
      %v1190 = vmul.f32 %v1042, 0.015625
      %v1191 = vmul.f32 %v1045, 0.015625
      %v1192 = vmul.f32 %v1048, 0.015625
      %v1193 = vmul.f32 %v1051, 0.015625
      %v1194 = vmul.f32 %v1054, 0.015625
      %v1195 = vmul.f32 %v1057, 0.015625
      %v1196 = vmul.f32 %v1060, 0.015625
      %v1197 = vmul.f32 %v1063, 0.015625
      %v1198 = vmul.f32 %v1066, 0.015625
      %v1199 = vmul.f32 %v1069, 0.015625
      %v1200 = vmul.f32 %v1098, 0.015625
      %v1201 = vmul.f32 %v1101, 0.015625
      %v1202 = vmul.f32 %v1104, 0.015625
      %v1203 = vmul.f32 %v1107, 0.015625
      %v1204 = vmul.f32 %v1110, 0.015625
      %v1205 = vmul.f32 %v1113, 0.015625
      %v1206 = vmul.f32 %v1116, 0.015625
      %v1207 = vmul.f32 %v1119, 0.015625
      %v1208 = vmul.f32 %v1122, 0.015625
      %v1209 = vmul.f32 %v1125, 0.015625
      %v1210 = vmul.f32 %v1128, 0.015625
      %v1211 = vmul.f32 %v1131, 0.015625
      %v1212 = vmul.f32 %v1134, 0.015625
      %v1213 = vmul.f32 %v1137, 0.015625
      %v1214 = vmul.f32 %v1140, 0.015625
      %v1215 = vmul.f32 %v1143, 0.015625
      %v1216 = vmul.f32 %v1146, 0.015625
      %v1217 = vmul.f32 %v1149, 0.015625
      %v1218 = vmul.f32 %v1152, 0.015625
      %v1219 = vmul.f32 %v1155, 0.015625
      %v1220 = vmul.f32 %v1158, 0.015625
      %v1221 = vmul.f32 %v1161, 0.015625
      %v1222 = vmul.f32 %v1164, 0.015625
      %v1223 = vmul.f32 %v1167, 0.015625
      %v1224 = vmul.f32 %v1170, 0.015625
      %v1225 = vmul.f32 %v1173, 0.015625
      %v1226 = vmul.f32 %v1174, %v1174
      %v1227 = vmul.f32 %v1175, %v1175
      %v1228 = vmul.f32 %v1176, %v1176
      %v1229 = vmul.f32 %v1177, %v1177
      %v1230 = vmul.f32 %v1178, %v1178
      %v1231 = vmul.f32 %v1179, %v1179
      %v1232 = vmul.f32 %v1180, %v1180
      %v1233 = vmul.f32 %v1181, %v1181
      %v1234 = vmul.f32 %v1182, %v1182
      %v1235 = vmul.f32 %v1183, %v1183
      %v1236 = vmul.f32 %v1184, %v1184
      %v1237 = vmul.f32 %v1185, %v1185
      %v1238 = vmul.f32 %v1186, %v1186
      %v1239 = vmul.f32 %v1187, %v1187
      %v1240 = vmul.f32 %v1188, %v1188
      %v1241 = vmul.f32 %v1189, %v1189
      %v1242 = vmul.f32 %v1190, %v1190
      %v1243 = vmul.f32 %v1191, %v1191
      %v1244 = vmul.f32 %v1192, %v1192
      %v1245 = vmul.f32 %v1193, %v1193
      %v1246 = vmul.f32 %v1194, %v1194
      %v1247 = vmul.f32 %v1195, %v1195
      %v1248 = vmul.f32 %v1196, %v1196
      %v1249 = vmul.f32 %v1197, %v1197
      %v1250 = vmul.f32 %v1198, %v1198
      %v1251 = vmul.f32 %v1199, %v1199
      %v1252 = vsub.f32 %v1200, %v1226
      %v1253 = vsub.f32 %v1201, %v1227
      %v1254 = vsub.f32 %v1202, %v1228
      %v1255 = vsub.f32 %v1203, %v1229
      %v1256 = vsub.f32 %v1204, %v1230
      %v1257 = vsub.f32 %v1205, %v1231
      %v1258 = vsub.f32 %v1206, %v1232
      %v1259 = vsub.f32 %v1207, %v1233
      %v1260 = vsub.f32 %v1208, %v1234
      %v1261 = vsub.f32 %v1209, %v1235
      %v1262 = vsub.f32 %v1210, %v1236
      %v1263 = vsub.f32 %v1211, %v1237
      %v1264 = vsub.f32 %v1212, %v1238
      %v1265 = vsub.f32 %v1213, %v1239
      %v1266 = vsub.f32 %v1214, %v1240
      %v1267 = vsub.f32 %v1215, %v1241
      %v1268 = vsub.f32 %v1216, %v1242
      %v1269 = vsub.f32 %v1217, %v1243
      %v1270 = vsub.f32 %v1218, %v1244
      %v1271 = vsub.f32 %v1219, %v1245
      %v1272 = vsub.f32 %v1220, %v1246
      %v1273 = vsub.f32 %v1221, %v1247
      %v1274 = vsub.f32 %v1222, %v1248
      %v1275 = vsub.f32 %v1223, %v1249
      %v1276 = vsub.f32 %v1224, %v1250
      %v1277 = vsub.f32 %v1225, %v1251
      %v1278 = vsub.f32 %v863, %v1174
      %v1279 = vsub.f32 %v868, %v1175
      %v1280 = vsub.f32 %v873, %v1176
      %v1281 = vsub.f32 %v878, %v1177
      %v1282 = vsub.f32 %v883, %v1178
      %v1283 = vsub.f32 %v888, %v1179
      %v1284 = vsub.f32 %v893, %v1180
      %v1285 = vsub.f32 %v898, %v1181
      %v1286 = vsub.f32 %v903, %v1182
      %v1287 = vsub.f32 %v908, %v1183
      %v1288 = vsub.f32 %v913, %v1184
      %v1289 = vsub.f32 %v918, %v1185
      %v1290 = vsub.f32 %v923, %v1186
      %v1291 = vsub.f32 %v928, %v1187
      %v1292 = vsub.f32 %v933, %v1188
      %v1293 = vsub.f32 %v938, %v1189
      %v1294 = vsub.f32 %v943, %v1190
      %v1295 = vsub.f32 %v948, %v1191
      %v1296 = vsub.f32 %v953, %v1192
      %v1297 = vsub.f32 %v958, %v1193
      %v1298 = vsub.f32 %v963, %v1194
      %v1299 = vsub.f32 %v968, %v1195
      %v1300 = vsub.f32 %v973, %v1196
      %v1301 = vsub.f32 %v978, %v1197
      %v1302 = vsub.f32 %v983, %v1198
      %v1303 = vsub.f32 %v988, %v1199
      %v1304 = vadd.f32 %v1252, 1e-05
      %v1305 = vadd.f32 %v1253, 1e-05
      %v1306 = vadd.f32 %v1254, 1e-05
      %v1307 = vadd.f32 %v1255, 1e-05
      %v1308 = vadd.f32 %v1256, 1e-05
      %v1309 = vadd.f32 %v1257, 1e-05
      %v1310 = vadd.f32 %v1258, 1e-05
      %v1311 = vadd.f32 %v1259, 1e-05
      %v1312 = vadd.f32 %v1260, 1e-05
      %v1313 = vadd.f32 %v1261, 1e-05
      %v1314 = vadd.f32 %v1262, 1e-05
      %v1315 = vadd.f32 %v1263, 1e-05
      %v1316 = vadd.f32 %v1264, 1e-05
      %v1317 = vadd.f32 %v1265, 1e-05
      %v1318 = vadd.f32 %v1266, 1e-05
      %v1319 = vadd.f32 %v1267, 1e-05
      %v1320 = vadd.f32 %v1268, 1e-05
      %v1321 = vadd.f32 %v1269, 1e-05
      %v1322 = vadd.f32 %v1270, 1e-05
      %v1323 = vadd.f32 %v1271, 1e-05
      %v1324 = vadd.f32 %v1272, 1e-05
      %v1325 = vadd.f32 %v1273, 1e-05
      %v1326 = vadd.f32 %v1274, 1e-05
      %v1327 = vadd.f32 %v1275, 1e-05
      %v1328 = vadd.f32 %v1276, 1e-05
      %v1329 = vadd.f32 %v1277, 1e-05
      %v1330 = vrsqrt.pop %v1304
      %v1331 = vrsqrt.pop %v1305
      %v1332 = vrsqrt.pop %v1306
      %v1333 = vrsqrt.pop %v1307
      %v1334 = vrsqrt.pop %v1308
      %v1335 = vrsqrt.pop %v1309
      %v1336 = vrsqrt.pop %v1310
      %v1337 = vrsqrt.pop %v1311
      %v1338 = vrsqrt.pop %v1312
      %v1339 = vrsqrt.pop %v1313
      %v1340 = vrsqrt.pop %v1314
      %v1341 = vrsqrt.pop %v1315
      %v1342 = vrsqrt.pop %v1316
      %v1343 = vrsqrt.pop %v1317
      %v1344 = vrsqrt.pop %v1318
      %v1345 = vrsqrt.pop %v1319
      %v1346 = vrsqrt.pop %v1320
      %v1347 = vrsqrt.pop %v1321
      %v1348 = vrsqrt.pop %v1322
      %v1349 = vrsqrt.pop %v1323
      %v1350 = vrsqrt.pop %v1324
      %v1351 = vrsqrt.pop %v1325
      %v1352 = vrsqrt.pop %v1326
      %v1353 = vrsqrt.pop %v1327
      %v1354 = vrsqrt.pop %v1328
      %v1355 = vrsqrt.pop %v1329
      %v1356 = vmul.f32 %v1278, %v1330
      %v1357 = vmul.f32 %v1279, %v1331
      %v1358 = vmul.f32 %v1280, %v1332
      %v1359 = vmul.f32 %v1281, %v1333
      %v1360 = vmul.f32 %v1282, %v1334
      %v1361 = vmul.f32 %v1283, %v1335
      %v1362 = vmul.f32 %v1284, %v1336
      %v1363 = vmul.f32 %v1285, %v1337
      %v1364 = vmul.f32 %v1286, %v1338
      %v1365 = vmul.f32 %v1287, %v1339
      %v1366 = vmul.f32 %v1288, %v1340
      %v1367 = vmul.f32 %v1289, %v1341
      %v1368 = vmul.f32 %v1290, %v1342
      %v1369 = vmul.f32 %v1291, %v1343
      %v1370 = vmul.f32 %v1292, %v1344
      %v1371 = vmul.f32 %v1293, %v1345
      %v1372 = vmul.f32 %v1294, %v1346
      %v1373 = vmul.f32 %v1295, %v1347
      %v1374 = vmul.f32 %v1296, %v1348
      %v1375 = vmul.f32 %v1297, %v1349
      %v1376 = vmul.f32 %v1298, %v1350
      %v1377 = vmul.f32 %v1299, %v1351
      %v1378 = vmul.f32 %v1300, %v1352
      %v1379 = vmul.f32 %v1301, %v1353
      %v1380 = vmul.f32 %v1302, %v1354
      %v1381 = vmul.f32 %v1303, %v1355
      %v1382 = vld [vmem:[%s5] sm:$0x1]
      %v1384 = vlaneseq
      %v1385 = vshrl.u32 %v1384, 7
      %v1386 = vsub.s32 0, %v1385
      %v1387 = vrot.slane %v1382, %v1386
      %v1389 = vmul.f32 %v1356, %v1387
      %v1390 = vmul.f32 %v1357, %v1387
      %v1391 = vmul.f32 %v1358, %v1387
      %v1392 = vmul.f32 %v1359, %v1387
      %v1393 = vmul.f32 %v1360, %v1387
      %v1394 = vmul.f32 %v1361, %v1387
      %v1395 = vmul.f32 %v1362, %v1387
      %v1396 = vmul.f32 %v1363, %v1387
      %v1397 = vmul.f32 %v1364, %v1387
      %v1398 = vmul.f32 %v1365, %v1387
      %v1399 = vmul.f32 %v1366, %v1387
      %v1400 = vmul.f32 %v1367, %v1387
      %v1401 = vmul.f32 %v1368, %v1387
      %v1402 = vmul.f32 %v1369, %v1387
      %v1403 = vmul.f32 %v1370, %v1387
      %v1404 = vmul.f32 %v1371, %v1387
      %v1405 = vmul.f32 %v1372, %v1387
      %v1406 = vmul.f32 %v1373, %v1387
      %v1407 = vmul.f32 %v1374, %v1387
      %v1408 = vmul.f32 %v1375, %v1387
      %v1409 = vmul.f32 %v1376, %v1387
      %v1410 = vmul.f32 %v1377, %v1387
      %v1411 = vmul.f32 %v1378, %v1387
      %v1412 = vmul.f32 %v1379, %v1387
      %v1413 = vmul.f32 %v1380, %v1387
      %v1414 = vmul.f32 %v1381, %v1387
      %v1415 = vld [vmem:[%s6] sm:$0x1]
      %v1417 = vlaneseq
      %v1418 = vshrl.u32 %v1417, 7
      %v1419 = vsub.s32 0, %v1418
      %v1420 = vrot.slane %v1415, %v1419
      %v1422 = vadd.f32 %v1389, %v1420
      %v1423 = vadd.f32 %v1390, %v1420
      %v1424 = vadd.f32 %v1391, %v1420
      %v1425 = vadd.f32 %v1392, %v1420
      %v1426 = vadd.f32 %v1393, %v1420
      %v1427 = vadd.f32 %v1394, %v1420
      %v1428 = vadd.f32 %v1395, %v1420
      %v1429 = vadd.f32 %v1396, %v1420
      %v1430 = vadd.f32 %v1397, %v1420
      %v1431 = vadd.f32 %v1398, %v1420
      %v1432 = vadd.f32 %v1399, %v1420
      %v1433 = vadd.f32 %v1400, %v1420
      %v1434 = vadd.f32 %v1401, %v1420
      %v1435 = vadd.f32 %v1402, %v1420
      %v1436 = vadd.f32 %v1403, %v1420
      %v1437 = vadd.f32 %v1404, %v1420
      %v1438 = vadd.f32 %v1405, %v1420
      %v1439 = vadd.f32 %v1406, %v1420
      %v1440 = vadd.f32 %v1407, %v1420
      %v1441 = vadd.f32 %v1408, %v1420
      %v1442 = vadd.f32 %v1409, %v1420
      %v1443 = vadd.f32 %v1410, %v1420
      %v1444 = vadd.f32 %v1411, %v1420
      %v1445 = vadd.f32 %v1412, %v1420
      %v1446 = vadd.f32 %v1413, %v1420
      %v1447 = vadd.f32 %v1414, %v1420
      %v1448 = vtanh.pop %v1422
      %v1449 = vtanh.pop %v1423
      %v1450 = vtanh.pop %v1424
      %v1451 = vtanh.pop %v1425
      %v1452 = vtanh.pop %v1426
      %v1453 = vtanh.pop %v1427
      %v1454 = vtanh.pop %v1428
      %v1455 = vtanh.pop %v1429
      %v1456 = vtanh.pop %v1430
      %v1457 = vtanh.pop %v1431
      %v1458 = vtanh.pop %v1432
      %v1459 = vtanh.pop %v1433
      %v1460 = vtanh.pop %v1434
      %v1461 = vtanh.pop %v1435
      %v1462 = vtanh.pop %v1436
      %v1463 = vtanh.pop %v1437
      %v1464 = vtanh.pop %v1438
      %v1465 = vtanh.pop %v1439
      %v1466 = vtanh.pop %v1440
      %v1467 = vtanh.pop %v1441
      %v1468 = vtanh.pop %v1442
      %v1469 = vtanh.pop %v1443
      %v1470 = vtanh.pop %v1444
      %v1471 = vtanh.pop %v1445
      %v1472 = vtanh.pop %v1446
      %v1473 = vtanh.pop %v1447
      %v1474 = vld [vmem:[%s7] sm:$0xff]
      %v1475 = vld [vmem:[%s7 + $0x8] sm:$0xff]
      %v1476 = vld [vmem:[%s7 + $0x10] sm:$0xff]
      %v1477 = vld [vmem:[%s7 + $0x18] sm:$0xff]
      %v1478 = vld [vmem:[%s7 + $0x20] sm:$0xff]
      %v1479 = vld [vmem:[%s7 + $0x28] sm:$0xff]
      %v1480 = vld [vmem:[%s7 + $0x30] sm:$0xff]
      %v1481 = vld [vmem:[%s7 + $0x38] sm:$0xff]
      %v1482 = vld [vmem:[%s8] sm:$0x1]
      %v1484 = vlaneseq
      %v1485 = vshrl.u32 %v1484, 7
      %v1486 = vsub.s32 0, %v1485
      %v1487 = vrot.slane %v1482, %v1486
      %v1490 = vsel %vm991, %v1448, 0
      %v1493 = vsel %vm991, %v1449, 0
      %v1496 = vsel %vm991, %v1450, 0
      %v1499 = vsel %vm991, %v1451, 0
      %v1502 = vsel %vm991, %v1452, 0
      %v1505 = vsel %vm991, %v1453, 0
      %v1508 = vsel %vm991, %v1454, 0
      %v1511 = vsel %vm991, %v1455, 0
      %v1514 = vsel %vm991, %v1456, 0
      %v1517 = vsel %vm991, %v1457, 0
      %v1520 = vsel %vm991, %v1458, 0
      %v1523 = vsel %vm991, %v1459, 0
      %v1526 = vsel %vm991, %v1460, 0
      %v1529 = vsel %vm991, %v1461, 0
      %v1532 = vsel %vm991, %v1462, 0
      %v1535 = vsel %vm991, %v1463, 0
      %v1538 = vsel %vm991, %v1464, 0
      %v1541 = vsel %vm991, %v1465, 0
      %v1544 = vsel %vm991, %v1466, 0
      %v1547 = vsel %vm991, %v1467, 0
      %v1550 = vsel %vm991, %v1468, 0
      %v1553 = vsel %vm991, %v1469, 0
      %v1556 = vsel %vm991, %v1470, 0
      %v1559 = vsel %vm991, %v1471, 0
      %v1562 = vsel %vm991, %v1472, 0
      %v1565 = vsel %vm991, %v1473, 0
      %1567 = vmatprep.subr.mxu0 0.0
      %1568 = vmatpush1.msra.mxu0 0.0
      %1569 = vmatprep.subr.mxu0 0.0
      %1570 = vmatpush1.msra.mxu0 0.0
      %1571 = vmatprep.subr.mxu0 0.0
      %1572 = vmatpush1.msra.mxu0 0.0
      %1573 = vmatprep.subr.mxu0 0.0
      %1574 = vmatpush1.msra.mxu0 0.0
      %1575 = vmatprep.subr.mxu0 0.0
      %1576 = vmatpush1.msra.mxu0 0.0
      %1577 = vmatprep.subr.mxu0 0.0
      %1578 = vmatpush1.msra.mxu0 0.0
      %1579 = vmatprep.subr.mxu0 0.0
      %1580 = vmatpush1.msra.mxu0 0.0
      %1581 = vmatprep.subr.mxu0 0.0
      %1582 = vmatpush1.msra.mxu0 0.0
      %1583 = vmatprep.subr.mxu0 0.0
      %1584 = vmatpush1.msra.mxu0 %v1481
      %1585 = vmatprep.subr.mxu0 0.0
      %1586 = vmatpush1.msra.mxu0 %v1480
      %1587 = vmatprep.subr.mxu0 0.0
      %1588 = vmatpush1.msra.mxu0 %v1479
      %1589 = vmatprep.subr.mxu0 0.0
      %1590 = vmatpush1.msra.mxu0 %v1478
      %1591 = vmatprep.subr.mxu0 0.0
      %1592 = vmatpush1.msra.mxu0 %v1477
      %1593 = vmatprep.subr.mxu0 0.0
      %1594 = vmatpush1.msra.mxu0 %v1476
      %1595 = vmatprep.subr.mxu0 0.0
      %1596 = vmatpush1.msra.mxu0 %v1475
      %1597 = vmatprep.subr.mxu0 0.0
      %1598 = vmatpush1.msra.mxu0 %v1474
      %1599 = vmatprep.subr.mxu0 0.0
      %1600 = vmatpush2.msra.mxu0 0.0
      %1601 = vmatprep.subr.mxu0 0.0
      %1602 = vmatpush2.msra.mxu0 0.0
      %1603 = vmatprep.subr.mxu0 0.0
      %1604 = vmatpush2.msra.mxu0 0.0
      %1605 = vmatprep.subr.mxu0 0.0
      %1606 = vmatpush2.msra.mxu0 0.0
      %1607 = vmatprep.subr.mxu0 0.0
      %1608 = vmatpush2.msra.mxu0 0.0
      %1609 = vmatprep.subr.mxu0 0.0
      %1610 = vmatpush2.msra.mxu0 0.0
      %1611 = vmatprep.subr.mxu0 0.0
      %1612 = vmatpush2.msra.mxu0 0.0
      %1613 = vmatprep.subr.mxu0 0.0
      %1614 = vmatpush2.msra.mxu0 0.0
      %1615 = vmatprep.subr.mxu0 0.0
      %1616 = vmatpush2.msra.mxu0 0.0
      %1617 = vmatprep.subr.mxu0 0.0
      %1618 = vmatpush2.msra.mxu0 0.0
      %1619 = vmatprep.subr.mxu0 0.0
      %1620 = vmatpush2.msra.mxu0 0.0
      %1621 = vmatprep.subr.mxu0 0.0
      %1622 = vmatpush2.msra.mxu0 0.0
      %1623 = vmatprep.subr.mxu0 0.0
      %1624 = vmatpush2.msra.mxu0 0.0
      %1625 = vmatprep.subr.mxu0 0.0
      %1626 = vmatpush2.msra.mxu0 0.0
      %1627 = vmatprep.subr.mxu0 0.0
      %1628 = vmatpush2.msra.mxu0 0.0
      %1629 = vmatprep.subr.mxu0 0.0
      %1630 = vmatpush2.msra.mxu0 0.0
      %1631 = vmatprep.mubr.f32.mxu0 0.0
      %1632 = vmatmul.mubr.f32.gmra.mxu0 %v1490
      %v1633 = vpop.f32.mrf.mxu0
      %v1634 = vadd.f32 %v1487, %v1633
      %v1635 = vpop.f32.mrf.mxu0
      %1636 = vmatprep.mubr.f32.mxu0 0.0
      %1637 = vmatmul.mubr.f32.gmra.mxu0 %v1493
      %v1638 = vpop.f32.mrf.mxu0
      %v1639 = vadd.f32 %v1487, %v1638
      %v1640 = vpop.f32.mrf.mxu0
      %1641 = vmatprep.mubr.f32.mxu0 0.0
      %1642 = vmatmul.mubr.f32.gmra.mxu0 %v1496
      %v1643 = vpop.f32.mrf.mxu0
      %v1644 = vadd.f32 %v1487, %v1643
      %v1645 = vpop.f32.mrf.mxu0
      %1646 = vmatprep.mubr.f32.mxu0 0.0
      %1647 = vmatmul.mubr.f32.gmra.mxu0 %v1499
      %v1648 = vpop.f32.mrf.mxu0
      %v1649 = vadd.f32 %v1487, %v1648
      %v1650 = vpop.f32.mrf.mxu0
      %1651 = vmatprep.mubr.f32.mxu0 0.0
      %1652 = vmatmul.mubr.f32.gmra.mxu0 %v1502
      %v1653 = vpop.f32.mrf.mxu0
      %v1654 = vadd.f32 %v1487, %v1653
      %v1655 = vpop.f32.mrf.mxu0
      %1656 = vmatprep.mubr.f32.mxu0 0.0
      %1657 = vmatmul.mubr.f32.gmra.mxu0 %v1505
      %v1658 = vpop.f32.mrf.mxu0
      %v1659 = vadd.f32 %v1487, %v1658
      %v1660 = vpop.f32.mrf.mxu0
      %1661 = vmatprep.mubr.f32.mxu0 0.0
      %1662 = vmatmul.mubr.f32.gmra.mxu0 %v1508
      %v1663 = vpop.f32.mrf.mxu0
      %v1664 = vadd.f32 %v1487, %v1663
      %v1665 = vpop.f32.mrf.mxu0
      %1666 = vmatprep.mubr.f32.mxu0 0.0
      %1667 = vmatmul.mubr.f32.gmra.mxu0 %v1511
      %v1668 = vpop.f32.mrf.mxu0
      %v1669 = vadd.f32 %v1487, %v1668
      %v1670 = vpop.f32.mrf.mxu0
      %1671 = vmatprep.mubr.f32.mxu0 0.0
      %1672 = vmatmul.mubr.f32.gmra.mxu0 %v1514
      %v1673 = vpop.f32.mrf.mxu0
      %v1674 = vadd.f32 %v1487, %v1673
      %v1675 = vpop.f32.mrf.mxu0
      %1676 = vmatprep.mubr.f32.mxu0 0.0
      %1677 = vmatmul.mubr.f32.gmra.mxu0 %v1517
      %v1678 = vpop.f32.mrf.mxu0
      %v1679 = vadd.f32 %v1487, %v1678
      %v1680 = vpop.f32.mrf.mxu0
      %1681 = vmatprep.mubr.f32.mxu0 0.0
      %1682 = vmatmul.mubr.f32.gmra.mxu0 %v1520
      %v1683 = vpop.f32.mrf.mxu0
      %v1684 = vadd.f32 %v1487, %v1683
      %v1685 = vpop.f32.mrf.mxu0
      %1686 = vmatprep.mubr.f32.mxu0 0.0
      %1687 = vmatmul.mubr.f32.gmra.mxu0 %v1523
      %v1688 = vpop.f32.mrf.mxu0
      %v1689 = vadd.f32 %v1487, %v1688
      %v1690 = vpop.f32.mrf.mxu0
      %1691 = vmatprep.mubr.f32.mxu0 0.0
      %1692 = vmatmul.mubr.f32.gmra.mxu0 %v1526
      %v1693 = vpop.f32.mrf.mxu0
      %v1694 = vadd.f32 %v1487, %v1693
      %v1695 = vpop.f32.mrf.mxu0
      %1696 = vmatprep.mubr.f32.mxu0 0.0
      %1697 = vmatmul.mubr.f32.gmra.mxu0 %v1529
      %v1698 = vpop.f32.mrf.mxu0
      %v1699 = vadd.f32 %v1487, %v1698
      %v1700 = vpop.f32.mrf.mxu0
      %1701 = vmatprep.mubr.f32.mxu0 0.0
      %1702 = vmatmul.mubr.f32.gmra.mxu0 %v1532
      %v1703 = vpop.f32.mrf.mxu0
      %v1704 = vadd.f32 %v1487, %v1703
      %v1705 = vpop.f32.mrf.mxu0
      %1706 = vmatprep.mubr.f32.mxu0 0.0
      %1707 = vmatmul.mubr.f32.gmra.mxu0 %v1535
      %v1708 = vpop.f32.mrf.mxu0
      %v1709 = vadd.f32 %v1487, %v1708
      %v1710 = vpop.f32.mrf.mxu0
      %1711 = vmatprep.mubr.f32.mxu0 0.0
      %1712 = vmatmul.mubr.f32.gmra.mxu0 %v1538
      %v1713 = vpop.f32.mrf.mxu0
      %v1714 = vadd.f32 %v1487, %v1713
      %v1715 = vpop.f32.mrf.mxu0
      %1716 = vmatprep.mubr.f32.mxu0 0.0
      %1717 = vmatmul.mubr.f32.gmra.mxu0 %v1541
      %v1718 = vpop.f32.mrf.mxu0
      %v1719 = vadd.f32 %v1487, %v1718
      %v1720 = vpop.f32.mrf.mxu0
      %1721 = vmatprep.mubr.f32.mxu0 0.0
      %1722 = vmatmul.mubr.f32.gmra.mxu0 %v1544
      %v1723 = vpop.f32.mrf.mxu0
      %v1724 = vadd.f32 %v1487, %v1723
      %v1725 = vpop.f32.mrf.mxu0
      %1726 = vmatprep.mubr.f32.mxu0 0.0
      %1727 = vmatmul.mubr.f32.gmra.mxu0 %v1547
      %v1728 = vpop.f32.mrf.mxu0
      %v1729 = vadd.f32 %v1487, %v1728
      %v1730 = vpop.f32.mrf.mxu0
      %1731 = vmatprep.mubr.f32.mxu0 0.0
      %1732 = vmatmul.mubr.f32.gmra.mxu0 %v1550
      %v1733 = vpop.f32.mrf.mxu0
      %v1734 = vadd.f32 %v1487, %v1733
      %v1735 = vpop.f32.mrf.mxu0
      %1736 = vmatprep.mubr.f32.mxu0 0.0
      %1737 = vmatmul.mubr.f32.gmra.mxu0 %v1553
      %v1738 = vpop.f32.mrf.mxu0
      %v1739 = vadd.f32 %v1487, %v1738
      %v1740 = vpop.f32.mrf.mxu0
      %1741 = vmatprep.mubr.f32.mxu0 0.0
      %1742 = vmatmul.mubr.f32.gmra.mxu0 %v1556
      %v1743 = vpop.f32.mrf.mxu0
      %v1744 = vadd.f32 %v1487, %v1743
      %v1745 = vpop.f32.mrf.mxu0
      %1746 = vmatprep.mubr.f32.mxu0 0.0
      %1747 = vmatmul.mubr.f32.gmra.mxu0 %v1559
      %v1748 = vpop.f32.mrf.mxu0
      %v1749 = vadd.f32 %v1487, %v1748
      %v1750 = vpop.f32.mrf.mxu0
      %1751 = vmatprep.mubr.f32.mxu0 0.0
      %1752 = vmatmul.mubr.f32.gmra.mxu0 %v1562
      %v1753 = vpop.f32.mrf.mxu0
      %v1754 = vadd.f32 %v1487, %v1753
      %v1755 = vpop.f32.mrf.mxu0
      %1756 = vmatprep.mubr.f32.mxu0 0.0
      %1757 = vmatmul.mubr.f32.gmra.mxu0 %v1565
      %v1758 = vpop.f32.mrf.mxu0
      %v1759 = vadd.f32 %v1487, %v1758
      %v1760 = vpop.f32.mrf.mxu0
      %1761 = vdwg.mxu0
      %v1762 = vmax.f32 %v1634, 0.0
      %v1763 = vmax.f32 %v1639, 0.0
      %v1764 = vmax.f32 %v1644, 0.0
      %v1765 = vmax.f32 %v1649, 0.0
      %v1766 = vmax.f32 %v1654, 0.0
      %v1767 = vmax.f32 %v1659, 0.0
      %v1768 = vmax.f32 %v1664, 0.0
      %v1769 = vmax.f32 %v1669, 0.0
      %v1770 = vmax.f32 %v1674, 0.0
      %v1771 = vmax.f32 %v1679, 0.0
      %v1772 = vmax.f32 %v1684, 0.0
      %v1773 = vmax.f32 %v1689, 0.0
      %v1774 = vmax.f32 %v1694, 0.0
      %v1775 = vmax.f32 %v1699, 0.0
      %v1776 = vmax.f32 %v1704, 0.0
      %v1777 = vmax.f32 %v1709, 0.0
      %v1778 = vmax.f32 %v1714, 0.0
      %v1779 = vmax.f32 %v1719, 0.0
      %v1780 = vmax.f32 %v1724, 0.0
      %v1781 = vmax.f32 %v1729, 0.0
      %v1782 = vmax.f32 %v1734, 0.0
      %v1783 = vmax.f32 %v1739, 0.0
      %v1784 = vmax.f32 %v1744, 0.0
      %v1785 = vmax.f32 %v1749, 0.0
      %v1786 = vmax.f32 %v1754, 0.0
      %v1787 = vmax.f32 %v1759, 0.0
      %v1788 = vld [vmem:[%s9] sm:$0xff]
      %v1789 = vld [vmem:[%s9 + $0x8] sm:$0xff]
      %v1790 = vld [vmem:[%s9 + $0x10] sm:$0xff]
      %v1791 = vld [vmem:[%s9 + $0x18] sm:$0xff]
      %v1792 = vld [vmem:[%s9 + $0x20] sm:$0xff]
      %v1793 = vld [vmem:[%s9 + $0x28] sm:$0xff]
      %v1794 = vld [vmem:[%s9 + $0x30] sm:$0xff]
      %v1795 = vld [vmem:[%s9 + $0x38] sm:$0xff]
      %v1796 = vld [vmem:[%s10] sm:$0x1]
      %v1798 = vlaneseq
      %v1799 = vshrl.u32 %v1798, 7
      %v1800 = vsub.s32 0, %v1799
      %v1801 = vrot.slane %v1796, %v1800
      %v1804 = vsel %vm991, %v1762, 0
      %v1807 = vsel %vm991, %v1763, 0
      %v1810 = vsel %vm991, %v1764, 0
      %v1813 = vsel %vm991, %v1765, 0
      %v1816 = vsel %vm991, %v1766, 0
      %v1819 = vsel %vm991, %v1767, 0
      %v1822 = vsel %vm991, %v1768, 0
      %v1825 = vsel %vm991, %v1769, 0
      %v1828 = vsel %vm991, %v1770, 0
      %v1831 = vsel %vm991, %v1771, 0
      %v1834 = vsel %vm991, %v1772, 0
      %v1837 = vsel %vm991, %v1773, 0
      %v1840 = vsel %vm991, %v1774, 0
      %v1843 = vsel %vm991, %v1775, 0
      %v1846 = vsel %vm991, %v1776, 0
      %v1849 = vsel %vm991, %v1777, 0
      %v1852 = vsel %vm991, %v1778, 0
      %v1855 = vsel %vm991, %v1779, 0
      %v1858 = vsel %vm991, %v1780, 0
      %v1861 = vsel %vm991, %v1781, 0
      %v1864 = vsel %vm991, %v1782, 0
      %v1867 = vsel %vm991, %v1783, 0
      %v1870 = vsel %vm991, %v1784, 0
      %v1873 = vsel %vm991, %v1785, 0
      %v1876 = vsel %vm991, %v1786, 0
      %v1879 = vsel %vm991, %v1787, 0
      %1881 = vmatprep.subr.mxu0 0.0
      %1882 = vmatpush1.msra.mxu0 0.0
      %1883 = vmatprep.subr.mxu0 0.0
      %1884 = vmatpush1.msra.mxu0 0.0
      %1885 = vmatprep.subr.mxu0 0.0
      %1886 = vmatpush1.msra.mxu0 0.0
      %1887 = vmatprep.subr.mxu0 0.0
      %1888 = vmatpush1.msra.mxu0 0.0
      %1889 = vmatprep.subr.mxu0 0.0
      %1890 = vmatpush1.msra.mxu0 0.0
      %1891 = vmatprep.subr.mxu0 0.0
      %1892 = vmatpush1.msra.mxu0 0.0
      %1893 = vmatprep.subr.mxu0 0.0
      %1894 = vmatpush1.msra.mxu0 0.0
      %1895 = vmatprep.subr.mxu0 0.0
      %1896 = vmatpush1.msra.mxu0 0.0
      %1897 = vmatprep.subr.mxu0 0.0
      %1898 = vmatpush1.msra.mxu0 %v1795
      %1899 = vmatprep.subr.mxu0 0.0
      %1900 = vmatpush1.msra.mxu0 %v1794
      %1901 = vmatprep.subr.mxu0 0.0
      %1902 = vmatpush1.msra.mxu0 %v1793
      %1903 = vmatprep.subr.mxu0 0.0
      %1904 = vmatpush1.msra.mxu0 %v1792
      %1905 = vmatprep.subr.mxu0 0.0
      %1906 = vmatpush1.msra.mxu0 %v1791
      %1907 = vmatprep.subr.mxu0 0.0
      %1908 = vmatpush1.msra.mxu0 %v1790
      %1909 = vmatprep.subr.mxu0 0.0
      %1910 = vmatpush1.msra.mxu0 %v1789
      %1911 = vmatprep.subr.mxu0 0.0
      %1912 = vmatpush1.msra.mxu0 %v1788
      %1913 = vmatprep.subr.mxu0 0.0
      %1914 = vmatpush2.msra.mxu0 0.0
      %1915 = vmatprep.subr.mxu0 0.0
      %1916 = vmatpush2.msra.mxu0 0.0
      %1917 = vmatprep.subr.mxu0 0.0
      %1918 = vmatpush2.msra.mxu0 0.0
      %1919 = vmatprep.subr.mxu0 0.0
      %1920 = vmatpush2.msra.mxu0 0.0
      %1921 = vmatprep.subr.mxu0 0.0
      %1922 = vmatpush2.msra.mxu0 0.0
      %1923 = vmatprep.subr.mxu0 0.0
      %1924 = vmatpush2.msra.mxu0 0.0
      %1925 = vmatprep.subr.mxu0 0.0
      %1926 = vmatpush2.msra.mxu0 0.0
      %1927 = vmatprep.subr.mxu0 0.0
      %1928 = vmatpush2.msra.mxu0 0.0
      %1929 = vmatprep.subr.mxu0 0.0
      %1930 = vmatpush2.msra.mxu0 0.0
      %1931 = vmatprep.subr.mxu0 0.0
      %1932 = vmatpush2.msra.mxu0 0.0
      %1933 = vmatprep.subr.mxu0 0.0
      %1934 = vmatpush2.msra.mxu0 0.0
      %1935 = vmatprep.subr.mxu0 0.0
      %1936 = vmatpush2.msra.mxu0 0.0
      %1937 = vmatprep.subr.mxu0 0.0
      %1938 = vmatpush2.msra.mxu0 0.0
      %1939 = vmatprep.subr.mxu0 0.0
      %1940 = vmatpush2.msra.mxu0 0.0
      %1941 = vmatprep.subr.mxu0 0.0
      %1942 = vmatpush2.msra.mxu0 0.0
      %1943 = vmatprep.subr.mxu0 0.0
      %1944 = vmatpush2.msra.mxu0 0.0
      %1945 = vmatprep.mubr.f32.mxu0 0.0
      %1946 = vmatmul.mubr.f32.gmra.mxu0 %v1804
      %v1947 = vpop.f32.mrf.mxu0
      %v1948 = vadd.f32 %v1801, %v1947
      %v1949 = vpop.f32.mrf.mxu0
      %1950 = vmatprep.mubr.f32.mxu0 0.0
      %1951 = vmatmul.mubr.f32.gmra.mxu0 %v1807
      %v1952 = vpop.f32.mrf.mxu0
      %v1953 = vadd.f32 %v1801, %v1952
      %v1954 = vpop.f32.mrf.mxu0
      %1955 = vmatprep.mubr.f32.mxu0 0.0
      %1956 = vmatmul.mubr.f32.gmra.mxu0 %v1810
      %v1957 = vpop.f32.mrf.mxu0
      %v1958 = vadd.f32 %v1801, %v1957
      %v1959 = vpop.f32.mrf.mxu0
      %1960 = vmatprep.mubr.f32.mxu0 0.0
      %1961 = vmatmul.mubr.f32.gmra.mxu0 %v1813
      %v1962 = vpop.f32.mrf.mxu0
      %v1963 = vadd.f32 %v1801, %v1962
      %v1964 = vpop.f32.mrf.mxu0
      %1965 = vmatprep.mubr.f32.mxu0 0.0
      %1966 = vmatmul.mubr.f32.gmra.mxu0 %v1816
      %v1967 = vpop.f32.mrf.mxu0
      %v1968 = vadd.f32 %v1801, %v1967
      %v1969 = vpop.f32.mrf.mxu0
      %1970 = vmatprep.mubr.f32.mxu0 0.0
      %1971 = vmatmul.mubr.f32.gmra.mxu0 %v1819
      %v1972 = vpop.f32.mrf.mxu0
      %v1973 = vadd.f32 %v1801, %v1972
      %v1974 = vpop.f32.mrf.mxu0
      %1975 = vmatprep.mubr.f32.mxu0 0.0
      %1976 = vmatmul.mubr.f32.gmra.mxu0 %v1822
      %v1977 = vpop.f32.mrf.mxu0
      %v1978 = vadd.f32 %v1801, %v1977
      %v1979 = vpop.f32.mrf.mxu0
      %1980 = vmatprep.mubr.f32.mxu0 0.0
      %1981 = vmatmul.mubr.f32.gmra.mxu0 %v1825
      %v1982 = vpop.f32.mrf.mxu0
      %v1983 = vadd.f32 %v1801, %v1982
      %v1984 = vpop.f32.mrf.mxu0
      %1985 = vmatprep.mubr.f32.mxu0 0.0
      %1986 = vmatmul.mubr.f32.gmra.mxu0 %v1828
      %v1987 = vpop.f32.mrf.mxu0
      %v1988 = vadd.f32 %v1801, %v1987
      %v1989 = vpop.f32.mrf.mxu0
      %1990 = vmatprep.mubr.f32.mxu0 0.0
      %1991 = vmatmul.mubr.f32.gmra.mxu0 %v1831
      %v1992 = vpop.f32.mrf.mxu0
      %v1993 = vadd.f32 %v1801, %v1992
      %v1994 = vpop.f32.mrf.mxu0
      %1995 = vmatprep.mubr.f32.mxu0 0.0
      %1996 = vmatmul.mubr.f32.gmra.mxu0 %v1834
      %v1997 = vpop.f32.mrf.mxu0
      %v1998 = vadd.f32 %v1801, %v1997
      %v1999 = vpop.f32.mrf.mxu0
      %2000 = vmatprep.mubr.f32.mxu0 0.0
      %2001 = vmatmul.mubr.f32.gmra.mxu0 %v1837
      %v2002 = vpop.f32.mrf.mxu0
      %v2003 = vadd.f32 %v1801, %v2002
      %v2004 = vpop.f32.mrf.mxu0
      %2005 = vmatprep.mubr.f32.mxu0 0.0
      %2006 = vmatmul.mubr.f32.gmra.mxu0 %v1840
      %v2007 = vpop.f32.mrf.mxu0
      %v2008 = vadd.f32 %v1801, %v2007
      %v2009 = vpop.f32.mrf.mxu0
      %2010 = vmatprep.mubr.f32.mxu0 0.0
      %2011 = vmatmul.mubr.f32.gmra.mxu0 %v1843
      %v2012 = vpop.f32.mrf.mxu0
      %v2013 = vadd.f32 %v1801, %v2012
      %v2014 = vpop.f32.mrf.mxu0
      %2015 = vmatprep.mubr.f32.mxu0 0.0
      %2016 = vmatmul.mubr.f32.gmra.mxu0 %v1846
      %v2017 = vpop.f32.mrf.mxu0
      %v2018 = vadd.f32 %v1801, %v2017
      %v2019 = vpop.f32.mrf.mxu0
      %2020 = vmatprep.mubr.f32.mxu0 0.0
      %2021 = vmatmul.mubr.f32.gmra.mxu0 %v1849
      %v2022 = vpop.f32.mrf.mxu0
      %v2023 = vadd.f32 %v1801, %v2022
      %v2024 = vpop.f32.mrf.mxu0
      %2025 = vmatprep.mubr.f32.mxu0 0.0
      %2026 = vmatmul.mubr.f32.gmra.mxu0 %v1852
      %v2027 = vpop.f32.mrf.mxu0
      %v2028 = vadd.f32 %v1801, %v2027
      %v2029 = vpop.f32.mrf.mxu0
      %2030 = vmatprep.mubr.f32.mxu0 0.0
      %2031 = vmatmul.mubr.f32.gmra.mxu0 %v1855
      %v2032 = vpop.f32.mrf.mxu0
      %v2033 = vadd.f32 %v1801, %v2032
      %v2034 = vpop.f32.mrf.mxu0
      %2035 = vmatprep.mubr.f32.mxu0 0.0
      %2036 = vmatmul.mubr.f32.gmra.mxu0 %v1858
      %v2037 = vpop.f32.mrf.mxu0
      %v2038 = vadd.f32 %v1801, %v2037
      %v2039 = vpop.f32.mrf.mxu0
      %2040 = vmatprep.mubr.f32.mxu0 0.0
      %2041 = vmatmul.mubr.f32.gmra.mxu0 %v1861
      %v2042 = vpop.f32.mrf.mxu0
      %v2043 = vadd.f32 %v1801, %v2042
      %v2044 = vpop.f32.mrf.mxu0
      %2045 = vmatprep.mubr.f32.mxu0 0.0
      %2046 = vmatmul.mubr.f32.gmra.mxu0 %v1864
      %v2047 = vpop.f32.mrf.mxu0
      %v2048 = vadd.f32 %v1801, %v2047
      %v2049 = vpop.f32.mrf.mxu0
      %2050 = vmatprep.mubr.f32.mxu0 0.0
      %2051 = vmatmul.mubr.f32.gmra.mxu0 %v1867
      %v2052 = vpop.f32.mrf.mxu0
      %v2053 = vadd.f32 %v1801, %v2052
      %v2054 = vpop.f32.mrf.mxu0
      %2055 = vmatprep.mubr.f32.mxu0 0.0
      %2056 = vmatmul.mubr.f32.gmra.mxu0 %v1870
      %v2057 = vpop.f32.mrf.mxu0
      %v2058 = vadd.f32 %v1801, %v2057
      %v2059 = vpop.f32.mrf.mxu0
      %2060 = vmatprep.mubr.f32.mxu0 0.0
      %2061 = vmatmul.mubr.f32.gmra.mxu0 %v1873
      %v2062 = vpop.f32.mrf.mxu0
      %v2063 = vadd.f32 %v1801, %v2062
      %v2064 = vpop.f32.mrf.mxu0
      %2065 = vmatprep.mubr.f32.mxu0 0.0
      %2066 = vmatmul.mubr.f32.gmra.mxu0 %v1876
      %v2067 = vpop.f32.mrf.mxu0
      %v2068 = vadd.f32 %v1801, %v2067
      %v2069 = vpop.f32.mrf.mxu0
      %2070 = vmatprep.mubr.f32.mxu0 0.0
      %2071 = vmatmul.mubr.f32.gmra.mxu0 %v1879
      %v2072 = vpop.f32.mrf.mxu0
      %v2073 = vadd.f32 %v1801, %v2072
      %v2074 = vpop.f32.mrf.mxu0
      %2075 = vdwg.mxu0
      %v2076 = vmul.f32 %v1948, %v1948
      %v2077 = vmul.f32 %v1953, %v1953
      %v2078 = vmul.f32 %v1958, %v1958
      %v2079 = vmul.f32 %v1963, %v1963
      %v2080 = vmul.f32 %v1968, %v1968
      %v2081 = vmul.f32 %v1973, %v1973
      %v2082 = vmul.f32 %v1978, %v1978
      %v2083 = vmul.f32 %v1983, %v1983
      %v2084 = vmul.f32 %v1988, %v1988
      %v2085 = vmul.f32 %v1993, %v1993
      %v2086 = vmul.f32 %v1998, %v1998
      %v2087 = vmul.f32 %v2003, %v2003
      %v2088 = vmul.f32 %v2008, %v2008
      %v2089 = vmul.f32 %v2013, %v2013
      %v2090 = vmul.f32 %v2018, %v2018
      %v2091 = vmul.f32 %v2023, %v2023
      %v2092 = vmul.f32 %v2028, %v2028
      %v2093 = vmul.f32 %v2033, %v2033
      %v2094 = vmul.f32 %v2038, %v2038
      %v2095 = vmul.f32 %v2043, %v2043
      %v2096 = vmul.f32 %v2048, %v2048
      %v2097 = vmul.f32 %v2053, %v2053
      %v2098 = vmul.f32 %v2058, %v2058
      %v2099 = vmul.f32 %v2063, %v2063
      %v2100 = vmul.f32 %v2068, %v2068
      %v2101 = vmul.f32 %v2073, %v2073
      %vm2102 = vcmask 130048
      %v2103 = vsel %vm2102, %v2076, 0.0
      %2104 = vadd.xlane.f32.xlu0 %v2103
      %v2105 = vpop.xlane.xlu0 %2104
      %v2106 = vsel %vm2102, %v2077, 0.0
      %2107 = vadd.xlane.f32.xlu0 %v2106
      %v2108 = vpop.xlane.xlu0 %2107
      %v2109 = vsel %vm2102, %v2078, 0.0
      %2110 = vadd.xlane.f32.xlu0 %v2109
      %v2111 = vpop.xlane.xlu0 %2110
      %v2112 = vsel %vm2102, %v2079, 0.0
      %2113 = vadd.xlane.f32.xlu0 %v2112
      %v2114 = vpop.xlane.xlu0 %2113
      %v2115 = vsel %vm2102, %v2080, 0.0
      %2116 = vadd.xlane.f32.xlu0 %v2115
      %v2117 = vpop.xlane.xlu0 %2116
      %v2118 = vsel %vm2102, %v2081, 0.0
      %2119 = vadd.xlane.f32.xlu0 %v2118
      %v2120 = vpop.xlane.xlu0 %2119
      %v2121 = vsel %vm2102, %v2082, 0.0
      %2122 = vadd.xlane.f32.xlu0 %v2121
      %v2123 = vpop.xlane.xlu0 %2122
      %v2124 = vsel %vm2102, %v2083, 0.0
      %2125 = vadd.xlane.f32.xlu0 %v2124
      %v2126 = vpop.xlane.xlu0 %2125
      %v2127 = vsel %vm2102, %v2084, 0.0
      %2128 = vadd.xlane.f32.xlu0 %v2127
      %v2129 = vpop.xlane.xlu0 %2128
      %v2130 = vsel %vm2102, %v2085, 0.0
      %2131 = vadd.xlane.f32.xlu0 %v2130
      %v2132 = vpop.xlane.xlu0 %2131
      %v2133 = vsel %vm2102, %v2086, 0.0
      %2134 = vadd.xlane.f32.xlu0 %v2133
      %v2135 = vpop.xlane.xlu0 %2134
      %v2136 = vsel %vm2102, %v2087, 0.0
      %2137 = vadd.xlane.f32.xlu0 %v2136
      %v2138 = vpop.xlane.xlu0 %2137
      %v2139 = vsel %vm2102, %v2088, 0.0
      %2140 = vadd.xlane.f32.xlu0 %v2139
      %v2141 = vpop.xlane.xlu0 %2140
      %v2142 = vsel %vm2102, %v2089, 0.0
      %2143 = vadd.xlane.f32.xlu0 %v2142
      %v2144 = vpop.xlane.xlu0 %2143
      %v2145 = vsel %vm2102, %v2090, 0.0
      %2146 = vadd.xlane.f32.xlu0 %v2145
      %v2147 = vpop.xlane.xlu0 %2146
      %v2148 = vsel %vm2102, %v2091, 0.0
      %2149 = vadd.xlane.f32.xlu0 %v2148
      %v2150 = vpop.xlane.xlu0 %2149
      %v2151 = vsel %vm2102, %v2092, 0.0
      %2152 = vadd.xlane.f32.xlu0 %v2151
      %v2153 = vpop.xlane.xlu0 %2152
      %v2154 = vsel %vm2102, %v2093, 0.0
      %2155 = vadd.xlane.f32.xlu0 %v2154
      %v2156 = vpop.xlane.xlu0 %2155
      %v2157 = vsel %vm2102, %v2094, 0.0
      %2158 = vadd.xlane.f32.xlu0 %v2157
      %v2159 = vpop.xlane.xlu0 %2158
      %v2160 = vsel %vm2102, %v2095, 0.0
      %2161 = vadd.xlane.f32.xlu0 %v2160
      %v2162 = vpop.xlane.xlu0 %2161
      %v2163 = vsel %vm2102, %v2096, 0.0
      %2164 = vadd.xlane.f32.xlu0 %v2163
      %v2165 = vpop.xlane.xlu0 %2164
      %v2166 = vsel %vm2102, %v2097, 0.0
      %2167 = vadd.xlane.f32.xlu0 %v2166
      %v2168 = vpop.xlane.xlu0 %2167
      %v2169 = vsel %vm2102, %v2098, 0.0
      %2170 = vadd.xlane.f32.xlu0 %v2169
      %v2171 = vpop.xlane.xlu0 %2170
      %v2172 = vsel %vm2102, %v2099, 0.0
      %2173 = vadd.xlane.f32.xlu0 %v2172
      %v2174 = vpop.xlane.xlu0 %2173
      %v2175 = vsel %vm2102, %v2100, 0.0
      %2176 = vadd.xlane.f32.xlu0 %v2175
      %v2177 = vpop.xlane.xlu0 %2176
      %v2178 = vsel %vm2102, %v2101, 0.0
      %2179 = vadd.xlane.f32.xlu0 %v2178
      %v2180 = vpop.xlane.xlu0 %2179
      %v2181 = vmax.f32 %v2105, 1e-24
      %v2182 = vmax.f32 %v2108, 1e-24
      %v2183 = vmax.f32 %v2111, 1e-24
      %v2184 = vmax.f32 %v2114, 1e-24
      %v2185 = vmax.f32 %v2117, 1e-24
      %v2186 = vmax.f32 %v2120, 1e-24
      %v2187 = vmax.f32 %v2123, 1e-24
      %v2188 = vmax.f32 %v2126, 1e-24
      %v2189 = vmax.f32 %v2129, 1e-24
      %v2190 = vmax.f32 %v2132, 1e-24
      %v2191 = vmax.f32 %v2135, 1e-24
      %v2192 = vmax.f32 %v2138, 1e-24
      %v2193 = vmax.f32 %v2141, 1e-24
      %v2194 = vmax.f32 %v2144, 1e-24
      %v2195 = vmax.f32 %v2147, 1e-24
      %v2196 = vmax.f32 %v2150, 1e-24
      %v2197 = vmax.f32 %v2153, 1e-24
      %v2198 = vmax.f32 %v2156, 1e-24
      %v2199 = vmax.f32 %v2159, 1e-24
      %v2200 = vmax.f32 %v2162, 1e-24
      %v2201 = vmax.f32 %v2165, 1e-24
      %v2202 = vmax.f32 %v2168, 1e-24
      %v2203 = vmax.f32 %v2171, 1e-24
      %v2204 = vmax.f32 %v2174, 1e-24
      %v2205 = vmax.f32 %v2177, 1e-24
      %v2206 = vmax.f32 %v2180, 1e-24
      %v2207 = vrsqrt.pop %v2181
      %v2208 = vrsqrt.pop %v2182
      %v2209 = vrsqrt.pop %v2183
      %v2210 = vrsqrt.pop %v2184
      %v2211 = vrsqrt.pop %v2185
      %v2212 = vrsqrt.pop %v2186
      %v2213 = vrsqrt.pop %v2187
      %v2214 = vrsqrt.pop %v2188
      %v2215 = vrsqrt.pop %v2189
      %v2216 = vrsqrt.pop %v2190
      %v2217 = vrsqrt.pop %v2191
      %v2218 = vrsqrt.pop %v2192
      %v2219 = vrsqrt.pop %v2193
      %v2220 = vrsqrt.pop %v2194
      %v2221 = vrsqrt.pop %v2195
      %v2222 = vrsqrt.pop %v2196
      %v2223 = vrsqrt.pop %v2197
      %v2224 = vrsqrt.pop %v2198
      %v2225 = vrsqrt.pop %v2199
      %v2226 = vrsqrt.pop %v2200
      %v2227 = vrsqrt.pop %v2201
      %v2228 = vrsqrt.pop %v2202
      %v2229 = vrsqrt.pop %v2203
      %v2230 = vrsqrt.pop %v2204
      %v2231 = vrsqrt.pop %v2205
      %v2232 = vrsqrt.pop %v2206
      %v2233 = vmul.f32 %v1948, %v2207
      %v2234 = vmul.f32 %v1953, %v2208
      %v2235 = vmul.f32 %v1958, %v2209
      %v2236 = vmul.f32 %v1963, %v2210
      %v2237 = vmul.f32 %v1968, %v2211
      %v2238 = vmul.f32 %v1973, %v2212
      %v2239 = vmul.f32 %v1978, %v2213
      %v2240 = vmul.f32 %v1983, %v2214
      %v2241 = vmul.f32 %v1988, %v2215
      %v2242 = vmul.f32 %v1993, %v2216
      %v2243 = vmul.f32 %v1998, %v2217
      %v2244 = vmul.f32 %v2003, %v2218
      %v2245 = vmul.f32 %v2008, %v2219
      %v2246 = vmul.f32 %v2013, %v2220
      %v2247 = vmul.f32 %v2018, %v2221
      %v2248 = vmul.f32 %v2023, %v2222
      %v2249 = vmul.f32 %v2028, %v2223
      %v2250 = vmul.f32 %v2033, %v2224
      %v2251 = vmul.f32 %v2038, %v2225
      %v2252 = vmul.f32 %v2043, %v2226
      %v2253 = vmul.f32 %v2048, %v2227
      %v2254 = vmul.f32 %v2053, %v2228
      %v2255 = vmul.f32 %v2058, %v2229
      %v2256 = vmul.f32 %v2063, %v2230
      %v2257 = vmul.f32 %v2068, %v2231
      %v2258 = vmul.f32 %v2073, %v2232
      %v2259 = vld [vmem:[%s11] sm:$0xff]
      %v2260 = vld [vmem:[%s11 + $0x8] sm:$0xff]
      %v2261 = vld [vmem:[%s12] sm:$0xff]
      %v2262 = vld [vmem:[%s12 + $0x8] sm:$0xff]
      %v2264 = vsel %vm2102, %v2246, 0
      %v2267 = vsel %vm2102, %v2247, 0
      %v2270 = vsel %vm2102, %v2248, 0
      %v2273 = vsel %vm2102, %v2249, 0
      %v2276 = vsel %vm2102, %v2250, 0
      %v2279 = vsel %vm2102, %v2251, 0
      %v2282 = vsel %vm2102, %v2252, 0
      %v2285 = vsel %vm2102, %v2253, 0
      %v2288 = vsel %vm2102, %v2254, 0
      %v2291 = vsel %vm2102, %v2255, 0
      %v2294 = vsel %vm2102, %v2256, 0
      %v2297 = vsel %vm2102, %v2257, 0
      %v2300 = vsel %vm2102, %v2258, 0
      %2302 = vmatprep.subr.mxu0 0.0
      %2303 = vmatpush1.msra.mxu0 0.0
      %2304 = vmatprep.subr.mxu0 0.0
      %2305 = vmatpush1.msra.mxu0 0.0
      %2306 = vmatprep.subr.mxu0 0.0
      %2307 = vmatpush1.msra.mxu0 0.0
      %2308 = vmatprep.subr.mxu0 0.0
      %2309 = vmatpush1.msra.mxu0 0.0
      %2310 = vmatprep.subr.mxu0 0.0
      %2311 = vmatpush1.msra.mxu0 0.0
      %2312 = vmatprep.subr.mxu0 0.0
      %2313 = vmatpush1.msra.mxu0 0.0
      %2314 = vmatprep.subr.mxu0 0.0
      %2315 = vmatpush1.msra.mxu0 0.0
      %2316 = vmatprep.subr.mxu0 0.0
      %2317 = vmatpush1.msra.mxu0 0.0
      %2318 = vmatprep.subr.mxu0 0.0
      %2319 = vmatpush1.msra.mxu0 0.0
      %2320 = vmatprep.subr.mxu0 0.0
      %2321 = vmatpush1.msra.mxu0 0.0
      %2322 = vmatprep.subr.mxu0 0.0
      %2323 = vmatpush1.msra.mxu0 0.0
      %2324 = vmatprep.subr.mxu0 0.0
      %2325 = vmatpush1.msra.mxu0 0.0
      %2326 = vmatprep.subr.mxu0 0.0
      %2327 = vmatpush1.msra.mxu0 0.0
      %2328 = vmatprep.subr.mxu0 0.0
      %2329 = vmatpush1.msra.mxu0 0.0
      %2330 = vmatprep.subr.mxu0 0.0
      %2331 = vmatpush1.msra.mxu0 %v2262
      %2332 = vmatprep.subr.mxu0 0.0
      %2333 = vmatpush1.msra.mxu0 %v2261
      %2334 = vmatprep.subr.mxu0 0.0
      %2335 = vmatpush2.msra.mxu0 0.0
      %2336 = vmatprep.subr.mxu0 0.0
      %2337 = vmatpush2.msra.mxu0 0.0
      %2338 = vmatprep.subr.mxu0 0.0
      %2339 = vmatpush2.msra.mxu0 0.0
      %2340 = vmatprep.subr.mxu0 0.0
      %2341 = vmatpush2.msra.mxu0 0.0
      %2342 = vmatprep.subr.mxu0 0.0
      %2343 = vmatpush2.msra.mxu0 0.0
      %2344 = vmatprep.subr.mxu0 0.0
      %2345 = vmatpush2.msra.mxu0 0.0
      %2346 = vmatprep.subr.mxu0 0.0
      %2347 = vmatpush2.msra.mxu0 0.0
      %2348 = vmatprep.subr.mxu0 0.0
      %2349 = vmatpush2.msra.mxu0 0.0
      %2350 = vmatprep.subr.mxu0 0.0
      %2351 = vmatpush2.msra.mxu0 0.0
      %2352 = vmatprep.subr.mxu0 0.0
      %2353 = vmatpush2.msra.mxu0 0.0
      %2354 = vmatprep.subr.mxu0 0.0
      %2355 = vmatpush2.msra.mxu0 0.0
      %2356 = vmatprep.subr.mxu0 0.0
      %2357 = vmatpush2.msra.mxu0 0.0
      %2358 = vmatprep.subr.mxu0 0.0
      %2359 = vmatpush2.msra.mxu0 0.0
      %2360 = vmatprep.subr.mxu0 0.0
      %2361 = vmatpush2.msra.mxu0 0.0
      %2362 = vmatprep.subr.mxu0 0.0
      %2363 = vmatpush2.msra.mxu0 0.0
      %2364 = vmatprep.subr.mxu0 0.0
      %2365 = vmatpush2.msra.mxu0 0.0
      %2366 = vmatprep.mubr.f32.mxu0 0.0
      %2367 = vmatmul.mubr.f32.gmra.mxu0 %v2264
      %v2368 = vpop.f32.mrf.mxu0
      %v2369 = vadd.f32 0.0, %v2368
      %v2370 = vpop.f32.mrf.mxu0
      %2371 = vmatprep.mubr.f32.mxu0 0.0
      %2372 = vmatmul.mubr.f32.gmra.mxu0 %v2267
      %v2373 = vpop.f32.mrf.mxu0
      %v2374 = vadd.f32 0.0, %v2373
      %v2375 = vpop.f32.mrf.mxu0
      %2376 = vmatprep.mubr.f32.mxu0 0.0
      %2377 = vmatmul.mubr.f32.gmra.mxu0 %v2270
      %v2378 = vpop.f32.mrf.mxu0
      %v2379 = vadd.f32 0.0, %v2378
      %v2380 = vpop.f32.mrf.mxu0
      %2381 = vmatprep.mubr.f32.mxu0 0.0
      %2382 = vmatmul.mubr.f32.gmra.mxu0 %v2273
      %v2383 = vpop.f32.mrf.mxu0
      %v2384 = vadd.f32 0.0, %v2383
      %v2385 = vpop.f32.mrf.mxu0
      %2386 = vmatprep.mubr.f32.mxu0 0.0
      %2387 = vmatmul.mubr.f32.gmra.mxu0 %v2276
      %v2388 = vpop.f32.mrf.mxu0
      %v2389 = vadd.f32 0.0, %v2388
      %v2390 = vpop.f32.mrf.mxu0
      %2391 = vmatprep.mubr.f32.mxu0 0.0
      %2392 = vmatmul.mubr.f32.gmra.mxu0 %v2279
      %v2393 = vpop.f32.mrf.mxu0
      %v2394 = vadd.f32 0.0, %v2393
      %v2395 = vpop.f32.mrf.mxu0
      %2396 = vmatprep.mubr.f32.mxu0 0.0
      %2397 = vmatmul.mubr.f32.gmra.mxu0 %v2282
      %v2398 = vpop.f32.mrf.mxu0
      %v2399 = vadd.f32 0.0, %v2398
      %v2400 = vpop.f32.mrf.mxu0
      %2401 = vmatprep.mubr.f32.mxu0 0.0
      %2402 = vmatmul.mubr.f32.gmra.mxu0 %v2285
      %v2403 = vpop.f32.mrf.mxu0
      %v2404 = vadd.f32 0.0, %v2403
      %v2405 = vpop.f32.mrf.mxu0
      %2406 = vmatprep.mubr.f32.mxu0 0.0
      %2407 = vmatmul.mubr.f32.gmra.mxu0 %v2288
      %v2408 = vpop.f32.mrf.mxu0
      %v2409 = vadd.f32 0.0, %v2408
      %v2410 = vpop.f32.mrf.mxu0
      %2411 = vmatprep.mubr.f32.mxu0 0.0
      %2412 = vmatmul.mubr.f32.gmra.mxu0 %v2291
      %v2413 = vpop.f32.mrf.mxu0
      %v2414 = vadd.f32 0.0, %v2413
      %v2415 = vpop.f32.mrf.mxu0
      %2416 = vmatprep.mubr.f32.mxu0 0.0
      %2417 = vmatmul.mubr.f32.gmra.mxu0 %v2294
      %v2418 = vpop.f32.mrf.mxu0
      %v2419 = vadd.f32 0.0, %v2418
      %v2420 = vpop.f32.mrf.mxu0
      %2421 = vmatprep.mubr.f32.mxu0 0.0
      %2422 = vmatmul.mubr.f32.gmra.mxu0 %v2297
      %v2423 = vpop.f32.mrf.mxu0
      %v2424 = vadd.f32 0.0, %v2423
      %v2425 = vpop.f32.mrf.mxu0
      %2426 = vmatprep.mubr.f32.mxu0 0.0
      %2427 = vmatmul.mubr.f32.gmra.mxu0 %v2300
      %v2428 = vpop.f32.mrf.mxu0
      %v2429 = vadd.f32 0.0, %v2428
      %v2430 = vpop.f32.mrf.mxu0
      %2431 = vdwg.mxu0
      %v2433 = vsel %vm2102, %v2233, 0
      %v2436 = vsel %vm2102, %v2234, 0
      %v2439 = vsel %vm2102, %v2235, 0
      %v2442 = vsel %vm2102, %v2236, 0
      %v2445 = vsel %vm2102, %v2237, 0
      %v2448 = vsel %vm2102, %v2238, 0
      %v2451 = vsel %vm2102, %v2239, 0
      %v2454 = vsel %vm2102, %v2240, 0
      %v2457 = vsel %vm2102, %v2241, 0
      %v2460 = vsel %vm2102, %v2242, 0
      %v2463 = vsel %vm2102, %v2243, 0
      %v2466 = vsel %vm2102, %v2244, 0
      %v2469 = vsel %vm2102, %v2245, 0
      %2471 = vmatprep.subr.mxu0 0.0
      %2472 = vmatpush1.msra.mxu0 0.0
      %2473 = vmatprep.subr.mxu0 0.0
      %2474 = vmatpush1.msra.mxu0 0.0
      %2475 = vmatprep.subr.mxu0 0.0
      %2476 = vmatpush1.msra.mxu0 0.0
      %2477 = vmatprep.subr.mxu0 0.0
      %2478 = vmatpush1.msra.mxu0 0.0
      %2479 = vmatprep.subr.mxu0 0.0
      %2480 = vmatpush1.msra.mxu0 0.0
      %2481 = vmatprep.subr.mxu0 0.0
      %2482 = vmatpush1.msra.mxu0 0.0
      %2483 = vmatprep.subr.mxu0 0.0
      %2484 = vmatpush1.msra.mxu0 0.0
      %2485 = vmatprep.subr.mxu0 0.0
      %2486 = vmatpush1.msra.mxu0 0.0
      %2487 = vmatprep.subr.mxu0 0.0
      %2488 = vmatpush1.msra.mxu0 0.0
      %2489 = vmatprep.subr.mxu0 0.0
      %2490 = vmatpush1.msra.mxu0 0.0
      %2491 = vmatprep.subr.mxu0 0.0
      %2492 = vmatpush1.msra.mxu0 0.0
      %2493 = vmatprep.subr.mxu0 0.0
      %2494 = vmatpush1.msra.mxu0 0.0
      %2495 = vmatprep.subr.mxu0 0.0
      %2496 = vmatpush1.msra.mxu0 0.0
      %2497 = vmatprep.subr.mxu0 0.0
      %2498 = vmatpush1.msra.mxu0 0.0
      %2499 = vmatprep.subr.mxu0 0.0
      %2500 = vmatpush1.msra.mxu0 %v2260
      %2501 = vmatprep.subr.mxu0 0.0
      %2502 = vmatpush1.msra.mxu0 %v2259
      %2503 = vmatprep.subr.mxu0 0.0
      %2504 = vmatpush2.msra.mxu0 0.0
      %2505 = vmatprep.subr.mxu0 0.0
      %2506 = vmatpush2.msra.mxu0 0.0
      %2507 = vmatprep.subr.mxu0 0.0
      %2508 = vmatpush2.msra.mxu0 0.0
      %2509 = vmatprep.subr.mxu0 0.0
      %2510 = vmatpush2.msra.mxu0 0.0
      %2511 = vmatprep.subr.mxu0 0.0
      %2512 = vmatpush2.msra.mxu0 0.0
      %2513 = vmatprep.subr.mxu0 0.0
      %2514 = vmatpush2.msra.mxu0 0.0
      %2515 = vmatprep.subr.mxu0 0.0
      %2516 = vmatpush2.msra.mxu0 0.0
      %2517 = vmatprep.subr.mxu0 0.0
      %2518 = vmatpush2.msra.mxu0 0.0
      %2519 = vmatprep.subr.mxu0 0.0
      %2520 = vmatpush2.msra.mxu0 0.0
      %2521 = vmatprep.subr.mxu0 0.0
      %2522 = vmatpush2.msra.mxu0 0.0
      %2523 = vmatprep.subr.mxu0 0.0
      %2524 = vmatpush2.msra.mxu0 0.0
      %2525 = vmatprep.subr.mxu0 0.0
      %2526 = vmatpush2.msra.mxu0 0.0
      %2527 = vmatprep.subr.mxu0 0.0
      %2528 = vmatpush2.msra.mxu0 0.0
      %2529 = vmatprep.subr.mxu0 0.0
      %2530 = vmatpush2.msra.mxu0 0.0
      %2531 = vmatprep.subr.mxu0 0.0
      %2532 = vmatpush2.msra.mxu0 0.0
      %2533 = vmatprep.subr.mxu0 0.0
      %2534 = vmatpush2.msra.mxu0 0.0
      %2535 = vmatprep.mubr.f32.mxu0 0.0
      %2536 = vmatmul.mubr.f32.gmra.mxu0 %v2433
      %v2537 = vpop.f32.mrf.mxu0
      %v2538 = vadd.f32 %v2369, %v2537
      %v2539 = vpop.f32.mrf.mxu0
      %2540 = vmatprep.mubr.f32.mxu0 0.0
      %2541 = vmatmul.mubr.f32.gmra.mxu0 %v2436
      %v2542 = vpop.f32.mrf.mxu0
      %v2543 = vadd.f32 %v2374, %v2542
      %v2544 = vpop.f32.mrf.mxu0
      %2545 = vmatprep.mubr.f32.mxu0 0.0
      %2546 = vmatmul.mubr.f32.gmra.mxu0 %v2439
      %v2547 = vpop.f32.mrf.mxu0
      %v2548 = vadd.f32 %v2379, %v2547
      %v2549 = vpop.f32.mrf.mxu0
      %2550 = vmatprep.mubr.f32.mxu0 0.0
      %2551 = vmatmul.mubr.f32.gmra.mxu0 %v2442
      %v2552 = vpop.f32.mrf.mxu0
      %v2553 = vadd.f32 %v2384, %v2552
      %v2554 = vpop.f32.mrf.mxu0
      %2555 = vmatprep.mubr.f32.mxu0 0.0
      %2556 = vmatmul.mubr.f32.gmra.mxu0 %v2445
      %v2557 = vpop.f32.mrf.mxu0
      %v2558 = vadd.f32 %v2389, %v2557
      %v2559 = vpop.f32.mrf.mxu0
      %2560 = vmatprep.mubr.f32.mxu0 0.0
      %2561 = vmatmul.mubr.f32.gmra.mxu0 %v2448
      %v2562 = vpop.f32.mrf.mxu0
      %v2563 = vadd.f32 %v2394, %v2562
      %v2564 = vpop.f32.mrf.mxu0
      %2565 = vmatprep.mubr.f32.mxu0 0.0
      %2566 = vmatmul.mubr.f32.gmra.mxu0 %v2451
      %v2567 = vpop.f32.mrf.mxu0
      %v2568 = vadd.f32 %v2399, %v2567
      %v2569 = vpop.f32.mrf.mxu0
      %2570 = vmatprep.mubr.f32.mxu0 0.0
      %2571 = vmatmul.mubr.f32.gmra.mxu0 %v2454
      %v2572 = vpop.f32.mrf.mxu0
      %v2573 = vadd.f32 %v2404, %v2572
      %v2574 = vpop.f32.mrf.mxu0
      %2575 = vmatprep.mubr.f32.mxu0 0.0
      %2576 = vmatmul.mubr.f32.gmra.mxu0 %v2457
      %v2577 = vpop.f32.mrf.mxu0
      %v2578 = vadd.f32 %v2409, %v2577
      %v2579 = vpop.f32.mrf.mxu0
      %2580 = vmatprep.mubr.f32.mxu0 0.0
      %2581 = vmatmul.mubr.f32.gmra.mxu0 %v2460
      %v2582 = vpop.f32.mrf.mxu0
      %v2583 = vadd.f32 %v2414, %v2582
      %v2584 = vpop.f32.mrf.mxu0
      %2585 = vmatprep.mubr.f32.mxu0 0.0
      %2586 = vmatmul.mubr.f32.gmra.mxu0 %v2463
      %v2587 = vpop.f32.mrf.mxu0
      %v2588 = vadd.f32 %v2419, %v2587
      %v2589 = vpop.f32.mrf.mxu0
      %2590 = vmatprep.mubr.f32.mxu0 0.0
      %2591 = vmatmul.mubr.f32.gmra.mxu0 %v2466
      %v2592 = vpop.f32.mrf.mxu0
      %v2593 = vadd.f32 %v2424, %v2592
      %v2594 = vpop.f32.mrf.mxu0
      %2595 = vmatprep.mubr.f32.mxu0 0.0
      %2596 = vmatmul.mubr.f32.gmra.mxu0 %v2469
      %v2597 = vpop.f32.mrf.mxu0
      %v2598 = vadd.f32 %v2429, %v2597
      %v2599 = vpop.f32.mrf.mxu0
      %2600 = vdwg.mxu0
      %v2601 = vld [vmem:[%s13] sm:$0x1]
      %v2603 = vlaneseq
      %v2604 = vshrl.u32 %v2603, 7
      %v2605 = vsub.s32 0, %v2604
      %v2606 = vrot.slane %v2601, %v2605
      %v2608 = vadd.f32 %v2538, %v2606
      %v2609 = vadd.f32 %v2543, %v2606
      %v2610 = vadd.f32 %v2548, %v2606
      %v2611 = vadd.f32 %v2553, %v2606
      %v2612 = vadd.f32 %v2558, %v2606
      %v2613 = vadd.f32 %v2563, %v2606
      %v2614 = vadd.f32 %v2568, %v2606
      %v2615 = vadd.f32 %v2573, %v2606
      %v2616 = vadd.f32 %v2578, %v2606
      %v2617 = vadd.f32 %v2583, %v2606
      %v2618 = vadd.f32 %v2588, %v2606
      %v2619 = vadd.f32 %v2593, %v2606
      %v2620 = vadd.f32 %v2598, %v2606
      %v2621 = vmax.f32 %v2608, 0.0
      %v2622 = vmax.f32 %v2609, 0.0
      %v2623 = vmax.f32 %v2610, 0.0
      %v2624 = vmax.f32 %v2611, 0.0
      %v2625 = vmax.f32 %v2612, 0.0
      %v2626 = vmax.f32 %v2613, 0.0
      %v2627 = vmax.f32 %v2614, 0.0
      %v2628 = vmax.f32 %v2615, 0.0
      %v2629 = vmax.f32 %v2616, 0.0
      %v2630 = vmax.f32 %v2617, 0.0
      %v2631 = vmax.f32 %v2618, 0.0
      %v2632 = vmax.f32 %v2619, 0.0
      %v2633 = vmax.f32 %v2620, 0.0
      %v2634 = vld [vmem:[%s14] sm:$0xff]
      %v2635 = vld [vmem:[%s14 + $0x8] sm:$0xff]
      %v2636 = vld [vmem:[%s14 + $0x10] sm:$0xff]
      %v2637 = vld [vmem:[%s14 + $0x18] sm:$0xff]
      %v2638 = vld [vmem:[%s14 + $0x20] sm:$0xff]
      %v2639 = vld [vmem:[%s14 + $0x28] sm:$0xff]
      %v2640 = vld [vmem:[%s14 + $0x30] sm:$0xff]
      %v2641 = vld [vmem:[%s14 + $0x38] sm:$0xff]
      %v2642 = vld [vmem:[%s15] sm:$0x1]
      %v2644 = vlaneseq
      %v2645 = vshrl.u32 %v2644, 7
      %v2646 = vsub.s32 0, %v2645
      %v2647 = vrot.slane %v2642, %v2646
      %v2650 = vsel %vm991, %v2621, 0
      %v2653 = vsel %vm991, %v2622, 0
      %v2656 = vsel %vm991, %v2623, 0
      %v2659 = vsel %vm991, %v2624, 0
      %v2662 = vsel %vm991, %v2625, 0
      %v2665 = vsel %vm991, %v2626, 0
      %v2668 = vsel %vm991, %v2627, 0
      %v2671 = vsel %vm991, %v2628, 0
      %v2674 = vsel %vm991, %v2629, 0
      %v2677 = vsel %vm991, %v2630, 0
      %v2680 = vsel %vm991, %v2631, 0
      %v2683 = vsel %vm991, %v2632, 0
      %v2686 = vsel %vm991, %v2633, 0
      %2688 = vmatprep.subr.mxu0 0.0
      %2689 = vmatpush1.msra.mxu0 0.0
      %2690 = vmatprep.subr.mxu0 0.0
      %2691 = vmatpush1.msra.mxu0 0.0
      %2692 = vmatprep.subr.mxu0 0.0
      %2693 = vmatpush1.msra.mxu0 0.0
      %2694 = vmatprep.subr.mxu0 0.0
      %2695 = vmatpush1.msra.mxu0 0.0
      %2696 = vmatprep.subr.mxu0 0.0
      %2697 = vmatpush1.msra.mxu0 0.0
      %2698 = vmatprep.subr.mxu0 0.0
      %2699 = vmatpush1.msra.mxu0 0.0
      %2700 = vmatprep.subr.mxu0 0.0
      %2701 = vmatpush1.msra.mxu0 0.0
      %2702 = vmatprep.subr.mxu0 0.0
      %2703 = vmatpush1.msra.mxu0 0.0
      %2704 = vmatprep.subr.mxu0 0.0
      %2705 = vmatpush1.msra.mxu0 %v2641
      %2706 = vmatprep.subr.mxu0 0.0
      %2707 = vmatpush1.msra.mxu0 %v2640
      %2708 = vmatprep.subr.mxu0 0.0
      %2709 = vmatpush1.msra.mxu0 %v2639
      %2710 = vmatprep.subr.mxu0 0.0
      %2711 = vmatpush1.msra.mxu0 %v2638
      %2712 = vmatprep.subr.mxu0 0.0
      %2713 = vmatpush1.msra.mxu0 %v2637
      %2714 = vmatprep.subr.mxu0 0.0
      %2715 = vmatpush1.msra.mxu0 %v2636
      %2716 = vmatprep.subr.mxu0 0.0
      %2717 = vmatpush1.msra.mxu0 %v2635
      %2718 = vmatprep.subr.mxu0 0.0
      %2719 = vmatpush1.msra.mxu0 %v2634
      %2720 = vmatprep.subr.mxu0 0.0
      %2721 = vmatpush2.msra.mxu0 0.0
      %2722 = vmatprep.subr.mxu0 0.0
      %2723 = vmatpush2.msra.mxu0 0.0
      %2724 = vmatprep.subr.mxu0 0.0
      %2725 = vmatpush2.msra.mxu0 0.0
      %2726 = vmatprep.subr.mxu0 0.0
      %2727 = vmatpush2.msra.mxu0 0.0
      %2728 = vmatprep.subr.mxu0 0.0
      %2729 = vmatpush2.msra.mxu0 0.0
      %2730 = vmatprep.subr.mxu0 0.0
      %2731 = vmatpush2.msra.mxu0 0.0
      %2732 = vmatprep.subr.mxu0 0.0
      %2733 = vmatpush2.msra.mxu0 0.0
      %2734 = vmatprep.subr.mxu0 0.0
      %2735 = vmatpush2.msra.mxu0 0.0
      %2736 = vmatprep.subr.mxu0 0.0
      %2737 = vmatpush2.msra.mxu0 0.0
      %2738 = vmatprep.subr.mxu0 0.0
      %2739 = vmatpush2.msra.mxu0 0.0
      %2740 = vmatprep.subr.mxu0 0.0
      %2741 = vmatpush2.msra.mxu0 0.0
      %2742 = vmatprep.subr.mxu0 0.0
      %2743 = vmatpush2.msra.mxu0 0.0
      %2744 = vmatprep.subr.mxu0 0.0
      %2745 = vmatpush2.msra.mxu0 0.0
      %2746 = vmatprep.subr.mxu0 0.0
      %2747 = vmatpush2.msra.mxu0 0.0
      %2748 = vmatprep.subr.mxu0 0.0
      %2749 = vmatpush2.msra.mxu0 0.0
      %2750 = vmatprep.subr.mxu0 0.0
      %2751 = vmatpush2.msra.mxu0 0.0
      %2752 = vmatprep.mubr.f32.mxu0 0.0
      %2753 = vmatmul.mubr.f32.gmra.mxu0 %v2650
      %v2754 = vpop.f32.mrf.mxu0
      %v2755 = vadd.f32 %v2647, %v2754
      %v2756 = vpop.f32.mrf.mxu0
      %2757 = vmatprep.mubr.f32.mxu0 0.0
      %2758 = vmatmul.mubr.f32.gmra.mxu0 %v2653
      %v2759 = vpop.f32.mrf.mxu0
      %v2760 = vadd.f32 %v2647, %v2759
      %v2761 = vpop.f32.mrf.mxu0
      %2762 = vmatprep.mubr.f32.mxu0 0.0
      %2763 = vmatmul.mubr.f32.gmra.mxu0 %v2656
      %v2764 = vpop.f32.mrf.mxu0
      %v2765 = vadd.f32 %v2647, %v2764
      %v2766 = vpop.f32.mrf.mxu0
      %2767 = vmatprep.mubr.f32.mxu0 0.0
      %2768 = vmatmul.mubr.f32.gmra.mxu0 %v2659
      %v2769 = vpop.f32.mrf.mxu0
      %v2770 = vadd.f32 %v2647, %v2769
      %v2771 = vpop.f32.mrf.mxu0
      %2772 = vmatprep.mubr.f32.mxu0 0.0
      %2773 = vmatmul.mubr.f32.gmra.mxu0 %v2662
      %v2774 = vpop.f32.mrf.mxu0
      %v2775 = vadd.f32 %v2647, %v2774
      %v2776 = vpop.f32.mrf.mxu0
      %2777 = vmatprep.mubr.f32.mxu0 0.0
      %2778 = vmatmul.mubr.f32.gmra.mxu0 %v2665
      %v2779 = vpop.f32.mrf.mxu0
      %v2780 = vadd.f32 %v2647, %v2779
      %v2781 = vpop.f32.mrf.mxu0
      %2782 = vmatprep.mubr.f32.mxu0 0.0
      %2783 = vmatmul.mubr.f32.gmra.mxu0 %v2668
      %v2784 = vpop.f32.mrf.mxu0
      %v2785 = vadd.f32 %v2647, %v2784
      %v2786 = vpop.f32.mrf.mxu0
      %2787 = vmatprep.mubr.f32.mxu0 0.0
      %2788 = vmatmul.mubr.f32.gmra.mxu0 %v2671
      %v2789 = vpop.f32.mrf.mxu0
      %v2790 = vadd.f32 %v2647, %v2789
      %v2791 = vpop.f32.mrf.mxu0
      %2792 = vmatprep.mubr.f32.mxu0 0.0
      %2793 = vmatmul.mubr.f32.gmra.mxu0 %v2674
      %v2794 = vpop.f32.mrf.mxu0
      %v2795 = vadd.f32 %v2647, %v2794
      %v2796 = vpop.f32.mrf.mxu0
      %2797 = vmatprep.mubr.f32.mxu0 0.0
      %2798 = vmatmul.mubr.f32.gmra.mxu0 %v2677
      %v2799 = vpop.f32.mrf.mxu0
      %v2800 = vadd.f32 %v2647, %v2799
      %v2801 = vpop.f32.mrf.mxu0
      %2802 = vmatprep.mubr.f32.mxu0 0.0
      %2803 = vmatmul.mubr.f32.gmra.mxu0 %v2680
      %v2804 = vpop.f32.mrf.mxu0
      %v2805 = vadd.f32 %v2647, %v2804
      %v2806 = vpop.f32.mrf.mxu0
      %2807 = vmatprep.mubr.f32.mxu0 0.0
      %2808 = vmatmul.mubr.f32.gmra.mxu0 %v2683
      %v2809 = vpop.f32.mrf.mxu0
      %v2810 = vadd.f32 %v2647, %v2809
      %v2811 = vpop.f32.mrf.mxu0
      %2812 = vmatprep.mubr.f32.mxu0 0.0
      %2813 = vmatmul.mubr.f32.gmra.mxu0 %v2686
      %v2814 = vpop.f32.mrf.mxu0
      %v2815 = vadd.f32 %v2647, %v2814
      %v2816 = vpop.f32.mrf.mxu0
      %2817 = vdwg.mxu0
      %v2818 = vmax.f32 %v2755, 0.0
      %v2819 = vmax.f32 %v2760, 0.0
      %v2820 = vmax.f32 %v2765, 0.0
      %v2821 = vmax.f32 %v2770, 0.0
      %v2822 = vmax.f32 %v2775, 0.0
      %v2823 = vmax.f32 %v2780, 0.0
      %v2824 = vmax.f32 %v2785, 0.0
      %v2825 = vmax.f32 %v2790, 0.0
      %v2826 = vmax.f32 %v2795, 0.0
      %v2827 = vmax.f32 %v2800, 0.0
      %v2828 = vmax.f32 %v2805, 0.0
      %v2829 = vmax.f32 %v2810, 0.0
      %v2830 = vmax.f32 %v2815, 0.0
      %v2831 = vld [vmem:[%s16] sm:$0xff]
      %v2832 = vld [vmem:[%s16 + $0x8] sm:$0xff]
      %v2833 = vld [vmem:[%s16 + $0x10] sm:$0xff]
      %v2834 = vld [vmem:[%s16 + $0x18] sm:$0xff]
      %v2835 = vld [vmem:[%s16 + $0x20] sm:$0xff]
      %v2836 = vld [vmem:[%s16 + $0x28] sm:$0xff]
      %v2837 = vld [vmem:[%s16 + $0x30] sm:$0xff]
      %v2838 = vld [vmem:[%s16 + $0x38] sm:$0xff]
      %v2839 = vld [vmem:[%s17] sm:$0x1]
      %v2841 = vlaneseq
      %v2842 = vshrl.u32 %v2841, 7
      %v2843 = vsub.s32 0, %v2842
      %v2844 = vrot.slane %v2839, %v2843
      %v2847 = vsel %vm991, %v2818, 0
      %v2850 = vsel %vm991, %v2819, 0
      %v2853 = vsel %vm991, %v2820, 0
      %v2856 = vsel %vm991, %v2821, 0
      %v2859 = vsel %vm991, %v2822, 0
      %v2862 = vsel %vm991, %v2823, 0
      %v2865 = vsel %vm991, %v2824, 0
      %v2868 = vsel %vm991, %v2825, 0
      %v2871 = vsel %vm991, %v2826, 0
      %v2874 = vsel %vm991, %v2827, 0
      %v2877 = vsel %vm991, %v2828, 0
      %v2880 = vsel %vm991, %v2829, 0
      %v2883 = vsel %vm991, %v2830, 0
      %2885 = vmatprep.subr.mxu0 0.0
      %2886 = vmatpush1.msra.mxu0 0.0
      %2887 = vmatprep.subr.mxu0 0.0
      %2888 = vmatpush1.msra.mxu0 0.0
      %2889 = vmatprep.subr.mxu0 0.0
      %2890 = vmatpush1.msra.mxu0 0.0
      %2891 = vmatprep.subr.mxu0 0.0
      %2892 = vmatpush1.msra.mxu0 0.0
      %2893 = vmatprep.subr.mxu0 0.0
      %2894 = vmatpush1.msra.mxu0 0.0
      %2895 = vmatprep.subr.mxu0 0.0
      %2896 = vmatpush1.msra.mxu0 0.0
      %2897 = vmatprep.subr.mxu0 0.0
      %2898 = vmatpush1.msra.mxu0 0.0
      %2899 = vmatprep.subr.mxu0 0.0
      %2900 = vmatpush1.msra.mxu0 0.0
      %2901 = vmatprep.subr.mxu0 0.0
      %2902 = vmatpush1.msra.mxu0 %v2838
      %2903 = vmatprep.subr.mxu0 0.0
      %2904 = vmatpush1.msra.mxu0 %v2837
      %2905 = vmatprep.subr.mxu0 0.0
      %2906 = vmatpush1.msra.mxu0 %v2836
      %2907 = vmatprep.subr.mxu0 0.0
      %2908 = vmatpush1.msra.mxu0 %v2835
      %2909 = vmatprep.subr.mxu0 0.0
      %2910 = vmatpush1.msra.mxu0 %v2834
      %2911 = vmatprep.subr.mxu0 0.0
      %2912 = vmatpush1.msra.mxu0 %v2833
      %2913 = vmatprep.subr.mxu0 0.0
      %2914 = vmatpush1.msra.mxu0 %v2832
      %2915 = vmatprep.subr.mxu0 0.0
      %2916 = vmatpush1.msra.mxu0 %v2831
      %2917 = vmatprep.subr.mxu0 0.0
      %2918 = vmatpush2.msra.mxu0 0.0
      %2919 = vmatprep.subr.mxu0 0.0
      %2920 = vmatpush2.msra.mxu0 0.0
      %2921 = vmatprep.subr.mxu0 0.0
      %2922 = vmatpush2.msra.mxu0 0.0
      %2923 = vmatprep.subr.mxu0 0.0
      %2924 = vmatpush2.msra.mxu0 0.0
      %2925 = vmatprep.subr.mxu0 0.0
      %2926 = vmatpush2.msra.mxu0 0.0
      %2927 = vmatprep.subr.mxu0 0.0
      %2928 = vmatpush2.msra.mxu0 0.0
      %2929 = vmatprep.subr.mxu0 0.0
      %2930 = vmatpush2.msra.mxu0 0.0
      %2931 = vmatprep.subr.mxu0 0.0
      %2932 = vmatpush2.msra.mxu0 0.0
      %2933 = vmatprep.subr.mxu0 0.0
      %2934 = vmatpush2.msra.mxu0 0.0
      %2935 = vmatprep.subr.mxu0 0.0
      %2936 = vmatpush2.msra.mxu0 0.0
      %2937 = vmatprep.subr.mxu0 0.0
      %2938 = vmatpush2.msra.mxu0 0.0
      %2939 = vmatprep.subr.mxu0 0.0
      %2940 = vmatpush2.msra.mxu0 0.0
      %2941 = vmatprep.subr.mxu0 0.0
      %2942 = vmatpush2.msra.mxu0 0.0
      %2943 = vmatprep.subr.mxu0 0.0
      %2944 = vmatpush2.msra.mxu0 0.0
      %2945 = vmatprep.subr.mxu0 0.0
      %2946 = vmatpush2.msra.mxu0 0.0
      %2947 = vmatprep.subr.mxu0 0.0
      %2948 = vmatpush2.msra.mxu0 0.0
      %2949 = vmatprep.mubr.f32.mxu0 0.0
      %2950 = vmatmul.mubr.f32.gmra.mxu0 %v2847
      %v2951 = vpop.f32.mrf.mxu0
      %v2952 = vadd.f32 %v2844, %v2951
      %v2953 = vpop.f32.mrf.mxu0
      %2954 = vmatprep.mubr.f32.mxu0 0.0
      %2955 = vmatmul.mubr.f32.gmra.mxu0 %v2850
      %v2956 = vpop.f32.mrf.mxu0
      %v2957 = vadd.f32 %v2844, %v2956
      %v2958 = vpop.f32.mrf.mxu0
      %2959 = vmatprep.mubr.f32.mxu0 0.0
      %2960 = vmatmul.mubr.f32.gmra.mxu0 %v2853
      %v2961 = vpop.f32.mrf.mxu0
      %v2962 = vadd.f32 %v2844, %v2961
      %v2963 = vpop.f32.mrf.mxu0
      %2964 = vmatprep.mubr.f32.mxu0 0.0
      %2965 = vmatmul.mubr.f32.gmra.mxu0 %v2856
      %v2966 = vpop.f32.mrf.mxu0
      %v2967 = vadd.f32 %v2844, %v2966
      %v2968 = vpop.f32.mrf.mxu0
      %2969 = vmatprep.mubr.f32.mxu0 0.0
      %2970 = vmatmul.mubr.f32.gmra.mxu0 %v2859
      %v2971 = vpop.f32.mrf.mxu0
      %v2972 = vadd.f32 %v2844, %v2971
      %v2973 = vpop.f32.mrf.mxu0
      %2974 = vmatprep.mubr.f32.mxu0 0.0
      %2975 = vmatmul.mubr.f32.gmra.mxu0 %v2862
      %v2976 = vpop.f32.mrf.mxu0
      %v2977 = vadd.f32 %v2844, %v2976
      %v2978 = vpop.f32.mrf.mxu0
      %2979 = vmatprep.mubr.f32.mxu0 0.0
      %2980 = vmatmul.mubr.f32.gmra.mxu0 %v2865
      %v2981 = vpop.f32.mrf.mxu0
      %v2982 = vadd.f32 %v2844, %v2981
      %v2983 = vpop.f32.mrf.mxu0
      %2984 = vmatprep.mubr.f32.mxu0 0.0
      %2985 = vmatmul.mubr.f32.gmra.mxu0 %v2868
      %v2986 = vpop.f32.mrf.mxu0
      %v2987 = vadd.f32 %v2844, %v2986
      %v2988 = vpop.f32.mrf.mxu0
      %2989 = vmatprep.mubr.f32.mxu0 0.0
      %2990 = vmatmul.mubr.f32.gmra.mxu0 %v2871
      %v2991 = vpop.f32.mrf.mxu0
      %v2992 = vadd.f32 %v2844, %v2991
      %v2993 = vpop.f32.mrf.mxu0
      %2994 = vmatprep.mubr.f32.mxu0 0.0
      %2995 = vmatmul.mubr.f32.gmra.mxu0 %v2874
      %v2996 = vpop.f32.mrf.mxu0
      %v2997 = vadd.f32 %v2844, %v2996
      %v2998 = vpop.f32.mrf.mxu0
      %2999 = vmatprep.mubr.f32.mxu0 0.0
      %3000 = vmatmul.mubr.f32.gmra.mxu0 %v2877
      %v3001 = vpop.f32.mrf.mxu0
      %v3002 = vadd.f32 %v2844, %v3001
      %v3003 = vpop.f32.mrf.mxu0
      %3004 = vmatprep.mubr.f32.mxu0 0.0
      %3005 = vmatmul.mubr.f32.gmra.mxu0 %v2880
      %v3006 = vpop.f32.mrf.mxu0
      %v3007 = vadd.f32 %v2844, %v3006
      %v3008 = vpop.f32.mrf.mxu0
      %3009 = vmatprep.mubr.f32.mxu0 0.0
      %3010 = vmatmul.mubr.f32.gmra.mxu0 %v2883
      %v3011 = vpop.f32.mrf.mxu0
      %v3012 = vadd.f32 %v2844, %v3011
      %v3013 = vpop.f32.mrf.mxu0
      %3014 = vdwg.mxu0
      %v3015 = vtanh.pop %v2952
      %v3016 = vtanh.pop %v2957
      %v3017 = vtanh.pop %v2962
      %v3018 = vtanh.pop %v2967
      %v3019 = vtanh.pop %v2972
      %v3020 = vtanh.pop %v2977
      %v3021 = vtanh.pop %v2982
      %v3022 = vtanh.pop %v2987
      %v3023 = vtanh.pop %v2992
      %v3024 = vtanh.pop %v2997
      %v3025 = vtanh.pop %v3002
      %v3026 = vtanh.pop %v3007
      %v3027 = vtanh.pop %v3012
      %v3028 = vld [vmem:[%s670] sm:$0xff]
      %v3029 = vld [vmem:[%s670 + $0x8] sm:$0xff]
      %v3030 = vld [vmem:[%s670 + $0x10] sm:$0xff]
      %v3031 = vld [vmem:[%s670 + $0x18] sm:$0xff]
      %v3032 = vld [vmem:[%s670 + $0x20] sm:$0xff]
      %v3033 = vld [vmem:[%s670 + $0x28] sm:$0xff]
      %v3034 = vld [vmem:[%s670 + $0x30] sm:$0xff]
      %v3035 = vld [vmem:[%s670 + $0x38] sm:$0xff]
      %v3036 = vld [vmem:[%s670 + $0x40] sm:$0xff]
      %v3037 = vld [vmem:[%s670 + $0x48] sm:$0xff]
      %v3038 = vld [vmem:[%s670 + $0x50] sm:$0xff]
      %v3039 = vld [vmem:[%s670 + $0x58] sm:$0xff]
      %v3040 = vld [vmem:[%s670 + $0x60] sm:$0xff]
      %v3041 = vsub.f32 %v3028, %v3015
      %v3042 = vsub.f32 %v3029, %v3016
      %v3043 = vsub.f32 %v3030, %v3017
      %v3044 = vsub.f32 %v3031, %v3018
      %v3045 = vsub.f32 %v3032, %v3019
      %v3046 = vsub.f32 %v3033, %v3020
      %v3047 = vsub.f32 %v3034, %v3021
      %v3048 = vsub.f32 %v3035, %v3022
      %v3049 = vsub.f32 %v3036, %v3023
      %v3050 = vsub.f32 %v3037, %v3024
      %v3051 = vsub.f32 %v3038, %v3025
      %v3052 = vsub.f32 %v3039, %v3026
      %v3053 = vsub.f32 %v3040, %v3027
      %v3054 = vlaneseq
      %v3055 = vshrl.u32 %v3054, 7
      %v3056 = vadd.s32 %v3055, 8
      %v3057 = vadd.s32 %v3055, 16
      %v3058 = vadd.s32 %v3055, 24
      %v3059 = vadd.s32 %v3055, 32
      %v3060 = vadd.s32 %v3055, 40
      %v3061 = vadd.s32 %v3055, 48
      %v3062 = vadd.s32 %v3055, 56
      %v3063 = vadd.s32 %v3055, 64
      %v3064 = vadd.s32 %v3055, 72
      %v3065 = vadd.s32 %v3055, 80
      %v3066 = vadd.s32 %v3055, 88
      %v3067 = vadd.s32 %v3055, 96
      %s3068 = smul.u32 %s29, 104
      %v3069 = vstv %s3068
      %v3070 = vadd.s32 %v3055, %v3069
      %v3071 = vadd.s32 %v3056, %v3069
      %v3072 = vadd.s32 %v3057, %v3069
      %v3073 = vadd.s32 %v3058, %v3069
      %v3074 = vadd.s32 %v3059, %v3069
      %v3075 = vadd.s32 %v3060, %v3069
      %v3076 = vadd.s32 %v3061, %v3069
      %v3077 = vadd.s32 %v3062, %v3069
      %v3078 = vadd.s32 %v3063, %v3069
      %v3079 = vadd.s32 %v3064, %v3069
      %v3080 = vadd.s32 %v3065, %v3069
      %v3081 = vadd.s32 %v3066, %v3069
      %v3082 = vadd.s32 %v3067, %v3069
      %vm3083 = vcmp.lt.s32.totalorder %v3070, 200
      %vm3084 = vcmp.lt.s32.totalorder %v3071, 200
      %vm3085 = vcmp.lt.s32.totalorder %v3072, 200
      %vm3086 = vcmp.lt.s32.totalorder %v3073, 200
      %vm3087 = vcmp.lt.s32.totalorder %v3074, 200
      %vm3088 = vcmp.lt.s32.totalorder %v3075, 200
      %vm3089 = vcmp.lt.s32.totalorder %v3076, 200
      %vm3090 = vcmp.lt.s32.totalorder %v3077, 200
      %vm3091 = vcmp.lt.s32.totalorder %v3078, 200
      %vm3092 = vcmp.lt.s32.totalorder %v3079, 200
      %vm3093 = vcmp.lt.s32.totalorder %v3080, 200
      %vm3094 = vcmp.lt.s32.totalorder %v3081, 200
      %vm3095 = vcmp.lt.s32.totalorder %v3082, 200
      %v3096 = vsel %vm3083, %v3041, 0.0
      %v3097 = vsel %vm3084, %v3042, 0.0
      %v3098 = vsel %vm3085, %v3043, 0.0
      %v3099 = vsel %vm3086, %v3044, 0.0
      %v3100 = vsel %vm3087, %v3045, 0.0
      %v3101 = vsel %vm3088, %v3046, 0.0
      %v3102 = vsel %vm3089, %v3047, 0.0
      %v3103 = vsel %vm3090, %v3048, 0.0
      %v3104 = vsel %vm3091, %v3049, 0.0
      %v3105 = vsel %vm3092, %v3050, 0.0
      %v3106 = vsel %vm3093, %v3051, 0.0
      %v3107 = vsel %vm3094, %v3052, 0.0
      %v3108 = vsel %vm3095, %v3053, 0.0
      %v3109 = vmul.f32 %v3096, %v3096
      %v3110 = vmul.f32 %v3097, %v3097
      %v3111 = vmul.f32 %v3098, %v3098
      %v3112 = vmul.f32 %v3099, %v3099
      %v3113 = vmul.f32 %v3100, %v3100
      %v3114 = vmul.f32 %v3101, %v3101
      %v3115 = vmul.f32 %v3102, %v3102
      %v3116 = vmul.f32 %v3103, %v3103
      %v3117 = vmul.f32 %v3104, %v3104
      %v3118 = vmul.f32 %v3105, %v3105
      %v3119 = vmul.f32 %v3106, %v3106
      %v3120 = vmul.f32 %v3107, %v3107
      %v3121 = vmul.f32 %v3108, %v3108
      %vm3122 = vcmask 64512
      %v3123 = vsel %vm3122, %v3109, 0.0
      %v3124 = vsel %vm3122, %v3110, 0.0
      %v3125 = vadd.f32 %v3123, %v3124
      %v3126 = vsel %vm3122, %v3111, 0.0
      %v3127 = vadd.f32 %v3125, %v3126
      %v3128 = vsel %vm3122, %v3112, 0.0
      %v3129 = vadd.f32 %v3127, %v3128
      %v3130 = vsel %vm3122, %v3113, 0.0
      %v3131 = vadd.f32 %v3129, %v3130
      %v3132 = vsel %vm3122, %v3114, 0.0
      %v3133 = vadd.f32 %v3131, %v3132
      %v3134 = vsel %vm3122, %v3115, 0.0
      %v3135 = vadd.f32 %v3133, %v3134
      %v3136 = vsel %vm3122, %v3116, 0.0
      %v3137 = vadd.f32 %v3135, %v3136
      %v3138 = vsel %vm3122, %v3117, 0.0
      %v3139 = vadd.f32 %v3137, %v3138
      %v3140 = vsel %vm3122, %v3118, 0.0
      %v3141 = vadd.f32 %v3139, %v3140
      %v3142 = vsel %vm3122, %v3119, 0.0
      %v3143 = vadd.f32 %v3141, %v3142
      %v3144 = vsel %vm3122, %v3120, 0.0
      %v3145 = vadd.f32 %v3143, %v3144
      %v3146 = vsel %vm3122, %v3121, 0.0
      %v3147 = vadd.f32 %v3145, %v3146
      %3148 = vadd.xlane.f32.xlu0 %v3147
      %v3149 = vpop.xlane.xlu0 %3148
      %v3150 = vrot.slane %v3149, 4
      %v3151 = vadd.f32 %v3149, %v3150
      %v3152 = vrot.slane %v3151, 2
      %v3153 = vadd.f32 %v3151, %v3152
      %v3154 = vrot.slane %v3153, 1
      %v3155 = vadd.f32 %v3153, %v3154
      %s3156 = vtos %v3155
      %v3157 = vstv %s3156
      %3158 = vst [vmem:[%s679] sm:$0xff] %v3157
      %p3159 = scmp.lt.s32.totalorder %s29, 1
      %s3160 = scalar_select %p3159, %s29, 1
      %s3161 = smul.addr %s3160, 8
      %s3162 = scalar_lea.vmem %s18, %s3161
      // Predicated region
      $region93: #{icm_loss_pallas.1} parent=91 // pred_check
        %p3163 = pneg %p440
      $region94: #{icm_loss_pallas.1} parent=91 // pred_check_branch
        %3165 = sbr.rel (%p3163) target = $region96
      $region95: #{icm_loss_pallas.1} parent=91 // pred_region
        _
      $region96: #{icm_loss_pallas.1} parent=91 // pred_fallthru
        _
    $region92: #{icm_loss_pallas.1} parent=5 // pred_fallthru
      _
    %p3166 = scmp.le.s32.totalorder 2, %s24
    // Predicated region
    $region97: #{icm_loss_pallas.1} parent=5 // pred_check
      %p3167 = pneg %p3166
    $region98: #{icm_loss_pallas.1} parent=5 // pred_check_branch
      %3169 = sbr.rel (%p3167) target = $region100
    $region99: #{icm_loss_pallas.1} parent=5 // pred_region
      %s3170 = ssub.s32 %s24, 2
      // Predicated region
      $region101: #{icm_loss_pallas.1} parent=99 // pred_check
        %p3171 = pneg %p446
      $region102: #{icm_loss_pallas.1} parent=99 // pred_check_branch
        %3173 = sbr.rel (%p3171) target = $region104
      $region103: #{icm_loss_pallas.1} parent=99 // pred_region
        %p3174 = scmp.lt.s32.totalorder %s30, 1
        %s3175 = scalar_select %p3174, %s30, 1
        %s3176 = smul.addr %s3175, 8
        %s3177 = scalar_lea.vmem %s18, %s3176
      $region104: #{icm_loss_pallas.1} parent=99 // pred_fallthru
        _
    $region100: #{icm_loss_pallas.1} parent=5 // pred_fallthru
      _
  $region6: #{icm_loss_pallas.1} parent=0 // loop_footer
    %s28 = sadd.s32 1, %s24
  $region7: #{icm_loss_pallas.1} parent=0 // loop_footer_branch
    %23 = sbr.rel target = $region3
  $region8: #{icm_loss_pallas.1} parent=0 // loop_exit
    _

</llo_original>
